<compile_context>
chip_gen: v7x
topology: tpu7x:2x2x1
jax: 0.10.0
libtpu: 0.0.40
codegen_flags: <defaults>
</compile_context>

<pallas_src>
import functools

import jax
import jax.numpy as jnp
from jax.experimental import pallas as pl
from jax.experimental.pallas import tpu as pltpu


_VMEM_LIMIT = 48 * 1024 * 1024  # <= 48 MiB: safe on v7x (64 MiB), a raise on v5e/v6e
_BN_EPS = 1e-5


def _round_up(x, m):
    return (x + m - 1) // m * m


# ---------------------------------------------------------------------------
# Pallas kernel: one (TM, K) x (K, TN) MXU matmul tile + bias (+ReLU)
# with optional fused per-channel BN partial statistics.
# ---------------------------------------------------------------------------
def _conv_mm_kernel(a_ref, w_ref, b_ref, o_ref, *rest,
                    apply_relu, with_stats, m_true, tile_m):
    # Single K step: full contraction in one jnp.dot, f32 accumulate on MXU.
    out = jnp.dot(a_ref[...], w_ref[...], preferred_element_type=jnp.float32)
    out = out + b_ref[...]
    if apply_relu:
        out = jnp.maximum(out, 0.0)
    o_ref[...] = out.astype(o_ref.dtype)

    if with_stats:
        stat_ref = rest[0]
        # program_id used ONLY at kernel top level (safe in interpret + Mosaic).
        row0 = pl.program_id(0) * tile_m
        rows = row0 + jax.lax.broadcasted_iota(jnp.int32, out.shape, 0)
        # Mask rows that are pure M padding (they hold ReLU(bias), not pixels).
        masked = jnp.where(rows < m_true, out, 0.0)       # f32, pre-bf16-cast
        s = jnp.sum(masked, axis=0, keepdims=True)
        ss = jnp.sum(masked * masked, axis=0, keepdims=True)
        # Only rows 0-1 of the (8, TN) stat block are meaningful / consumed.
        stat_ref[0:1, :] = s
        stat_ref[1:2, :] = ss


# ---------------------------------------------------------------------------
# Conv2d(3x3, pad=1) -> im2col + tiled Pallas MXU matmul (+ fused BN stats)
# ---------------------------------------------------------------------------
def conv2d_3x3_forward(x_nhwc, weight, bias, *, stride, apply_relu,
                       out_dtype, compute_stats, cout_pad=None):
    """weight: (Cout, Cin, 3, 3) PyTorch layout; bias: (Cout,).

    Returns (out2d_padded (M_pad, Cp), stats_or_None, (N, Ho, Wo, Cp, M)).
    Rows >= M of out2d_padded are padding (hold ReLU(bias)); never consume them.
    """
    N, H, W, Cin = x_nhwc.shape
    Cout = weight.shape[0]
    Cp = Cout if cout_pad is None else max(cout_pad, Cout)
    Ho = (H + 2 - 3) // stride + 1
    Wo = (W + 2 - 3) // stride + 1
    M = N * Ho * Wo
    K = 9 * Cin

    # im2col (XLA glue; rows = (n, ho, wo) positions, cols = (kh, kw, cin) taps)
    xp = jnp.pad(x_nhwc.astype(jnp.bfloat16), ((0, 0), (1, 1), (1, 1), (0, 0)))
    cols = []
    for kh in range(3):
        for kw in range(3):
            cols.append(
                xp[:,
                   kh:kh + stride * (Ho - 1) + 1:stride,
                   kw:kw + stride * (Wo - 1) + 1:stride,
                   :])
    a = jnp.concatenate(cols, axis=-1).reshape(M, K)

    # weight rows ordered (kh, kw, cin) to match the patch layout above
    wmat = jnp.transpose(weight, (2, 3, 1, 0)).reshape(K, Cout).astype(jnp.bfloat16)
    bvec = bias.astype(jnp.float32)
    if Cp != Cout:
        # zero weight columns / bias -> padded channels are exactly 0 after ReLU
        wmat = jnp.pad(wmat, ((0, 0), (0, Cp - Cout)))
        bvec = jnp.pad(bvec, ((0, Cp - Cout),))
    b2 = bvec.reshape(1, Cp)

    # --- tiling: single K step; lane-dense N when possible ------------------
    if M >= 2048:
        TM = 512
    elif M >= 256:
        TM = 256
    else:
        TM = _round_up(M, 8)
    M_pad = _round_up(M, TM)

    if Cp % 256 == 0:
        TN = 256
    elif Cp % 128 == 0:
        TN = 128
    else:
        TN = Cp                         # full Cout dim (e.g. conv1: 32)

    num_m = M_pad // TM
    num_n = Cp // TN

    if M_pad != M:
        a = jnp.pad(a, ((0, M_pad - M), (0, 0)))

    kern = functools.partial(_conv_mm_kernel, apply_relu=apply_relu,
                             with_stats=compute_stats, m_true=M, tile_m=TM)

    out_shapes = [jax.ShapeDtypeStruct((M_pad, Cp), out_dtype)]
    out_specs = [pl.BlockSpec((TM, TN), lambda i, j: (i, j))]
    if compute_stats:
        out_shapes.append(jax.ShapeDtypeStruct((num_m * 8, Cp), jnp.float32))
        out_specs.append(pl.BlockSpec((8, TN), lambda i, j: (i, j)))

    res = pl.pallas_call(
        kern,
        out_shape=tuple(out_shapes) if compute_stats else out_shapes[0],
        grid=(num_m, num_n),
        in_specs=[
            pl.BlockSpec((TM, K), lambda i, j: (i, 0)),
            pl.BlockSpec((K, TN), lambda i, j: (0, j)),
            pl.BlockSpec((1, TN), lambda i, j: (0, j)),
        ],
        out_specs=tuple(out_specs) if compute_stats else out_specs[0],
        compiler_params=pltpu.CompilerParams(
            dimension_semantics=("parallel", "parallel"),
            vmem_limit_bytes=_VMEM_LIMIT),
    )(a, wmat, b2)

    if compute_stats:
        out2d, stats = res
    else:
        out2d, stats = res, None
    return out2d, stats, (N, Ho, Wo, Cp, M)


def _bn_stats_from_partials(stats, m_true):
    """Reduce per-M-tile partials -> batch mean / biased variance per channel."""
    cp = stats.shape[-1]
    s = stats.reshape(-1, 8, cp)
    ch_sum = jnp.sum(s[:, 0, :], axis=0)
    ch_ssq = jnp.sum(s[:, 1, :], axis=0)
    mean = ch_sum / m_true
    var = jnp.maximum(ch_ssq / m_true - mean * mean, 0.0)  # biased, torch train mode
    return mean, var


# ---------------------------------------------------------------------------
# Parameter init (deterministic, synthetic)
# ---------------------------------------------------------------------------
def init_params(key, num_features=32):
    def conv_init(k, cout, cin):
        k1, k2 = jax.random.split(k)
        w = jax.random.normal(k1, (cout, cin, 3, 3), jnp.float32) / jnp.sqrt(9.0 * cin)
        b = 0.01 * jax.random.normal(k2, (cout,), jnp.float32)
        return w, b

    def bn_init(k, c):
        k1, k2 = jax.random.split(k)
        gamma = 1.0 + 0.1 * jax.random.normal(k1, (c,), jnp.float32)
        beta = 0.1 * jax.random.normal(k2, (c,), jnp.float32)
        return gamma, beta

    nf = num_features
    keys = jax.random.split(key, 8)
    return {
        "conv1": conv_init(keys[0], nf, 6),
        "conv2": conv_init(keys[1], nf * 2, nf),
        "bn2": bn_init(keys[2], nf * 2),
        "conv3": conv_init(keys[3], nf * 4, nf * 2),
        "bn3": bn_init(keys[4], nf * 4),
        "conv4": conv_init(keys[5], nf * 8, nf * 4),
        "bn4": bn_init(keys[6], nf * 8),
        "convv": conv_init(keys[7], 1, nf * 8),
    }


# ---------------------------------------------------------------------------
# Forward pass (== FUnIEDiscriminator.forward, BN in training mode)
# ---------------------------------------------------------------------------
def funie_discriminator(params, x1_nchw, x2_nchw):
    x = jnp.concatenate([x1_nchw, x2_nchw], axis=1)            # (N, 6, H, W)
    x = jnp.transpose(x, (0, 2, 3, 1)).astype(jnp.bfloat16)    # NHWC, bf16

    # block1: conv s2 + ReLU (no BN).  Natural Cout=32 (not padded -> masked
    # stores but 1x writeback bytes; padding to 128 is a measured follow-up).
    w, b = params["conv1"]
    y2d, _, (N, Ho, Wo, Cp, M) = conv2d_3x3_forward(
        x, w, b, stride=2, apply_relu=True,
        out_dtype=jnp.bfloat16, compute_stats=False)
    x = y2d[:M].reshape(N, Ho, Wo, Cp)

    # blocks 2-4: conv s2 + ReLU + BatchNorm (training-mode batch stats).
    # conv2 output channels padded 64->128 for lane-dense stores; pad channels
    # are exactly zero and are sliced off before the next layer.
    for i, cpad in ((2, 128), (3, None), (4, None)):
        w, b = params[f"conv{i}"]
        gamma, beta = params[f"bn{i}"]
        cout = w.shape[0]
        y2d, stats, (N, Ho, Wo, Cp, M) = conv2d_3x3_forward(
            x, w, b, stride=2, apply_relu=True,
            out_dtype=jnp.bfloat16, compute_stats=True, cout_pad=cpad)
        mean, var = _bn_stats_from_partials(stats, M)
        mean, var = mean[:cout], var[:cout]
        # BN affine applied in plain jnp BEFORE the next layer's zero padding;
        # XLA fuses it into the next im2col's pad/slice/concat producer.
        scale = gamma * jax.lax.rsqrt(var + _BN_EPS)
        shift = beta - mean * scale
        y = y2d[:M, :cout].reshape(N, Ho, Wo, cout).astype(jnp.float32)
        x = (y * scale + shift).astype(jnp.bfloat16)

    # validity head: conv s1, 1 output channel padded to 128 for lane-dense
    # stores; column 0 is the real output (== valid.squeeze(1)).
    w, b = params["convv"]                                     # (1, 256, 3, 3), (1,)
    y2d, _, (N, Ho, Wo, _, M) = conv2d_3x3_forward(
        x, w, b, stride=1, apply_relu=False,
        out_dtype=jnp.float32, compute_stats=False, cout_pad=128)
    valid = y2d[:M, 0].reshape(N, Ho, Wo)
    return valid


if __name__ == "__main__":
    key = jax.random.PRNGKey(0)
    kp, k1, k2 = jax.random.split(key, 3)

    params = init_params(kp, num_features=32)
    x1 = jax.random.normal(k1, (2, 3, 16, 16), jnp.float32)    # NCHW, like PyTorch
    x2 = jax.random.normal(k2, (2, 3, 16, 16), jnp.float32)

    fwd = jax.jit(funie_discriminator)
    out = jax.block_until_ready(fwd(params, x1, x2))
    assert out.shape == (2, 1, 1), out.shape                   # 16 -> 8 -> 4 -> 2 -> 1
    assert bool(jnp.all(jnp.isfinite(out)))
    print("KERNEL_OK")
</pallas_src>

<mosaic_0001>
module attributes {stable_mosaic.version = 11 : i64} {
  func.func @_conv_mm_kernel(%arg0: i32, %arg1: i32, %arg2: memref<128x54xbf16, #tpu.memory_space<vmem>>, %arg3: memref<54x32xbf16, #tpu.memory_space<vmem>>, %arg4: memref<1x32xf32, #tpu.memory_space<vmem>>, %arg5: memref<128x32xbf16, #tpu.memory_space<vmem>>) attributes {dimension_semantics = [#tpu.dimension_semantics<parallel>, #tpu.dimension_semantics<parallel>], iteration_bounds = array<i64: 1, 1>, scalar_prefetch = 0 : i64, scratch_operands = 0 : i64, tpu.core_type = #tpu.core_type<tc>, window_params = [{transform_indices = @transform_0, window_bounds = array<i64: 128, 54>}, {transform_indices = @transform_1, window_bounds = array<i64: 54, 32>}, {transform_indices = @transform_2, window_bounds = array<i64: 1, 32>}, {transform_indices = @transform_3, window_bounds = array<i64: 128, 32>}]} {
    %c0 = arith.constant 0 : index
    %c0_0 = arith.constant 0 : index
    %0 = vector.load %arg2[%c0, %c0_0] : memref<128x54xbf16, #tpu.memory_space<vmem>>, vector<128x54xbf16>
    %c0_1 = arith.constant 0 : index
    %c0_2 = arith.constant 0 : index
    %1 = vector.load %arg3[%c0_1, %c0_2] : memref<54x32xbf16, #tpu.memory_space<vmem>>, vector<54x32xbf16>
    %cst = arith.constant dense<0.000000e+00> : vector<128x32xf32>
    %2 = tpu.matmul %0, %1, %cst {dimension_numbers = #tpu.dot_dimension_numbers<[1], [0], [0], [1], [0, 0, 1, 1], [], []>} : vector<128x54xbf16>, vector<54x32xbf16>, vector<128x32xf32> -> vector<128x32xf32>
    %c0_3 = arith.constant 0 : index
    %c0_4 = arith.constant 0 : index
    %3 = vector.load %arg4[%c0_3, %c0_4] : memref<1x32xf32, #tpu.memory_space<vmem>>, vector<1x32xf32>
    %4 = vector.broadcast %3 : vector<1x32xf32> to vector<128x32xf32>
    %5 = arith.addf %2, %4 : vector<128x32xf32>
    %cst_5 = arith.constant 0.000000e+00 : f32
    %6 = vector.broadcast %cst_5 : f32 to vector<128x32xf32>
    %7 = arith.maximumf %5, %6 : vector<128x32xf32>
    %8 = arith.truncf %7 : vector<128x32xf32> to vector<128x32xbf16>
    %c0_6 = arith.constant 0 : index
    %c0_7 = arith.constant 0 : index
    %9 = vector.load %arg5[%c0_6, %c0_7] : memref<128x32xbf16, #tpu.memory_space<vmem>>, vector<128x32xbf16>
    tpu.vector_store %arg5[%c0_6, %c0_7], %8 {strides = array<i32>} : memref<128x32xbf16, #tpu.memory_space<vmem>>, vector<128x32xbf16>,
    return
  }
  func.func @transform_0(%arg0: i32, %arg1: i32) -> (i32, i32) {
    %c0_i32 = arith.constant 0 : i32
    %c0_i32_0 = arith.constant 0 : i32
    return %arg0, %c0_i32 : i32, i32
  }
  func.func @transform_1(%arg0: i32, %arg1: i32) -> (i32, i32) {
    %c0_i32 = arith.constant 0 : i32
    %c0_i32_0 = arith.constant 0 : i32
    return %c0_i32, %arg1 : i32, i32
  }
  func.func @transform_2(%arg0: i32, %arg1: i32) -> (i32, i32) {
    %c0_i32 = arith.constant 0 : i32
    %c0_i32_0 = arith.constant 0 : i32
    return %c0_i32, %arg1 : i32, i32
  }
  func.func @transform_3(%arg0: i32, %arg1: i32) -> (i32, i32) {
    %c0_i32 = arith.constant 0 : i32
    return %arg0, %arg1 : i32, i32
  }
}

module attributes {stable_mosaic.version = 11 : i64} {
  func.func @_conv_mm_kernel(%arg0: i32, %arg1: i32, %arg2: memref<32x288xbf16, #tpu.memory_space<vmem>>, %arg3: memref<288x128xbf16, #tpu.memory_space<vmem>>, %arg4: memref<1x128xf32, #tpu.memory_space<vmem>>, %arg5: memref<32x128xbf16, #tpu.memory_space<vmem>>, %arg6: memref<8x128xf32, #tpu.memory_space<vmem>>) attributes {dimension_semantics = [#tpu.dimension_semantics<parallel>, #tpu.dimension_semantics<parallel>], iteration_bounds = array<i64: 1, 1>, scalar_prefetch = 0 : i64, scratch_operands = 0 : i64, tpu.core_type = #tpu.core_type<tc>, window_params = [{transform_indices = @transform_0, window_bounds = array<i64: 32, 288>}, {transform_indices = @transform_1, window_bounds = array<i64: 288, 128>}, {transform_indices = @transform_2, window_bounds = array<i64: 1, 128>}, {transform_indices = @transform_3, window_bounds = array<i64: 32, 128>}, {transform_indices = @transform_4, window_bounds = array<i64: 8, 128>}]} {
    %c0 = arith.constant 0 : index
    %c0_0 = arith.constant 0 : index
    %0 = vector.load %arg2[%c0, %c0_0] : memref<32x288xbf16, #tpu.memory_space<vmem>>, vector<32x288xbf16>
    %c0_1 = arith.constant 0 : index
    %c0_2 = arith.constant 0 : index
    %1 = vector.load %arg3[%c0_1, %c0_2] : memref<288x128xbf16, #tpu.memory_space<vmem>>, vector<288x128xbf16>
    %cst = arith.constant dense<0.000000e+00> : vector<32x128xf32>
    %2 = tpu.matmul %0, %1, %cst {dimension_numbers = #tpu.dot_dimension_numbers<[1], [0], [0], [1], [0, 0, 1, 1], [], []>} : vector<32x288xbf16>, vector<288x128xbf16>, vector<32x128xf32> -> vector<32x128xf32>
    %c0_3 = arith.constant 0 : index
    %c0_4 = arith.constant 0 : index
    %3 = vector.load %arg4[%c0_3, %c0_4] : memref<1x128xf32, #tpu.memory_space<vmem>>, vector<1x128xf32>
    %4 = vector.broadcast %3 : vector<1x128xf32> to vector<32x128xf32>
    %5 = arith.addf %2, %4 : vector<32x128xf32>
    %cst_5 = arith.constant 0.000000e+00 : f32
    %6 = vector.broadcast %cst_5 : f32 to vector<32x128xf32>
    %7 = arith.maximumf %5, %6 : vector<32x128xf32>
    %8 = arith.truncf %7 : vector<32x128xf32> to vector<32x128xbf16>
    %c0_6 = arith.constant 0 : index
    %c0_7 = arith.constant 0 : index
    %9 = vector.load %arg5[%c0_6, %c0_7] : memref<32x128xbf16, #tpu.memory_space<vmem>>, vector<32x128xbf16>
    tpu.vector_store %arg5[%c0_6, %c0_7], %8 {strides = array<i32>} : memref<32x128xbf16, #tpu.memory_space<vmem>>, vector<32x128xbf16>,
    %c32_i32 = arith.constant 32 : i32
    %10 = arith.muli %arg0, %c32_i32 : i32
    %11 = tpu.iota {dimensions = array<i32: 0>} : vector<32x128xi32>
    %12 = vector.broadcast %10 : i32 to vector<32x128xi32>
    %13 = arith.addi %12, %11 : vector<32x128xi32>
    %c32_i32_8 = arith.constant 32 : i32
    %14 = vector.broadcast %c32_i32_8 : i32 to vector<32x128xi32>
    %15 = arith.cmpi slt, %13, %14 : vector<32x128xi32>
    %cst_9 = arith.constant 0.000000e+00 : f32
    %16 = vector.broadcast %cst_9 : f32 to vector<32x128xf32>
    %17 = arith.select %15, %7, %16 : vector<32x128xi1>, vector<32x128xf32>
    %cst_10 = arith.constant dense<0.000000e+00> : vector<128xf32>
    %18 = vector.multi_reduction <add>, %17, %cst_10 [0] : vector<32x128xf32> to vector<128xf32>
    %19 = vector.shape_cast %18 : vector<128xf32> to vector<1x128xf32>
    %20 = arith.mulf %17, %17 : vector<32x128xf32>
    %cst_11 = arith.constant dense<0.000000e+00> : vector<128xf32>
    %21 = vector.multi_reduction <add>, %20, %cst_11 [0] : vector<32x128xf32> to vector<128xf32>
    %22 = vector.shape_cast %21 : vector<128xf32> to vector<1x128xf32>
    %c0_12 = arith.constant 0 : index
    %c0_13 = arith.constant 0 : index
    %23 = vector.load %arg6[%c0_12, %c0_13] : memref<8x128xf32, #tpu.memory_space<vmem>>, vector<1x128xf32>
    tpu.vector_store %arg6[%c0_12, %c0_13], %19 {strides = array<i32>} : memref<8x128xf32, #tpu.memory_space<vmem>>, vector<1x128xf32>,
    %c1 = arith.constant 1 : index
    %c0_14 = arith.constant 0 : index
    %24 = vector.load %arg6[%c1, %c0_14] : memref<8x128xf32, #tpu.memory_space<vmem>>, vector<1x128xf32>
    tpu.vector_store %arg6[%c1, %c0_14], %22 {strides = array<i32>} : memref<8x128xf32, #tpu.memory_space<vmem>>, vector<1x128xf32>,
    return
  }
  func.func @transform_0(%arg0: i32, %arg1: i32) -> (i32, i32) {
    %c0_i32 = arith.constant 0 : i32
    %c0_i32_0 = arith.constant 0 : i32
    return %arg0, %c0_i32 : i32, i32
  }
  func.func @transform_1(%arg0: i32, %arg1: i32) -> (i32, i32) {
    %c0_i32 = arith.constant 0 : i32
    %c0_i32_0 = arith.constant 0 : i32
    return %c0_i32, %arg1 : i32, i32
  }
  func.func @transform_2(%arg0: i32, %arg1: i32) -> (i32, i32) {
    %c0_i32 = arith.constant 0 : i32
    %c0_i32_0 = arith.constant 0 : i32
    return %c0_i32, %arg1 : i32, i32
  }
  func.func @transform_3(%arg0: i32, %arg1: i32) -> (i32, i32) {
    %c0_i32 = arith.constant 0 : i32
    return %arg0, %arg1 : i32, i32
  }
  func.func @transform_4(%arg0: i32, %arg1: i32) -> (i32, i32) {
    %c0_i32 = arith.constant 0 : i32
    return %arg0, %arg1 : i32, i32
  }
}

module attributes {stable_mosaic.version = 11 : i64} {
  func.func @_conv_mm_kernel(%arg0: i32, %arg1: i32, %arg2: memref<8x576xbf16, #tpu.memory_space<vmem>>, %arg3: memref<576x128xbf16, #tpu.memory_space<vmem>>, %arg4: memref<1x128xf32, #tpu.memory_space<vmem>>, %arg5: memref<8x128xbf16, #tpu.memory_space<vmem>>, %arg6: memref<8x128xf32, #tpu.memory_space<vmem>>) attributes {dimension_semantics = [#tpu.dimension_semantics<parallel>, #tpu.dimension_semantics<parallel>], iteration_bounds = array<i64: 1, 1>, scalar_prefetch = 0 : i64, scratch_operands = 0 : i64, tpu.core_type = #tpu.core_type<tc>, window_params = [{transform_indices = @transform_0, window_bounds = array<i64: 8, 576>}, {transform_indices = @transform_1, window_bounds = array<i64: 576, 128>}, {transform_indices = @transform_2, window_bounds = array<i64: 1, 128>}, {transform_indices = @transform_3, window_bounds = array<i64: 8, 128>}, {transform_indices = @transform_4, window_bounds = array<i64: 8, 128>}]} {
    %c0 = arith.constant 0 : index
    %c0_0 = arith.constant 0 : index
    %0 = vector.load %arg2[%c0, %c0_0] : memref<8x576xbf16, #tpu.memory_space<vmem>>, vector<8x576xbf16>
    %c0_1 = arith.constant 0 : index
    %c0_2 = arith.constant 0 : index
    %1 = vector.load %arg3[%c0_1, %c0_2] : memref<576x128xbf16, #tpu.memory_space<vmem>>, vector<576x128xbf16>
    %cst = arith.constant dense<0.000000e+00> : vector<8x128xf32>
    %2 = tpu.matmul %0, %1, %cst {dimension_numbers = #tpu.dot_dimension_numbers<[1], [0], [0], [1], [0, 0, 1, 1], [], []>} : vector<8x576xbf16>, vector<576x128xbf16>, vector<8x128xf32> -> vector<8x128xf32>
    %c0_3 = arith.constant 0 : index
    %c0_4 = arith.constant 0 : index
    %3 = vector.load %arg4[%c0_3, %c0_4] : memref<1x128xf32, #tpu.memory_space<vmem>>, vector<1x128xf32>
    %4 = vector.broadcast %3 : vector<1x128xf32> to vector<8x128xf32>
    %5 = arith.addf %2, %4 : vector<8x128xf32>
    %cst_5 = arith.constant 0.000000e+00 : f32
    %6 = vector.broadcast %cst_5 : f32 to vector<8x128xf32>
    %7 = arith.maximumf %5, %6 : vector<8x128xf32>
    %8 = arith.truncf %7 : vector<8x128xf32> to vector<8x128xbf16>
    %c0_6 = arith.constant 0 : index
    %c0_7 = arith.constant 0 : index
    %9 = vector.load %arg5[%c0_6, %c0_7] : memref<8x128xbf16, #tpu.memory_space<vmem>>, vector<8x128xbf16>
    tpu.vector_store %arg5[%c0_6, %c0_7], %8 {strides = array<i32>} : memref<8x128xbf16, #tpu.memory_space<vmem>>, vector<8x128xbf16>,
    %c8_i32 = arith.constant 8 : i32
    %10 = arith.muli %arg0, %c8_i32 : i32
    %11 = tpu.iota {dimensions = array<i32: 0>} : vector<8x128xi32>
    %12 = vector.broadcast %10 : i32 to vector<8x128xi32>
    %13 = arith.addi %12, %11 : vector<8x128xi32>
    %c8_i32_8 = arith.constant 8 : i32
    %14 = vector.broadcast %c8_i32_8 : i32 to vector<8x128xi32>
    %15 = arith.cmpi slt, %13, %14 : vector<8x128xi32>
    %cst_9 = arith.constant 0.000000e+00 : f32
    %16 = vector.broadcast %cst_9 : f32 to vector<8x128xf32>
    %17 = arith.select %15, %7, %16 : vector<8x128xi1>, vector<8x128xf32>
    %cst_10 = arith.constant dense<0.000000e+00> : vector<128xf32>
    %18 = vector.multi_reduction <add>, %17, %cst_10 [0] : vector<8x128xf32> to vector<128xf32>
    %19 = vector.shape_cast %18 : vector<128xf32> to vector<1x128xf32>
    %20 = arith.mulf %17, %17 : vector<8x128xf32>
    %cst_11 = arith.constant dense<0.000000e+00> : vector<128xf32>
    %21 = vector.multi_reduction <add>, %20, %cst_11 [0] : vector<8x128xf32> to vector<128xf32>
    %22 = vector.shape_cast %21 : vector<128xf32> to vector<1x128xf32>
    %c0_12 = arith.constant 0 : index
    %c0_13 = arith.constant 0 : index
    %23 = vector.load %arg6[%c0_12, %c0_13] : memref<8x128xf32, #tpu.memory_space<vmem>>, vector<1x128xf32>
    tpu.vector_store %arg6[%c0_12, %c0_13], %19 {strides = array<i32>} : memref<8x128xf32, #tpu.memory_space<vmem>>, vector<1x128xf32>,
    %c1 = arith.constant 1 : index
    %c0_14 = arith.constant 0 : index
    %24 = vector.load %arg6[%c1, %c0_14] : memref<8x128xf32, #tpu.memory_space<vmem>>, vector<1x128xf32>
    tpu.vector_store %arg6[%c1, %c0_14], %22 {strides = array<i32>} : memref<8x128xf32, #tpu.memory_space<vmem>>, vector<1x128xf32>,
    return
  }
  func.func @transform_0(%arg0: i32, %arg1: i32) -> (i32, i32) {
    %c0_i32 = arith.constant 0 : i32
    %c0_i32_0 = arith.constant 0 : i32
    return %arg0, %c0_i32 : i32, i32
  }
  func.func @transform_1(%arg0: i32, %arg1: i32) -> (i32, i32) {
    %c0_i32 = arith.constant 0 : i32
    %c0_i32_0 = arith.constant 0 : i32
    return %c0_i32, %arg1 : i32, i32
  }
  func.func @transform_2(%arg0: i32, %arg1: i32) -> (i32, i32) {
    %c0_i32 = arith.constant 0 : i32
    %c0_i32_0 = arith.constant 0 : i32
    return %c0_i32, %arg1 : i32, i32
  }
  func.func @transform_3(%arg0: i32, %arg1: i32) -> (i32, i32) {
    %c0_i32 = arith.constant 0 : i32
    return %arg0, %arg1 : i32, i32
  }
  func.func @transform_4(%arg0: i32, %arg1: i32) -> (i32, i32) {
    %c0_i32 = arith.constant 0 : i32
    return %arg0, %arg1 : i32, i32
  }
}

module attributes {stable_mosaic.version = 11 : i64} {
  func.func @_conv_mm_kernel(%arg0: i32, %arg1: i32, %arg2: memref<8x1152xbf16, #tpu.memory_space<vmem>>, %arg3: memref<1152x256xbf16, #tpu.memory_space<vmem>>, %arg4: memref<1x256xf32, #tpu.memory_space<vmem>>, %arg5: memref<8x256xbf16, #tpu.memory_space<vmem>>, %arg6: memref<8x256xf32, #tpu.memory_space<vmem>>) attributes {dimension_semantics = [#tpu.dimension_semantics<parallel>, #tpu.dimension_semantics<parallel>], iteration_bounds = array<i64: 1, 1>, scalar_prefetch = 0 : i64, scratch_operands = 0 : i64, tpu.core_type = #tpu.core_type<tc>, window_params = [{transform_indices = @transform_0, window_bounds = array<i64: 8, 1152>}, {transform_indices = @transform_1, window_bounds = array<i64: 1152, 256>}, {transform_indices = @transform_2, window_bounds = array<i64: 1, 256>}, {transform_indices = @transform_3, window_bounds = array<i64: 8, 256>}, {transform_indices = @transform_4, window_bounds = array<i64: 8, 256>}]} {
    %c0 = arith.constant 0 : index
    %c0_0 = arith.constant 0 : index
    %0 = vector.load %arg2[%c0, %c0_0] : memref<8x1152xbf16, #tpu.memory_space<vmem>>, vector<8x1152xbf16>
    %c0_1 = arith.constant 0 : index
    %c0_2 = arith.constant 0 : index
    %1 = vector.load %arg3[%c0_1, %c0_2] : memref<1152x256xbf16, #tpu.memory_space<vmem>>, vector<1152x256xbf16>
    %cst = arith.constant dense<0.000000e+00> : vector<8x256xf32>
    %2 = tpu.matmul %0, %1, %cst {dimension_numbers = #tpu.dot_dimension_numbers<[1], [0], [0], [1], [0, 0, 1, 1], [], []>} : vector<8x1152xbf16>, vector<1152x256xbf16>, vector<8x256xf32> -> vector<8x256xf32>
    %c0_3 = arith.constant 0 : index
    %c0_4 = arith.constant 0 : index
    %3 = vector.load %arg4[%c0_3, %c0_4] : memref<1x256xf32, #tpu.memory_space<vmem>>, vector<1x256xf32>
    %4 = vector.broadcast %3 : vector<1x256xf32> to vector<8x256xf32>
    %5 = arith.addf %2, %4 : vector<8x256xf32>
    %cst_5 = arith.constant 0.000000e+00 : f32
    %6 = vector.broadcast %cst_5 : f32 to vector<8x256xf32>
    %7 = arith.maximumf %5, %6 : vector<8x256xf32>
    %8 = arith.truncf %7 : vector<8x256xf32> to vector<8x256xbf16>
    %c0_6 = arith.constant 0 : index
    %c0_7 = arith.constant 0 : index
    %9 = vector.load %arg5[%c0_6, %c0_7] : memref<8x256xbf16, #tpu.memory_space<vmem>>, vector<8x256xbf16>
    tpu.vector_store %arg5[%c0_6, %c0_7], %8 {strides = array<i32>} : memref<8x256xbf16, #tpu.memory_space<vmem>>, vector<8x256xbf16>,
    %c8_i32 = arith.constant 8 : i32
    %10 = arith.muli %arg0, %c8_i32 : i32
    %11 = tpu.iota {dimensions = array<i32: 0>} : vector<8x256xi32>
    %12 = vector.broadcast %10 : i32 to vector<8x256xi32>
    %13 = arith.addi %12, %11 : vector<8x256xi32>
    %c2_i32 = arith.constant 2 : i32
    %14 = vector.broadcast %c2_i32 : i32 to vector<8x256xi32>
    %15 = arith.cmpi slt, %13, %14 : vector<8x256xi32>
    %cst_8 = arith.constant 0.000000e+00 : f32
    %16 = vector.broadcast %cst_8 : f32 to vector<8x256xf32>
    %17 = arith.select %15, %7, %16 : vector<8x256xi1>, vector<8x256xf32>
    %cst_9 = arith.constant dense<0.000000e+00> : vector<256xf32>
    %18 = vector.multi_reduction <add>, %17, %cst_9 [0] : vector<8x256xf32> to vector<256xf32>
    %19 = vector.shape_cast %18 : vector<256xf32> to vector<1x256xf32>
    %20 = arith.mulf %17, %17 : vector<8x256xf32>
    %cst_10 = arith.constant dense<0.000000e+00> : vector<256xf32>
    %21 = vector.multi_reduction <add>, %20, %cst_10 [0] : vector<8x256xf32> to vector<256xf32>
    %22 = vector.shape_cast %21 : vector<256xf32> to vector<1x256xf32>
    %c0_11 = arith.constant 0 : index
    %c0_12 = arith.constant 0 : index
    %23 = vector.load %arg6[%c0_11, %c0_12] : memref<8x256xf32, #tpu.memory_space<vmem>>, vector<1x256xf32>
    tpu.vector_store %arg6[%c0_11, %c0_12], %19 {strides = array<i32>} : memref<8x256xf32, #tpu.memory_space<vmem>>, vector<1x256xf32>,
    %c1 = arith.constant 1 : index
    %c0_13 = arith.constant 0 : index
    %24 = vector.load %arg6[%c1, %c0_13] : memref<8x256xf32, #tpu.memory_space<vmem>>, vector<1x256xf32>
    tpu.vector_store %arg6[%c1, %c0_13], %22 {strides = array<i32>} : memref<8x256xf32, #tpu.memory_space<vmem>>, vector<1x256xf32>,
    return
  }
  func.func @transform_0(%arg0: i32, %arg1: i32) -> (i32, i32) {
    %c0_i32 = arith.constant 0 : i32
    %c0_i32_0 = arith.constant 0 : i32
    return %arg0, %c0_i32 : i32, i32
  }
  func.func @transform_1(%arg0: i32, %arg1: i32) -> (i32, i32) {
    %c0_i32 = arith.constant 0 : i32
    %c0_i32_0 = arith.constant 0 : i32
    return %c0_i32, %arg1 : i32, i32
  }
  func.func @transform_2(%arg0: i32, %arg1: i32) -> (i32, i32) {
    %c0_i32 = arith.constant 0 : i32
    %c0_i32_0 = arith.constant 0 : i32
    return %c0_i32, %arg1 : i32, i32
  }
  func.func @transform_3(%arg0: i32, %arg1: i32) -> (i32, i32) {
    %c0_i32 = arith.constant 0 : i32
    return %arg0, %arg1 : i32, i32
  }
  func.func @transform_4(%arg0: i32, %arg1: i32) -> (i32, i32) {
    %c0_i32 = arith.constant 0 : i32
    return %arg0, %arg1 : i32, i32
  }
}

module attributes {stable_mosaic.version = 11 : i64} {
  func.func @_conv_mm_kernel(%arg0: i32, %arg1: i32, %arg2: memref<8x2304xbf16, #tpu.memory_space<vmem>>, %arg3: memref<2304x128xbf16, #tpu.memory_space<vmem>>, %arg4: memref<1x128xf32, #tpu.memory_space<vmem>>, %arg5: memref<8x128xf32, #tpu.memory_space<vmem>>) attributes {dimension_semantics = [#tpu.dimension_semantics<parallel>, #tpu.dimension_semantics<parallel>], iteration_bounds = array<i64: 1, 1>, scalar_prefetch = 0 : i64, scratch_operands = 0 : i64, tpu.core_type = #tpu.core_type<tc>, window_params = [{transform_indices = @transform_0, window_bounds = array<i64: 8, 2304>}, {transform_indices = @transform_1, window_bounds = array<i64: 2304, 128>}, {transform_indices = @transform_2, window_bounds = array<i64: 1, 128>}, {transform_indices = @transform_3, window_bounds = array<i64: 8, 128>}]} {
    %c0 = arith.constant 0 : index
    %c0_0 = arith.constant 0 : index
    %0 = vector.load %arg2[%c0, %c0_0] : memref<8x2304xbf16, #tpu.memory_space<vmem>>, vector<8x2304xbf16>
    %c0_1 = arith.constant 0 : index
    %c0_2 = arith.constant 0 : index
    %1 = vector.load %arg3[%c0_1, %c0_2] : memref<2304x128xbf16, #tpu.memory_space<vmem>>, vector<2304x128xbf16>
    %cst = arith.constant dense<0.000000e+00> : vector<8x128xf32>
    %2 = tpu.matmul %0, %1, %cst {dimension_numbers = #tpu.dot_dimension_numbers<[1], [0], [0], [1], [0, 0, 1, 1], [], []>} : vector<8x2304xbf16>, vector<2304x128xbf16>, vector<8x128xf32> -> vector<8x128xf32>
    %c0_3 = arith.constant 0 : index
    %c0_4 = arith.constant 0 : index
    %3 = vector.load %arg4[%c0_3, %c0_4] : memref<1x128xf32, #tpu.memory_space<vmem>>, vector<1x128xf32>
    %4 = vector.broadcast %3 : vector<1x128xf32> to vector<8x128xf32>
    %5 = arith.addf %2, %4 : vector<8x128xf32>
    %c0_5 = arith.constant 0 : index
    %c0_6 = arith.constant 0 : index
    %6 = vector.load %arg5[%c0_5, %c0_6] : memref<8x128xf32, #tpu.memory_space<vmem>>, vector<8x128xf32>
    tpu.vector_store %arg5[%c0_5, %c0_6], %5 {strides = array<i32>} : memref<8x128xf32, #tpu.memory_space<vmem>>, vector<8x128xf32>,
    return
  }
  func.func @transform_0(%arg0: i32, %arg1: i32) -> (i32, i32) {
    %c0_i32 = arith.constant 0 : i32
    %c0_i32_0 = arith.constant 0 : i32
    return %arg0, %c0_i32 : i32, i32
  }
  func.func @transform_1(%arg0: i32, %arg1: i32) -> (i32, i32) {
    %c0_i32 = arith.constant 0 : i32
    %c0_i32_0 = arith.constant 0 : i32
    return %c0_i32, %arg1 : i32, i32
  }
  func.func @transform_2(%arg0: i32, %arg1: i32) -> (i32, i32) {
    %c0_i32 = arith.constant 0 : i32
    %c0_i32_0 = arith.constant 0 : i32
    return %c0_i32, %arg1 : i32, i32
  }
  func.func @transform_3(%arg0: i32, %arg1: i32) -> (i32, i32) {
    %c0_i32 = arith.constant 0 : i32
    return %arg0, %arg1 : i32, i32
  }
}

</mosaic_0001>

<llo_original>
// kernel: funie_discriminator.5
$region0: #{funie_discriminator.5}
  #allocation0 [shape = 'u32[]', space=smem, size = 0x4, offset = 0x4, fixed_abs, tag = 'smem constant byte address 0x4 - core index']
  #allocation1 [shape = 'u32[144,128]{1,0:T(1,128)}', space=vmem, size = 0x12000, scoped, tag = 'internal scratch']
  %s0 = inlined_call_operand.vmem [shape: bf16[128,54], index: 0, kind: input, shape index: {}]
  %s1 = inlined_call_operand.vmem [shape: bf16[54,32], index: 1, kind: input, shape index: {}]
  %s2 = inlined_call_operand.vmem [shape: f32[1,32], index: 2, kind: input, shape index: {}]
  %s3 = inlined_call_operand.vmem [shape: bf16[128,32], index: 3, kind: output, shape index: {}]
  %s4 = sld [smem:[#allocation0]]
  $region22: #{funie_discriminator.5} parent=0
    _
  %s6 = ssub.s32 1, %s4
  %s7 = scalar_select 0, %s6, %s4
  // Predicated region
  $region2: #{funie_discriminator.5} parent=0 // pred_check
    _
  $region3: #{funie_discriminator.5} parent=0 // pred_check_branch
    %9 = sbr.rel (0) target = $region5
  $region4: #{funie_discriminator.5} parent=0 // pred_region
    _
  $region5: #{funie_discriminator.5} parent=0 // pred_fallthru
    _
  // Predicated region
  $region6: #{funie_discriminator.5} parent=0 // pred_check
    _
  $region7: #{funie_discriminator.5} parent=0 // pred_check_branch
    %11 = sbr.rel (0) target = $region9
  $region8: #{funie_discriminator.5} parent=0 // pred_region
    _
  $region9: #{funie_discriminator.5} parent=0 // pred_fallthru
    _
  // Predicated region
  $region10: #{funie_discriminator.5} parent=0 // pred_check
    _
  $region11: #{funie_discriminator.5} parent=0 // pred_check_branch
    %13 = sbr.rel (0) target = $region13
  $region12: #{funie_discriminator.5} parent=0 // pred_region
    _
  $region13: #{funie_discriminator.5} parent=0 // pred_fallthru
    _
  %v15 = vld [vmem:[%s0] sm:$0xf]
  %v16 = vld [vmem:[%s0 + $0x4] sm:$0xf]
  %v17 = vld [vmem:[%s0 + $0x8] sm:$0xf]
  %v18 = vld [vmem:[%s0 + $0xc] sm:$0xf]
  %v19 = vld [vmem:[%s0 + $0x10] sm:$0xf]
  %v20 = vld [vmem:[%s0 + $0x14] sm:$0xf]
  %v21 = vld [vmem:[%s0 + $0x18] sm:$0xf]
  %v22 = vld [vmem:[%s0 + $0x1c] sm:$0xf]
  %v23 = vld [vmem:[%s0 + $0x20] sm:$0xf]
  %v24 = vld [vmem:[%s0 + $0x24] sm:$0xf]
  %v25 = vld [vmem:[%s0 + $0x28] sm:$0xf]
  %v26 = vld [vmem:[%s0 + $0x2c] sm:$0xf]
  %v27 = vld [vmem:[%s0 + $0x30] sm:$0xf]
  %v28 = vld [vmem:[%s0 + $0x34] sm:$0xf]
  %v29 = vld [vmem:[%s0 + $0x38] sm:$0xf]
  %v30 = vld [vmem:[%s0 + $0x3c] sm:$0xf]
  %v31 = vld [vmem:[%s1] sm:$0xf]
  %v32 = vld [vmem:[%s1 + $0x4] sm:$0xf]
  %v33 = vld [vmem:[%s1 + $0x8] sm:$0xf]
  %v34 = vld [vmem:[%s1 + $0xc] sm:$0xf]
  %v35 = vld [vmem:[%s1 + $0x10] sm:$0xf]
  %v36 = vld [vmem:[%s1 + $0x14] sm:$0xf]
  %v37 = vld [vmem:[%s1 + $0x18] sm:$0x7]
  %v38 = vld [vmem:[%s2] sm:$0x1]
  %v40 = vlaneseq
  %v41 = vshrl.u32 %v40, 7
  %v42 = vsub.s32 0, %v41
  %v43 = vrot.slane %v38, %v42
  %v61 = vunpack.c.l.b16 %v15
  %v62 = vunpack.c.l.b16 %v16
  %v63 = vunpack.c.l.b16 %v17
  %v64 = vunpack.c.l.b16 %v18
  %v65 = vunpack.c.l.b16 %v19
  %v66 = vunpack.c.l.b16 %v20
  %v67 = vunpack.c.l.b16 %v21
  %v68 = vunpack.c.l.b16 %v22
  %v69 = vunpack.c.l.b16 %v23
  %v70 = vunpack.c.l.b16 %v24
  %v71 = vunpack.c.l.b16 %v25
  %v72 = vunpack.c.l.b16 %v26
  %v73 = vunpack.c.l.b16 %v27
  %v74 = vunpack.c.l.b16 %v28
  %v75 = vunpack.c.l.b16 %v29
  %v76 = vunpack.c.l.b16 %v30
  %v77 = vpack.c.b16 %v62, %v61
  %v78 = vpack.c.b16 %v64, %v63
  %v79 = vpack.c.b16 %v66, %v65
  %v80 = vpack.c.b16 %v68, %v67
  %v81 = vpack.c.b16 %v70, %v69
  %v82 = vpack.c.b16 %v72, %v71
  %v83 = vpack.c.b16 %v74, %v73
  %v84 = vpack.c.b16 %v76, %v75
  %v92 = vunpack.c.l.b16 %v31
  %v93 = vunpack.c.l.b16 %v32
  %v94 = vunpack.c.l.b16 %v33
  %v95 = vunpack.c.l.b16 %v34
  %v96 = vunpack.c.l.b16 %v35
  %v97 = vunpack.c.l.b16 %v36
  %v98 = vunpack.c.l.b16 %v37
  %v99 = vpack.c.b16 %v93, %v92
  %v100 = vpack.c.b16 %v95, %v94
  %v101 = vpack.c.b16 %v97, %v96
  %v102 = vpack.c.b16 %v98, %v98
  %vm106 = vcmask 441344
  %v108 = vsel %vm106, %v77, 0
  %v111 = vsel %vm106, %v78, 0
  %v114 = vsel %vm106, %v79, 0
  %v117 = vsel %vm106, %v80, 0
  %v120 = vsel %vm106, %v81, 0
  %v123 = vsel %vm106, %v82, 0
  %v126 = vsel %vm106, %v83, 0
  %v129 = vsel %vm106, %v84, 0
  %vm131 = vcmask 1042432
  %v133 = vsel %vm131, %v102, 0
  %135 = vmatprep.subr.bf16.mxu0 0
  %136 = vmatpush1.bf16.msra.mxu0 %v99
  %137 = vmatprep.subr.bf16.mxu0 0
  %138 = vmatpush1.bf16.msra.mxu0 %v100
  %139 = vmatprep.subr.bf16.mxu0 0
  %140 = vmatpush1.bf16.msra.mxu0 %v101
  %141 = vmatprep.subr.bf16.mxu0 0
  %142 = vmatpush1.bf16.msra.mxu0 %v133
  %143 = vmatprep.subr.bf16.mxu0 0
  %144 = vmatpush1.bf16.msra.mxu0 0
  %145 = vmatprep.subr.bf16.mxu0 0
  %146 = vmatpush1.bf16.msra.mxu0 0
  %147 = vmatprep.subr.bf16.mxu0 0
  %148 = vmatpush1.bf16.msra.mxu0 0
  %149 = vmatprep.subr.bf16.mxu0 0
  %150 = vmatpush1.bf16.msra.mxu0 0
  %151 = vmatprep.subr.bf16.mxu0 0
  %152 = vmatpush1.bf16.msra.mxu0 0
  %153 = vmatprep.subr.bf16.mxu0 0
  %154 = vmatpush1.bf16.msra.mxu0 0
  %155 = vmatprep.subr.bf16.mxu0 0
  %156 = vmatpush1.bf16.msra.mxu0 0
  %157 = vmatprep.subr.bf16.mxu0 0
  %158 = vmatpush1.bf16.msra.mxu0 0
  %159 = vmatprep.subr.bf16.mxu0 0
  %160 = vmatpush1.bf16.msra.mxu0 0
  %161 = vmatprep.subr.bf16.mxu0 0
  %162 = vmatpush1.bf16.msra.mxu0 0
  %163 = vmatprep.subr.bf16.mxu0 0
  %164 = vmatpush1.bf16.msra.mxu0 0
  %165 = vmatprep.subr.bf16.mxu0 0
  %166 = vmatpush1.bf16.msra.mxu0 0
  %167 = vmatprep.mubr.bf16.mxu0 0
  %168 = vmatmul.mubr.bf16.gmra.mrb[0].mxu0 %v108
  %v169 = vpop.f32.mrb[0].mxu0
  %v170 = vadd.f32 %v43, %v169
  %v171 = vpop.f32.mrb[0].mxu0
  %v172 = vpop.f32.mrb[0].mxu0
  %v173 = vadd.f32 %v43, %v172
  %v174 = vpop.f32.mrb[0].mxu0
  %175 = vmatprep.mubr.bf16.mxu0 0
  %176 = vmatmul.mubr.bf16.gmra.mrb[0].mxu0 %v111
  %v177 = vpop.f32.mrb[0].mxu0
  %v178 = vadd.f32 %v43, %v177
  %v179 = vpop.f32.mrb[0].mxu0
  %v180 = vpop.f32.mrb[0].mxu0
  %v181 = vadd.f32 %v43, %v180
  %v182 = vpop.f32.mrb[0].mxu0
  %183 = vmatprep.mubr.bf16.mxu0 0
  %184 = vmatmul.mubr.bf16.gmra.mrb[0].mxu0 %v114
  %v185 = vpop.f32.mrb[0].mxu0
  %v186 = vadd.f32 %v43, %v185
  %v187 = vpop.f32.mrb[0].mxu0
  %v188 = vpop.f32.mrb[0].mxu0
  %v189 = vadd.f32 %v43, %v188
  %v190 = vpop.f32.mrb[0].mxu0
  %191 = vmatprep.mubr.bf16.mxu0 0
  %192 = vmatmul.mubr.bf16.gmra.mrb[0].mxu0 %v117
  %v193 = vpop.f32.mrb[0].mxu0
  %v194 = vadd.f32 %v43, %v193
  %v195 = vpop.f32.mrb[0].mxu0
  %v196 = vpop.f32.mrb[0].mxu0
  %v197 = vadd.f32 %v43, %v196
  %v198 = vpop.f32.mrb[0].mxu0
  %199 = vmatprep.mubr.bf16.mxu0 0
  %200 = vmatmul.mubr.bf16.gmra.mrb[0].mxu0 %v120
  %v201 = vpop.f32.mrb[0].mxu0
  %v202 = vadd.f32 %v43, %v201
  %v203 = vpop.f32.mrb[0].mxu0
  %v204 = vpop.f32.mrb[0].mxu0
  %v205 = vadd.f32 %v43, %v204
  %v206 = vpop.f32.mrb[0].mxu0
  %207 = vmatprep.mubr.bf16.mxu0 0
  %208 = vmatmul.mubr.bf16.gmra.mrb[0].mxu0 %v123
  %v209 = vpop.f32.mrb[0].mxu0
  %v210 = vadd.f32 %v43, %v209
  %v211 = vpop.f32.mrb[0].mxu0
  %v212 = vpop.f32.mrb[0].mxu0
  %v213 = vadd.f32 %v43, %v212
  %v214 = vpop.f32.mrb[0].mxu0
  %215 = vmatprep.mubr.bf16.mxu0 0
  %216 = vmatmul.mubr.bf16.gmra.mrb[0].mxu0 %v126
  %v217 = vpop.f32.mrb[0].mxu0
  %v218 = vadd.f32 %v43, %v217
  %v219 = vpop.f32.mrb[0].mxu0
  %v220 = vpop.f32.mrb[0].mxu0
  %v221 = vadd.f32 %v43, %v220
  %v222 = vpop.f32.mrb[0].mxu0
  %223 = vmatprep.mubr.bf16.mxu0 0
  %224 = vmatmul.mubr.bf16.gmra.mrb[0].mxu0 %v129
  %v225 = vpop.f32.mrb[0].mxu0
  %v226 = vadd.f32 %v43, %v225
  %v227 = vpop.f32.mrb[0].mxu0
  %v228 = vpop.f32.mrb[0].mxu0
  %v229 = vadd.f32 %v43, %v228
  %v230 = vpop.f32.mrb[0].mxu0
  %231 = vdwg.mxu0
  %v232 = vmax.f32 %v170, 0.0
  %v233 = vmax.f32 %v173, 0.0
  %v234 = vmax.f32 %v178, 0.0
  %v235 = vmax.f32 %v181, 0.0
  %v236 = vmax.f32 %v186, 0.0
  %v237 = vmax.f32 %v189, 0.0
  %v238 = vmax.f32 %v194, 0.0
  %v239 = vmax.f32 %v197, 0.0
  %v240 = vmax.f32 %v202, 0.0
  %v241 = vmax.f32 %v205, 0.0
  %v242 = vmax.f32 %v210, 0.0
  %v243 = vmax.f32 %v213, 0.0
  %v244 = vmax.f32 %v218, 0.0
  %v245 = vmax.f32 %v221, 0.0
  %v246 = vmax.f32 %v226, 0.0
  %v247 = vmax.f32 %v229, 0.0
  %v248 = vpack.c.bf16 %v233, %v232
  %v249 = vpack.c.bf16 %v235, %v234
  %v250 = vpack.c.bf16 %v237, %v236
  %v251 = vpack.c.bf16 %v239, %v238
  %v252 = vpack.c.bf16 %v241, %v240
  %v253 = vpack.c.bf16 %v243, %v242
  %v254 = vpack.c.bf16 %v245, %v244
  %v255 = vpack.c.bf16 %v247, %v246
  %v264 = vunpack.c.l.b16 %v248
  %v265 = vunpack.c.h.b16 %v248
  %v266 = vunpack.c.l.b16 %v249
  %v267 = vunpack.c.h.b16 %v249
  %v268 = vunpack.c.l.b16 %v250
  %v269 = vunpack.c.h.b16 %v250
  %v270 = vunpack.c.l.b16 %v251
  %v271 = vunpack.c.h.b16 %v251
  %v272 = vunpack.c.l.b16 %v252
  %v273 = vunpack.c.h.b16 %v252
  %v274 = vunpack.c.l.b16 %v253
  %v275 = vunpack.c.h.b16 %v253
  %v276 = vunpack.c.l.b16 %v254
  %v277 = vunpack.c.h.b16 %v254
  %v278 = vunpack.c.l.b16 %v255
  %v279 = vunpack.c.h.b16 %v255
  %v280 = vpack.c.b16 %v264, %v264
  %v281 = vpack.c.b16 %v265, %v265
  %v282 = vpack.c.b16 %v266, %v266
  %v283 = vpack.c.b16 %v267, %v267
  %v284 = vpack.c.b16 %v268, %v268
  %v285 = vpack.c.b16 %v269, %v269
  %v286 = vpack.c.b16 %v270, %v270
  %v287 = vpack.c.b16 %v271, %v271
  %v288 = vpack.c.b16 %v272, %v272
  %v289 = vpack.c.b16 %v273, %v273
  %v290 = vpack.c.b16 %v274, %v274
  %v291 = vpack.c.b16 %v275, %v275
  %v292 = vpack.c.b16 %v276, %v276
  %v293 = vpack.c.b16 %v277, %v277
  %v294 = vpack.c.b16 %v278, %v278
  %v295 = vpack.c.b16 %v279, %v279
  %vm312 = vcmask 257024
  %313 = vst.msk [vmem:[%s3] sm:$0xf] %vm312, %v280
  %314 = vst.msk [vmem:[%s3 + $0x4] sm:$0xf] %vm312, %v281
  %315 = vst.msk [vmem:[%s3 + $0x8] sm:$0xf] %vm312, %v282
  %316 = vst.msk [vmem:[%s3 + $0xc] sm:$0xf] %vm312, %v283
  %317 = vst.msk [vmem:[%s3 + $0x10] sm:$0xf] %vm312, %v284
  %318 = vst.msk [vmem:[%s3 + $0x14] sm:$0xf] %vm312, %v285
  %319 = vst.msk [vmem:[%s3 + $0x18] sm:$0xf] %vm312, %v286
  %320 = vst.msk [vmem:[%s3 + $0x1c] sm:$0xf] %vm312, %v287
  %321 = vst.msk [vmem:[%s3 + $0x20] sm:$0xf] %vm312, %v288
  %322 = vst.msk [vmem:[%s3 + $0x24] sm:$0xf] %vm312, %v289
  %323 = vst.msk [vmem:[%s3 + $0x28] sm:$0xf] %vm312, %v290
  %324 = vst.msk [vmem:[%s3 + $0x2c] sm:$0xf] %vm312, %v291
  %325 = vst.msk [vmem:[%s3 + $0x30] sm:$0xf] %vm312, %v292
  %326 = vst.msk [vmem:[%s3 + $0x34] sm:$0xf] %vm312, %v293
  %327 = vst.msk [vmem:[%s3 + $0x38] sm:$0xf] %vm312, %v294
  %328 = vst.msk [vmem:[%s3 + $0x3c] sm:$0xf] %vm312, %v295
  // Predicated region
  $region14: #{funie_discriminator.5} parent=0 // pred_check
    _
  $region15: #{funie_discriminator.5} parent=0 // pred_check_branch
    %330 = sbr.rel (0) target = $region17
  $region16: #{funie_discriminator.5} parent=0 // pred_region
    _
  $region17: #{funie_discriminator.5} parent=0 // pred_fallthru
    _
  // Predicated region
  $region18: #{funie_discriminator.5} parent=0 // pred_check
    _
  $region19: #{funie_discriminator.5} parent=0 // pred_check_branch
    %332 = sbr.rel (0) target = $region21
  $region20: #{funie_discriminator.5} parent=0 // pred_region
    _
  $region21: #{funie_discriminator.5} parent=0 // pred_fallthru
    _

// kernel: funie_discriminator.6
$region0: #{funie_discriminator.6}
  #allocation0 [shape = 'u32[]', space=smem, size = 0x4, offset = 0x4, fixed_abs, tag = 'smem constant byte address 0x4 - core index']
  #allocation1 [shape = 'u32[144,128]{1,0:T(1,128)}', space=vmem, size = 0x12000, scoped, tag = 'internal scratch']
  %s0 = inlined_call_operand.vmem [shape: bf16[32,288], index: 0, kind: input, shape index: {}]
  %s1 = inlined_call_operand.vmem [shape: bf16[288,128], index: 1, kind: input, shape index: {}]
  %s2 = inlined_call_operand.vmem [shape: f32[1,128], index: 2, kind: input, shape index: {}]
  %s3 = inlined_call_operand.vmem [shape: bf16[32,128], index: 3, kind: output, shape index: {0}]
  %s4 = inlined_call_operand.vmem [shape: f32[8,128], index: 4, kind: output, shape index: {1}]
  %5 = xla_tuple %s3, %s4
  %s6 = sld [smem:[#allocation0]]
  $region30: #{funie_discriminator.6} parent=0
    _
  %s8 = ssub.s32 1, %s6
  %s9 = scalar_select 0, %s8, %s6
  // Predicated region
  $region2: #{funie_discriminator.6} parent=0 // pred_check
    _
  $region3: #{funie_discriminator.6} parent=0 // pred_check_branch
    %11 = sbr.rel (0) target = $region5
  $region4: #{funie_discriminator.6} parent=0 // pred_region
    _
  $region5: #{funie_discriminator.6} parent=0 // pred_fallthru
    _
  // Predicated region
  $region6: #{funie_discriminator.6} parent=0 // pred_check
    _
  $region7: #{funie_discriminator.6} parent=0 // pred_check_branch
    %13 = sbr.rel (0) target = $region9
  $region8: #{funie_discriminator.6} parent=0 // pred_region
    _
  $region9: #{funie_discriminator.6} parent=0 // pred_fallthru
    _
  // Predicated region
  $region10: #{funie_discriminator.6} parent=0 // pred_check
    _
  $region11: #{funie_discriminator.6} parent=0 // pred_check_branch
    %15 = sbr.rel (0) target = $region13
  $region12: #{funie_discriminator.6} parent=0 // pred_region
    _
  $region13: #{funie_discriminator.6} parent=0 // pred_fallthru
    _
  %v17 = vld [vmem:[%s0] sm:$0xff]
  %v18 = vld [vmem:[%s0 + $0x8] sm:$0xf]
  %v19 = vld [vmem:[%s0 + $0xc] sm:$0xff]
  %v20 = vld [vmem:[%s0 + $0x14] sm:$0xf]
  %v21 = vld [vmem:[%s0 + $0x18] sm:$0xff]
  %v22 = vld [vmem:[%s0 + $0x20] sm:$0xf]
  %v23 = vld [vmem:[%s0 + $0x24] sm:$0xff]
  %v24 = vld [vmem:[%s0 + $0x2c] sm:$0xf]
  %v25 = vld [vmem:[%s1] sm:$0xf]
  %v26 = vld [vmem:[%s1 + $0x4] sm:$0xf]
  %v27 = vld [vmem:[%s1 + $0x8] sm:$0xf]
  %v28 = vld [vmem:[%s1 + $0xc] sm:$0xf]
  %v29 = vld [vmem:[%s1 + $0x10] sm:$0xf]
  %v30 = vld [vmem:[%s1 + $0x14] sm:$0xf]
  %v31 = vld [vmem:[%s1 + $0x18] sm:$0xf]
  %v32 = vld [vmem:[%s1 + $0x1c] sm:$0xf]
  %v33 = vld [vmem:[%s1 + $0x20] sm:$0xf]
  %v34 = vld [vmem:[%s1 + $0x24] sm:$0xf]
  %v35 = vld [vmem:[%s1 + $0x28] sm:$0xf]
  %v36 = vld [vmem:[%s1 + $0x2c] sm:$0xf]
  %v37 = vld [vmem:[%s1 + $0x30] sm:$0xf]
  %v38 = vld [vmem:[%s1 + $0x34] sm:$0xf]
  %v39 = vld [vmem:[%s1 + $0x38] sm:$0xf]
  %v40 = vld [vmem:[%s1 + $0x3c] sm:$0xf]
  %v41 = vld [vmem:[%s1 + $0x40] sm:$0xf]
  %v42 = vld [vmem:[%s1 + $0x44] sm:$0xf]
  %v43 = vld [vmem:[%s1 + $0x48] sm:$0xf]
  %v44 = vld [vmem:[%s1 + $0x4c] sm:$0xf]
  %v45 = vld [vmem:[%s1 + $0x50] sm:$0xf]
  %v46 = vld [vmem:[%s1 + $0x54] sm:$0xf]
  %v47 = vld [vmem:[%s1 + $0x58] sm:$0xf]
  %v48 = vld [vmem:[%s1 + $0x5c] sm:$0xf]
  %v49 = vld [vmem:[%s1 + $0x60] sm:$0xf]
  %v50 = vld [vmem:[%s1 + $0x64] sm:$0xf]
  %v51 = vld [vmem:[%s1 + $0x68] sm:$0xf]
  %v52 = vld [vmem:[%s1 + $0x6c] sm:$0xf]
  %v53 = vld [vmem:[%s1 + $0x70] sm:$0xf]
  %v54 = vld [vmem:[%s1 + $0x74] sm:$0xf]
  %v55 = vld [vmem:[%s1 + $0x78] sm:$0xf]
  %v56 = vld [vmem:[%s1 + $0x7c] sm:$0xf]
  %v57 = vld [vmem:[%s1 + $0x80] sm:$0xf]
  %v58 = vld [vmem:[%s1 + $0x84] sm:$0xf]
  %v59 = vld [vmem:[%s1 + $0x88] sm:$0xf]
  %v60 = vld [vmem:[%s1 + $0x8c] sm:$0xf]
  %v61 = vld [vmem:[%s2] sm:$0x1]
  %v63 = vlaneseq
  %v64 = vshrl.u32 %v63, 7
  %v65 = vsub.s32 0, %v64
  %v66 = vrot.slane %v61, %v65
  %v76 = vunpack.c.l.b16 %v17
  %v77 = vunpack.c.h.b16 %v17
  %v78 = vunpack.c.l.b16 %v18
  %v79 = vunpack.c.l.b16 %v19
  %v80 = vunpack.c.h.b16 %v19
  %v81 = vunpack.c.l.b16 %v20
  %v82 = vunpack.c.l.b16 %v21
  %v83 = vunpack.c.h.b16 %v21
  %v84 = vunpack.c.l.b16 %v22
  %v85 = vunpack.c.l.b16 %v23
  %v86 = vunpack.c.h.b16 %v23
  %v87 = vunpack.c.l.b16 %v24
  %v88 = vpack.c.b16 %v79, %v76
  %v89 = vpack.c.b16 %v80, %v77
  %v90 = vpack.c.b16 %v81, %v78
  %v91 = vpack.c.b16 %v85, %v82
  %v92 = vpack.c.b16 %v86, %v83
  %v93 = vpack.c.b16 %v87, %v84
  %v134 = vunpack.c.l.b16 %v25
  %v135 = vunpack.c.l.b16 %v26
  %v136 = vunpack.c.l.b16 %v27
  %v137 = vunpack.c.l.b16 %v28
  %v138 = vunpack.c.l.b16 %v29
  %v139 = vunpack.c.l.b16 %v30
  %v140 = vunpack.c.l.b16 %v31
  %v141 = vunpack.c.l.b16 %v32
  %v142 = vunpack.c.l.b16 %v33
  %v143 = vunpack.c.l.b16 %v34
  %v144 = vunpack.c.l.b16 %v35
  %v145 = vunpack.c.l.b16 %v36
  %v146 = vunpack.c.l.b16 %v37
  %v147 = vunpack.c.l.b16 %v38
  %v148 = vunpack.c.l.b16 %v39
  %v149 = vunpack.c.l.b16 %v40
  %v150 = vunpack.c.l.b16 %v41
  %v151 = vunpack.c.l.b16 %v42
  %v152 = vunpack.c.l.b16 %v43
  %v153 = vunpack.c.l.b16 %v44
  %v154 = vunpack.c.l.b16 %v45
  %v155 = vunpack.c.l.b16 %v46
  %v156 = vunpack.c.l.b16 %v47
  %v157 = vunpack.c.l.b16 %v48
  %v158 = vunpack.c.l.b16 %v49
  %v159 = vunpack.c.l.b16 %v50
  %v160 = vunpack.c.l.b16 %v51
  %v161 = vunpack.c.l.b16 %v52
  %v162 = vunpack.c.l.b16 %v53
  %v163 = vunpack.c.l.b16 %v54
  %v164 = vunpack.c.l.b16 %v55
  %v165 = vunpack.c.l.b16 %v56
  %v166 = vunpack.c.l.b16 %v57
  %v167 = vunpack.c.l.b16 %v58
  %v168 = vunpack.c.l.b16 %v59
  %v169 = vunpack.c.l.b16 %v60
  %v170 = vpack.c.b16 %v135, %v134
  %v171 = vpack.c.b16 %v137, %v136
  %v172 = vpack.c.b16 %v139, %v138
  %v173 = vpack.c.b16 %v141, %v140
  %v174 = vpack.c.b16 %v143, %v142
  %v175 = vpack.c.b16 %v145, %v144
  %v176 = vpack.c.b16 %v147, %v146
  %v177 = vpack.c.b16 %v149, %v148
  %v178 = vpack.c.b16 %v151, %v150
  %v179 = vpack.c.b16 %v153, %v152
  %v180 = vpack.c.b16 %v155, %v154
  %v181 = vpack.c.b16 %v157, %v156
  %v182 = vpack.c.b16 %v159, %v158
  %v183 = vpack.c.b16 %v161, %v160
  %v184 = vpack.c.b16 %v163, %v162
  %v185 = vpack.c.b16 %v165, %v164
  %v186 = vpack.c.b16 %v167, %v166
  %v187 = vpack.c.b16 %v169, %v168
  %vm206 = vcmask 261120
  %v208 = vsel %vm206, %v90, 0
  %v211 = vsel %vm206, %v93, 0
  %213 = vmatprep.subr.bf16.mxu0 0
  %214 = vmatpush1.bf16.msra.mxu0 %v170
  %215 = vmatprep.subr.bf16.mxu0 0
  %216 = vmatpush1.bf16.msra.mxu0 %v171
  %217 = vmatprep.subr.bf16.mxu0 0
  %218 = vmatpush1.bf16.msra.mxu0 %v172
  %219 = vmatprep.subr.bf16.mxu0 0
  %220 = vmatpush1.bf16.msra.mxu0 %v173
  %221 = vmatprep.subr.bf16.mxu0 0
  %222 = vmatpush1.bf16.msra.mxu0 %v174
  %223 = vmatprep.subr.bf16.mxu0 0
  %224 = vmatpush1.bf16.msra.mxu0 %v175
  %225 = vmatprep.subr.bf16.mxu0 0
  %226 = vmatpush1.bf16.msra.mxu0 %v176
  %227 = vmatprep.subr.bf16.mxu0 0
  %228 = vmatpush1.bf16.msra.mxu0 %v177
  %229 = vmatprep.subr.bf16.mxu0 0
  %230 = vmatpush1.bf16.msra.mxu0 %v178
  %231 = vmatprep.subr.bf16.mxu0 0
  %232 = vmatpush1.bf16.msra.mxu0 %v179
  %233 = vmatprep.subr.bf16.mxu0 0
  %234 = vmatpush1.bf16.msra.mxu0 %v180
  %235 = vmatprep.subr.bf16.mxu0 0
  %236 = vmatpush1.bf16.msra.mxu0 %v181
  %237 = vmatprep.subr.bf16.mxu0 0
  %238 = vmatpush1.bf16.msra.mxu0 %v182
  %239 = vmatprep.subr.bf16.mxu0 0
  %240 = vmatpush1.bf16.msra.mxu0 %v183
  %241 = vmatprep.subr.bf16.mxu0 0
  %242 = vmatpush1.bf16.msra.mxu0 %v184
  %243 = vmatprep.subr.bf16.mxu0 0
  %244 = vmatpush1.bf16.msra.mxu0 %v185
  %245 = vmatprep.mubr.bf16.mxu0 %v89
  %246 = vmatmul.mubr.bf16.gmra.mrb[0].mxu0 %v88
  %v247 = vpop.f32.mrb[0].mxu0
  %v248 = vadd.f32 %v66, %v247
  %v249 = vpop.f32.mrb[0].mxu0
  %v250 = vpop.f32.mrb[0].mxu0
  %v251 = vadd.f32 %v66, %v250
  %v252 = vpop.f32.mrb[0].mxu0
  %253 = vmatprep.mubr.bf16.mxu0 %v92
  %254 = vmatmul.mubr.bf16.gmra.mrb[0].mxu0 %v91
  %v255 = vpop.f32.mrb[0].mxu0
  %v256 = vadd.f32 %v66, %v255
  %v257 = vpop.f32.mrb[0].mxu0
  %v258 = vpop.f32.mrb[0].mxu0
  %v259 = vadd.f32 %v66, %v258
  %v260 = vpop.f32.mrb[0].mxu0
  %261 = vdwg.mxu0
  %262 = vmatprep.subr.bf16.mxu0 0
  %263 = vmatpush1.bf16.msra.mxu0 %v186
  %264 = vmatprep.subr.bf16.mxu0 0
  %265 = vmatpush1.bf16.msra.mxu0 %v187
  %266 = vmatprep.subr.bf16.mxu0 0
  %267 = vmatpush1.bf16.msra.mxu0 0
  %268 = vmatprep.subr.bf16.mxu0 0
  %269 = vmatpush1.bf16.msra.mxu0 0
  %270 = vmatprep.subr.bf16.mxu0 0
  %271 = vmatpush1.bf16.msra.mxu0 0
  %272 = vmatprep.subr.bf16.mxu0 0
  %273 = vmatpush1.bf16.msra.mxu0 0
  %274 = vmatprep.subr.bf16.mxu0 0
  %275 = vmatpush1.bf16.msra.mxu0 0
  %276 = vmatprep.subr.bf16.mxu0 0
  %277 = vmatpush1.bf16.msra.mxu0 0
  %278 = vmatprep.subr.bf16.mxu0 0
  %279 = vmatpush1.bf16.msra.mxu0 0
  %280 = vmatprep.subr.bf16.mxu0 0
  %281 = vmatpush1.bf16.msra.mxu0 0
  %282 = vmatprep.subr.bf16.mxu0 0
  %283 = vmatpush1.bf16.msra.mxu0 0
  %284 = vmatprep.subr.bf16.mxu0 0
  %285 = vmatpush1.bf16.msra.mxu0 0
  %286 = vmatprep.subr.bf16.mxu0 0
  %287 = vmatpush1.bf16.msra.mxu0 0
  %288 = vmatprep.subr.bf16.mxu0 0
  %289 = vmatpush1.bf16.msra.mxu0 0
  %290 = vmatprep.subr.bf16.mxu0 0
  %291 = vmatpush1.bf16.msra.mxu0 0
  %292 = vmatprep.subr.bf16.mxu0 0
  %293 = vmatpush1.bf16.msra.mxu0 0
  %294 = vmatprep.mubr.bf16.mxu0 0
  %295 = vmatmul.mubr.bf16.gmra.mrb[0].mxu0 %v208
  %v296 = vpop.f32.mrb[0].mxu0
  %v297 = vadd.f32 %v248, %v296
  %v298 = vpop.f32.mrb[0].mxu0
  %v299 = vpop.f32.mrb[0].mxu0
  %v300 = vadd.f32 %v251, %v299
  %v301 = vpop.f32.mrb[0].mxu0
  %302 = vmatprep.mubr.bf16.mxu0 0
  %303 = vmatmul.mubr.bf16.gmra.mrb[0].mxu0 %v211
  %v304 = vpop.f32.mrb[0].mxu0
  %v305 = vadd.f32 %v256, %v304
  %v306 = vpop.f32.mrb[0].mxu0
  %v307 = vpop.f32.mrb[0].mxu0
  %v308 = vadd.f32 %v259, %v307
  %v309 = vpop.f32.mrb[0].mxu0
  %310 = vdwg.mxu0
  %v311 = vmax.f32 %v297, 0.0
  %v312 = vmax.f32 %v300, 0.0
  %v313 = vmax.f32 %v305, 0.0
  %v314 = vmax.f32 %v308, 0.0
  %v315 = vpack.c.bf16 %v312, %v311
  %v316 = vpack.c.bf16 %v314, %v313
  %v319 = vunpack.c.l.b16 %v315
  %v320 = vunpack.c.h.b16 %v315
  %v321 = vunpack.c.l.b16 %v316
  %v322 = vunpack.c.h.b16 %v316
  %v323 = vpack.c.b16 %v319, %v319
  %v324 = vpack.c.b16 %v320, %v320
  %v325 = vpack.c.b16 %v321, %v321
  %v326 = vpack.c.b16 %v322, %v322
  %331 = vst [vmem:[%s3] sm:$0xf] %v323
  %332 = vst [vmem:[%s3 + $0x4] sm:$0xf] %v324
  %333 = vst [vmem:[%s3 + $0x8] sm:$0xf] %v325
  %334 = vst [vmem:[%s3 + $0xc] sm:$0xf] %v326
  %s335 = smul.u32 0, 32
  %v336 = vlaneseq
  %v337 = vshrl.u32 %v336, 7
  %v338 = vadd.s32 %v337, 8
  %v339 = vadd.s32 %v337, 16
  %v340 = vadd.s32 %v337, 24
  %v341 = vstv %s335
  %v342 = vadd.s32 %v341, %v337
  %v343 = vadd.s32 %v341, %v338
  %v344 = vadd.s32 %v341, %v339
  %v345 = vadd.s32 %v341, %v340
  %vm346 = vcmp.lt.s32.totalorder %v342, 32
  %vm347 = vcmp.lt.s32.totalorder %v343, 32
  %vm348 = vcmp.lt.s32.totalorder %v344, 32
  %vm349 = vcmp.lt.s32.totalorder %v345, 32
  %v350 = vsel %vm346, %v311, 0.0
  %v351 = vsel %vm347, %v312, 0.0
  %v352 = vsel %vm348, %v313, 0.0
  %v353 = vsel %vm349, %v314, 0.0
  %v354 = vadd.f32 %v350, %v351
  %v355 = vadd.f32 %v354, %v352
  %v356 = vadd.f32 %v355, %v353
  %v357 = vrot.slane %v356, 4
  %v358 = vadd.f32 %v356, %v357
  %v359 = vrot.slane %v358, 2
  %v360 = vadd.f32 %v358, %v359
  %v361 = vrot.slane %v360, 1
  %v362 = vadd.f32 %v360, %v361
  %v363 = vmul.f32 %v350, %v350
  %v364 = vmul.f32 %v351, %v351
  %v365 = vmul.f32 %v352, %v352
  %v366 = vmul.f32 %v353, %v353
  %v367 = vadd.f32 %v363, %v364
  %v368 = vadd.f32 %v367, %v365
  %v369 = vadd.f32 %v368, %v366
  %v370 = vrot.slane %v369, 4
  %v371 = vadd.f32 %v369, %v370
  %v372 = vrot.slane %v371, 2
  %v373 = vadd.f32 %v371, %v372
  %v374 = vrot.slane %v373, 1
  %v375 = vadd.f32 %v373, %v374
  %376 = vst [vmem:[%s4] sm:$0x1] %v362
  %377 = vst [vmem:[%s4 + $0x1] sm:$0x1] %v375
  // Predicated region
  $region14: #{funie_discriminator.6} parent=0 // pred_check
    _
  $region15: #{funie_discriminator.6} parent=0 // pred_check_branch
    %379 = sbr.rel (0) target = $region17
  $region16: #{funie_discriminator.6} parent=0 // pred_region
    _
  $region17: #{funie_discriminator.6} parent=0 // pred_fallthru
    _
  // Predicated region
  $region18: #{funie_discriminator.6} parent=0 // pred_check
    _
  $region19: #{funie_discriminator.6} parent=0 // pred_check_branch
    %381 = sbr.rel (0) target = $region21
  $region20: #{funie_discriminator.6} parent=0 // pred_region
    _
  $region21: #{funie_discriminator.6} parent=0 // pred_fallthru
    _
  // Predicated region
  $region22: #{funie_discriminator.6} parent=0 // pred_check
    _
  $region23: #{funie_discriminator.6} parent=0 // pred_check_branch
    %383 = sbr.rel (0) target = $region25
  $region24: #{funie_discriminator.6} parent=0 // pred_region
    _
  $region25: #{funie_discriminator.6} parent=0 // pred_fallthru
    _
  // Predicated region
  $region26: #{funie_discriminator.6} parent=0 // pred_check
    _
  $region27: #{funie_discriminator.6} parent=0 // pred_check_branch
    %385 = sbr.rel (0) target = $region29
  $region28: #{funie_discriminator.6} parent=0 // pred_region
    _
  $region29: #{funie_discriminator.6} parent=0 // pred_fallthru
    _

// kernel: funie_discriminator.7
$region0: #{funie_discriminator.7}
  #allocation0 [shape = 'u32[]', space=smem, size = 0x4, offset = 0x4, fixed_abs, tag = 'smem constant byte address 0x4 - core index']
  #allocation1 [shape = 'u32[144,128]{1,0:T(1,128)}', space=vmem, size = 0x12000, scoped, tag = 'internal scratch']
  %s0 = inlined_call_operand.vmem [shape: bf16[8,576], index: 0, kind: input, shape index: {}]
  %s1 = inlined_call_operand.vmem [shape: bf16[576,128], index: 1, kind: input, shape index: {}]
  %s2 = inlined_call_operand.vmem [shape: f32[1,128], index: 2, kind: input, shape index: {}]
  %s3 = inlined_call_operand.vmem [shape: bf16[8,128], index: 3, kind: output, shape index: {0}]
  %s4 = inlined_call_operand.vmem [shape: f32[8,128], index: 4, kind: output, shape index: {1}]
  %5 = xla_tuple %s3, %s4
  %s6 = sld [smem:[#allocation0]]
  $region30: #{funie_discriminator.7} parent=0
    _
  %s8 = ssub.s32 1, %s6
  %s9 = scalar_select 0, %s8, %s6
  // Predicated region
  $region2: #{funie_discriminator.7} parent=0 // pred_check
    _
  $region3: #{funie_discriminator.7} parent=0 // pred_check_branch
    %11 = sbr.rel (0) target = $region5
  $region4: #{funie_discriminator.7} parent=0 // pred_region
    _
  $region5: #{funie_discriminator.7} parent=0 // pred_fallthru
    _
  // Predicated region
  $region6: #{funie_discriminator.7} parent=0 // pred_check
    _
  $region7: #{funie_discriminator.7} parent=0 // pred_check_branch
    %13 = sbr.rel (0) target = $region9
  $region8: #{funie_discriminator.7} parent=0 // pred_region
    _
  $region9: #{funie_discriminator.7} parent=0 // pred_fallthru
    _
  // Predicated region
  $region10: #{funie_discriminator.7} parent=0 // pred_check
    _
  $region11: #{funie_discriminator.7} parent=0 // pred_check_branch
    %15 = sbr.rel (0) target = $region13
  $region12: #{funie_discriminator.7} parent=0 // pred_region
    _
  $region13: #{funie_discriminator.7} parent=0 // pred_fallthru
    _
  %v17 = vld [vmem:[%s0] sm:$0xff]
  %v18 = vld [vmem:[%s0 + $0x8] sm:$0xff]
  %v19 = vld [vmem:[%s0 + $0x10] sm:$0xf]
  %v20 = vld [vmem:[%s1] sm:$0xf]
  %v21 = vld [vmem:[%s1 + $0x4] sm:$0xf]
  %v22 = vld [vmem:[%s1 + $0x8] sm:$0xf]
  %v23 = vld [vmem:[%s1 + $0xc] sm:$0xf]
  %v24 = vld [vmem:[%s1 + $0x10] sm:$0xf]
  %v25 = vld [vmem:[%s1 + $0x14] sm:$0xf]
  %v26 = vld [vmem:[%s1 + $0x18] sm:$0xf]
  %v27 = vld [vmem:[%s1 + $0x1c] sm:$0xf]
  %v28 = vld [vmem:[%s1 + $0x20] sm:$0xf]
  %v29 = vld [vmem:[%s1 + $0x24] sm:$0xf]
  %v30 = vld [vmem:[%s1 + $0x28] sm:$0xf]
  %v31 = vld [vmem:[%s1 + $0x2c] sm:$0xf]
  %v32 = vld [vmem:[%s1 + $0x30] sm:$0xf]
  %v33 = vld [vmem:[%s1 + $0x34] sm:$0xf]
  %v34 = vld [vmem:[%s1 + $0x38] sm:$0xf]
  %v35 = vld [vmem:[%s1 + $0x3c] sm:$0xf]
  %v36 = vld [vmem:[%s1 + $0x40] sm:$0xf]
  %v37 = vld [vmem:[%s1 + $0x44] sm:$0xf]
  %v38 = vld [vmem:[%s1 + $0x48] sm:$0xf]
  %v39 = vld [vmem:[%s1 + $0x4c] sm:$0xf]
  %v40 = vld [vmem:[%s1 + $0x50] sm:$0xf]
  %v41 = vld [vmem:[%s1 + $0x54] sm:$0xf]
  %v42 = vld [vmem:[%s1 + $0x58] sm:$0xf]
  %v43 = vld [vmem:[%s1 + $0x5c] sm:$0xf]
  %v44 = vld [vmem:[%s1 + $0x60] sm:$0xf]
  %v45 = vld [vmem:[%s1 + $0x64] sm:$0xf]
  %v46 = vld [vmem:[%s1 + $0x68] sm:$0xf]
  %v47 = vld [vmem:[%s1 + $0x6c] sm:$0xf]
  %v48 = vld [vmem:[%s1 + $0x70] sm:$0xf]
  %v49 = vld [vmem:[%s1 + $0x74] sm:$0xf]
  %v50 = vld [vmem:[%s1 + $0x78] sm:$0xf]
  %v51 = vld [vmem:[%s1 + $0x7c] sm:$0xf]
  %v52 = vld [vmem:[%s1 + $0x80] sm:$0xf]
  %v53 = vld [vmem:[%s1 + $0x84] sm:$0xf]
  %v54 = vld [vmem:[%s1 + $0x88] sm:$0xf]
  %v55 = vld [vmem:[%s1 + $0x8c] sm:$0xf]
  %v56 = vld [vmem:[%s1 + $0x90] sm:$0xf]
  %v57 = vld [vmem:[%s1 + $0x94] sm:$0xf]
  %v58 = vld [vmem:[%s1 + $0x98] sm:$0xf]
  %v59 = vld [vmem:[%s1 + $0x9c] sm:$0xf]
  %v60 = vld [vmem:[%s1 + $0xa0] sm:$0xf]
  %v61 = vld [vmem:[%s1 + $0xa4] sm:$0xf]
  %v62 = vld [vmem:[%s1 + $0xa8] sm:$0xf]
  %v63 = vld [vmem:[%s1 + $0xac] sm:$0xf]
  %v64 = vld [vmem:[%s1 + $0xb0] sm:$0xf]
  %v65 = vld [vmem:[%s1 + $0xb4] sm:$0xf]
  %v66 = vld [vmem:[%s1 + $0xb8] sm:$0xf]
  %v67 = vld [vmem:[%s1 + $0xbc] sm:$0xf]
  %v68 = vld [vmem:[%s1 + $0xc0] sm:$0xf]
  %v69 = vld [vmem:[%s1 + $0xc4] sm:$0xf]
  %v70 = vld [vmem:[%s1 + $0xc8] sm:$0xf]
  %v71 = vld [vmem:[%s1 + $0xcc] sm:$0xf]
  %v72 = vld [vmem:[%s1 + $0xd0] sm:$0xf]
  %v73 = vld [vmem:[%s1 + $0xd4] sm:$0xf]
  %v74 = vld [vmem:[%s1 + $0xd8] sm:$0xf]
  %v75 = vld [vmem:[%s1 + $0xdc] sm:$0xf]
  %v76 = vld [vmem:[%s1 + $0xe0] sm:$0xf]
  %v77 = vld [vmem:[%s1 + $0xe4] sm:$0xf]
  %v78 = vld [vmem:[%s1 + $0xe8] sm:$0xf]
  %v79 = vld [vmem:[%s1 + $0xec] sm:$0xf]
  %v80 = vld [vmem:[%s1 + $0xf0] sm:$0xf]
  %v81 = vld [vmem:[%s1 + $0xf4] sm:$0xf]
  %v82 = vld [vmem:[%s1 + $0xf8] sm:$0xf]
  %v83 = vld [vmem:[%s1 + $0xfc] sm:$0xf]
  %v84 = vld [vmem:[%s1 + $0x100] sm:$0xf]
  %v85 = vld [vmem:[%s1 + $0x104] sm:$0xf]
  %v86 = vld [vmem:[%s1 + $0x108] sm:$0xf]
  %v87 = vld [vmem:[%s1 + $0x10c] sm:$0xf]
  %v88 = vld [vmem:[%s1 + $0x110] sm:$0xf]
  %v89 = vld [vmem:[%s1 + $0x114] sm:$0xf]
  %v90 = vld [vmem:[%s1 + $0x118] sm:$0xf]
  %v91 = vld [vmem:[%s1 + $0x11c] sm:$0xf]
  %v92 = vld [vmem:[%s2] sm:$0x1]
  %v94 = vlaneseq
  %v95 = vshrl.u32 %v94, 7
  %v96 = vsub.s32 0, %v95
  %v97 = vrot.slane %v92, %v96
  %v102 = vunpack.c.l.b16 %v17
  %v103 = vunpack.c.h.b16 %v17
  %v104 = vunpack.c.l.b16 %v18
  %v105 = vunpack.c.h.b16 %v18
  %v106 = vunpack.c.l.b16 %v19
  %v107 = vpack.c.b16 %v102, %v102
  %v108 = vpack.c.b16 %v103, %v103
  %v109 = vpack.c.b16 %v104, %v104
  %v110 = vpack.c.b16 %v105, %v105
  %v111 = vpack.c.b16 %v106, %v106
  %v188 = vunpack.c.l.b16 %v20
  %v189 = vunpack.c.l.b16 %v21
  %v190 = vunpack.c.l.b16 %v22
  %v191 = vunpack.c.l.b16 %v23
  %v192 = vunpack.c.l.b16 %v24
  %v193 = vunpack.c.l.b16 %v25
  %v194 = vunpack.c.l.b16 %v26
  %v195 = vunpack.c.l.b16 %v27
  %v196 = vunpack.c.l.b16 %v28
  %v197 = vunpack.c.l.b16 %v29
  %v198 = vunpack.c.l.b16 %v30
  %v199 = vunpack.c.l.b16 %v31
  %v200 = vunpack.c.l.b16 %v32
  %v201 = vunpack.c.l.b16 %v33
  %v202 = vunpack.c.l.b16 %v34
  %v203 = vunpack.c.l.b16 %v35
  %v204 = vunpack.c.l.b16 %v36
  %v205 = vunpack.c.l.b16 %v37
  %v206 = vunpack.c.l.b16 %v38
  %v207 = vunpack.c.l.b16 %v39
  %v208 = vunpack.c.l.b16 %v40
  %v209 = vunpack.c.l.b16 %v41
  %v210 = vunpack.c.l.b16 %v42
  %v211 = vunpack.c.l.b16 %v43
  %v212 = vunpack.c.l.b16 %v44
  %v213 = vunpack.c.l.b16 %v45
  %v214 = vunpack.c.l.b16 %v46
  %v215 = vunpack.c.l.b16 %v47
  %v216 = vunpack.c.l.b16 %v48
  %v217 = vunpack.c.l.b16 %v49
  %v218 = vunpack.c.l.b16 %v50
  %v219 = vunpack.c.l.b16 %v51
  %v220 = vunpack.c.l.b16 %v52
  %v221 = vunpack.c.l.b16 %v53
  %v222 = vunpack.c.l.b16 %v54
  %v223 = vunpack.c.l.b16 %v55
  %v224 = vunpack.c.l.b16 %v56
  %v225 = vunpack.c.l.b16 %v57
  %v226 = vunpack.c.l.b16 %v58
  %v227 = vunpack.c.l.b16 %v59
  %v228 = vunpack.c.l.b16 %v60
  %v229 = vunpack.c.l.b16 %v61
  %v230 = vunpack.c.l.b16 %v62
  %v231 = vunpack.c.l.b16 %v63
  %v232 = vunpack.c.l.b16 %v64
  %v233 = vunpack.c.l.b16 %v65
  %v234 = vunpack.c.l.b16 %v66
  %v235 = vunpack.c.l.b16 %v67
  %v236 = vunpack.c.l.b16 %v68
  %v237 = vunpack.c.l.b16 %v69
  %v238 = vunpack.c.l.b16 %v70
  %v239 = vunpack.c.l.b16 %v71
  %v240 = vunpack.c.l.b16 %v72
  %v241 = vunpack.c.l.b16 %v73
  %v242 = vunpack.c.l.b16 %v74
  %v243 = vunpack.c.l.b16 %v75
  %v244 = vunpack.c.l.b16 %v76
  %v245 = vunpack.c.l.b16 %v77
  %v246 = vunpack.c.l.b16 %v78
  %v247 = vunpack.c.l.b16 %v79
  %v248 = vunpack.c.l.b16 %v80
  %v249 = vunpack.c.l.b16 %v81
  %v250 = vunpack.c.l.b16 %v82
  %v251 = vunpack.c.l.b16 %v83
  %v252 = vunpack.c.l.b16 %v84
  %v253 = vunpack.c.l.b16 %v85
  %v254 = vunpack.c.l.b16 %v86
  %v255 = vunpack.c.l.b16 %v87
  %v256 = vunpack.c.l.b16 %v88
  %v257 = vunpack.c.l.b16 %v89
  %v258 = vunpack.c.l.b16 %v90
  %v259 = vunpack.c.l.b16 %v91
  %v260 = vpack.c.b16 %v189, %v188
  %v261 = vpack.c.b16 %v191, %v190
  %v262 = vpack.c.b16 %v193, %v192
  %v263 = vpack.c.b16 %v195, %v194
  %v264 = vpack.c.b16 %v197, %v196
  %v265 = vpack.c.b16 %v199, %v198
  %v266 = vpack.c.b16 %v201, %v200
  %v267 = vpack.c.b16 %v203, %v202
  %v268 = vpack.c.b16 %v205, %v204
  %v269 = vpack.c.b16 %v207, %v206
  %v270 = vpack.c.b16 %v209, %v208
  %v271 = vpack.c.b16 %v211, %v210
  %v272 = vpack.c.b16 %v213, %v212
  %v273 = vpack.c.b16 %v215, %v214
  %v274 = vpack.c.b16 %v217, %v216
  %v275 = vpack.c.b16 %v219, %v218
  %v276 = vpack.c.b16 %v221, %v220
  %v277 = vpack.c.b16 %v223, %v222
  %v278 = vpack.c.b16 %v225, %v224
  %v279 = vpack.c.b16 %v227, %v226
  %v280 = vpack.c.b16 %v229, %v228
  %v281 = vpack.c.b16 %v231, %v230
  %v282 = vpack.c.b16 %v233, %v232
  %v283 = vpack.c.b16 %v235, %v234
  %v284 = vpack.c.b16 %v237, %v236
  %v285 = vpack.c.b16 %v239, %v238
  %v286 = vpack.c.b16 %v241, %v240
  %v287 = vpack.c.b16 %v243, %v242
  %v288 = vpack.c.b16 %v245, %v244
  %v289 = vpack.c.b16 %v247, %v246
  %v290 = vpack.c.b16 %v249, %v248
  %v291 = vpack.c.b16 %v251, %v250
  %v292 = vpack.c.b16 %v253, %v252
  %v293 = vpack.c.b16 %v255, %v254
  %v294 = vpack.c.b16 %v257, %v256
  %v295 = vpack.c.b16 %v259, %v258
  %vm332 = vcmask 523264
  %v334 = vsel %vm332, %v111, 0
  %336 = vmatprep.subr.bf16.mxu0 0
  %337 = vmatpush1.bf16.msra.mxu0 %v260
  %338 = vmatprep.subr.bf16.mxu0 0
  %339 = vmatpush1.bf16.msra.mxu0 %v261
  %340 = vmatprep.subr.bf16.mxu0 0
  %341 = vmatpush1.bf16.msra.mxu0 %v262
  %342 = vmatprep.subr.bf16.mxu0 0
  %343 = vmatpush1.bf16.msra.mxu0 %v263
  %344 = vmatprep.subr.bf16.mxu0 0
  %345 = vmatpush1.bf16.msra.mxu0 %v264
  %346 = vmatprep.subr.bf16.mxu0 0
  %347 = vmatpush1.bf16.msra.mxu0 %v265
  %348 = vmatprep.subr.bf16.mxu0 0
  %349 = vmatpush1.bf16.msra.mxu0 %v266
  %350 = vmatprep.subr.bf16.mxu0 0
  %351 = vmatpush1.bf16.msra.mxu0 %v267
  %352 = vmatprep.subr.bf16.mxu0 0
  %353 = vmatpush1.bf16.msra.mxu0 %v268
  %354 = vmatprep.subr.bf16.mxu0 0
  %355 = vmatpush1.bf16.msra.mxu0 %v269
  %356 = vmatprep.subr.bf16.mxu0 0
  %357 = vmatpush1.bf16.msra.mxu0 %v270
  %358 = vmatprep.subr.bf16.mxu0 0
  %359 = vmatpush1.bf16.msra.mxu0 %v271
  %360 = vmatprep.subr.bf16.mxu0 0
  %361 = vmatpush1.bf16.msra.mxu0 %v272
  %362 = vmatprep.subr.bf16.mxu0 0
  %363 = vmatpush1.bf16.msra.mxu0 %v273
  %364 = vmatprep.subr.bf16.mxu0 0
  %365 = vmatpush1.bf16.msra.mxu0 %v274
  %366 = vmatprep.subr.bf16.mxu0 0
  %367 = vmatpush1.bf16.msra.mxu0 %v275
  %368 = vmatprep.mubr.bf16.mxu0 %v108
  %369 = vmatmul.mubr.bf16.gmra.mrb[0].mxu0 %v107
  %v370 = vpop.f32.mrb[0].mxu0
  %v371 = vadd.f32 %v97, %v370
  %v372 = vpop.f32.mrb[0].mxu0
  %v373 = vpop.f32.mrb[0].mxu0
  %v374 = vpop.f32.mrb[0].mxu0
  %375 = vdwg.mxu0
  %376 = vmatprep.subr.bf16.mxu0 0
  %377 = vmatpush1.bf16.msra.mxu0 %v276
  %378 = vmatprep.subr.bf16.mxu0 0
  %379 = vmatpush1.bf16.msra.mxu0 %v277
  %380 = vmatprep.subr.bf16.mxu0 0
  %381 = vmatpush1.bf16.msra.mxu0 %v278
  %382 = vmatprep.subr.bf16.mxu0 0
  %383 = vmatpush1.bf16.msra.mxu0 %v279
  %384 = vmatprep.subr.bf16.mxu0 0
  %385 = vmatpush1.bf16.msra.mxu0 %v280
  %386 = vmatprep.subr.bf16.mxu0 0
  %387 = vmatpush1.bf16.msra.mxu0 %v281
  %388 = vmatprep.subr.bf16.mxu0 0
  %389 = vmatpush1.bf16.msra.mxu0 %v282
  %390 = vmatprep.subr.bf16.mxu0 0
  %391 = vmatpush1.bf16.msra.mxu0 %v283
  %392 = vmatprep.subr.bf16.mxu0 0
  %393 = vmatpush1.bf16.msra.mxu0 %v284
  %394 = vmatprep.subr.bf16.mxu0 0
  %395 = vmatpush1.bf16.msra.mxu0 %v285
  %396 = vmatprep.subr.bf16.mxu0 0
  %397 = vmatpush1.bf16.msra.mxu0 %v286
  %398 = vmatprep.subr.bf16.mxu0 0
  %399 = vmatpush1.bf16.msra.mxu0 %v287
  %400 = vmatprep.subr.bf16.mxu0 0
  %401 = vmatpush1.bf16.msra.mxu0 %v288
  %402 = vmatprep.subr.bf16.mxu0 0
  %403 = vmatpush1.bf16.msra.mxu0 %v289
  %404 = vmatprep.subr.bf16.mxu0 0
  %405 = vmatpush1.bf16.msra.mxu0 %v290
  %406 = vmatprep.subr.bf16.mxu0 0
  %407 = vmatpush1.bf16.msra.mxu0 %v291
  %408 = vmatprep.mubr.bf16.mxu0 %v110
  %409 = vmatmul.mubr.bf16.gmra.mrb[0].mxu0 %v109
  %v410 = vpop.f32.mrb[0].mxu0
  %v411 = vadd.f32 %v371, %v410
  %v412 = vpop.f32.mrb[0].mxu0
  %v413 = vpop.f32.mrb[0].mxu0
  %v414 = vpop.f32.mrb[0].mxu0
  %415 = vdwg.mxu0
  %416 = vmatprep.subr.bf16.mxu0 0
  %417 = vmatpush1.bf16.msra.mxu0 %v292
  %418 = vmatprep.subr.bf16.mxu0 0
  %419 = vmatpush1.bf16.msra.mxu0 %v293
  %420 = vmatprep.subr.bf16.mxu0 0
  %421 = vmatpush1.bf16.msra.mxu0 %v294
  %422 = vmatprep.subr.bf16.mxu0 0
  %423 = vmatpush1.bf16.msra.mxu0 %v295
  %424 = vmatprep.subr.bf16.mxu0 0
  %425 = vmatpush1.bf16.msra.mxu0 0
  %426 = vmatprep.subr.bf16.mxu0 0
  %427 = vmatpush1.bf16.msra.mxu0 0
  %428 = vmatprep.subr.bf16.mxu0 0
  %429 = vmatpush1.bf16.msra.mxu0 0
  %430 = vmatprep.subr.bf16.mxu0 0
  %431 = vmatpush1.bf16.msra.mxu0 0
  %432 = vmatprep.subr.bf16.mxu0 0
  %433 = vmatpush1.bf16.msra.mxu0 0
  %434 = vmatprep.subr.bf16.mxu0 0
  %435 = vmatpush1.bf16.msra.mxu0 0
  %436 = vmatprep.subr.bf16.mxu0 0
  %437 = vmatpush1.bf16.msra.mxu0 0
  %438 = vmatprep.subr.bf16.mxu0 0
  %439 = vmatpush1.bf16.msra.mxu0 0
  %440 = vmatprep.subr.bf16.mxu0 0
  %441 = vmatpush1.bf16.msra.mxu0 0
  %442 = vmatprep.subr.bf16.mxu0 0
  %443 = vmatpush1.bf16.msra.mxu0 0
  %444 = vmatprep.subr.bf16.mxu0 0
  %445 = vmatpush1.bf16.msra.mxu0 0
  %446 = vmatprep.subr.bf16.mxu0 0
  %447 = vmatpush1.bf16.msra.mxu0 0
  %448 = vmatprep.mubr.bf16.mxu0 0
  %449 = vmatmul.mubr.bf16.gmra.mrb[0].mxu0 %v334
  %v450 = vpop.f32.mrb[0].mxu0
  %v451 = vadd.f32 %v411, %v450
  %v452 = vpop.f32.mrb[0].mxu0
  %v453 = vpop.f32.mrb[0].mxu0
  %v454 = vpop.f32.mrb[0].mxu0
  %455 = vdwg.mxu0
  %v456 = vmax.f32 %v451, 0.0
  %v457 = vpack.c.bf16 %v456, %v456
  %458 = vst [vmem:[%s3] sm:$0xf] %v457
  %s459 = smul.u32 0, 8
  %v460 = vlaneseq
  %v461 = vshrl.u32 %v460, 7
  %v462 = vstv %s459
  %v463 = vadd.s32 %v462, %v461
  %vm464 = vcmp.lt.s32.totalorder %v463, 8
  %v465 = vsel %vm464, %v456, 0.0
  %v466 = vrot.slane %v465, 4
  %v467 = vadd.f32 %v465, %v466
  %v468 = vrot.slane %v467, 2
  %v469 = vadd.f32 %v467, %v468
  %v470 = vrot.slane %v469, 1
  %v471 = vadd.f32 %v469, %v470
  %v472 = vmul.f32 %v465, %v465
  %v473 = vrot.slane %v472, 4
  %v474 = vadd.f32 %v472, %v473
  %v475 = vrot.slane %v474, 2
  %v476 = vadd.f32 %v474, %v475
  %v477 = vrot.slane %v476, 1
  %v478 = vadd.f32 %v476, %v477
  %479 = vst [vmem:[%s4] sm:$0x1] %v471
  %480 = vst [vmem:[%s4 + $0x1] sm:$0x1] %v478
  // Predicated region
  $region14: #{funie_discriminator.7} parent=0 // pred_check
    _
  $region15: #{funie_discriminator.7} parent=0 // pred_check_branch
    %482 = sbr.rel (0) target = $region17
  $region16: #{funie_discriminator.7} parent=0 // pred_region
    _
  $region17: #{funie_discriminator.7} parent=0 // pred_fallthru
    _
  // Predicated region
  $region18: #{funie_discriminator.7} parent=0 // pred_check
    _
  $region19: #{funie_discriminator.7} parent=0 // pred_check_branch
    %484 = sbr.rel (0) target = $region21
  $region20: #{funie_discriminator.7} parent=0 // pred_region
    _
  $region21: #{funie_discriminator.7} parent=0 // pred_fallthru
    _
  // Predicated region
  $region22: #{funie_discriminator.7} parent=0 // pred_check
    _
  $region23: #{funie_discriminator.7} parent=0 // pred_check_branch
    %486 = sbr.rel (0) target = $region25
  $region24: #{funie_discriminator.7} parent=0 // pred_region
    _
  $region25: #{funie_discriminator.7} parent=0 // pred_fallthru
    _
  // Predicated region
  $region26: #{funie_discriminator.7} parent=0 // pred_check
    _
  $region27: #{funie_discriminator.7} parent=0 // pred_check_branch
    %488 = sbr.rel (0) target = $region29
  $region28: #{funie_discriminator.7} parent=0 // pred_region
    _
  $region29: #{funie_discriminator.7} parent=0 // pred_fallthru
    _

// kernel: funie_discriminator.8
$region0: #{funie_discriminator.8}
  #allocation0 [shape = 'u32[]', space=smem, size = 0x4, offset = 0x4, fixed_abs, tag = 'smem constant byte address 0x4 - core index']
  #allocation1 [shape = 'u32[144,128]{1,0:T(1,128)}', space=vmem, size = 0x12000, scoped, tag = 'internal scratch']
  %s0 = inlined_call_operand.vmem [shape: bf16[8,1152], index: 0, kind: input, shape index: {}]
  %s1 = inlined_call_operand.vmem [shape: bf16[1152,256], index: 1, kind: input, shape index: {}]
  %s2 = inlined_call_operand.vmem [shape: f32[1,256], index: 2, kind: input, shape index: {}]
  %s3 = inlined_call_operand.vmem [shape: bf16[8,256], index: 3, kind: output, shape index: {0}]
  %s4 = inlined_call_operand.vmem [shape: f32[8,256], index: 4, kind: output, shape index: {1}]
  %5 = xla_tuple %s3, %s4
  %s6 = sld [smem:[#allocation0]]
  $region30: #{funie_discriminator.8} parent=0
    _
  %s8 = ssub.s32 1, %s6
  %s9 = scalar_select 0, %s8, %s6
  // Predicated region
  $region2: #{funie_discriminator.8} parent=0 // pred_check
    _
  $region3: #{funie_discriminator.8} parent=0 // pred_check_branch
    %11 = sbr.rel (0) target = $region5
  $region4: #{funie_discriminator.8} parent=0 // pred_region
    _
  $region5: #{funie_discriminator.8} parent=0 // pred_fallthru
    _
  // Predicated region
  $region6: #{funie_discriminator.8} parent=0 // pred_check
    _
  $region7: #{funie_discriminator.8} parent=0 // pred_check_branch
    %13 = sbr.rel (0) target = $region9
  $region8: #{funie_discriminator.8} parent=0 // pred_region
    _
  $region9: #{funie_discriminator.8} parent=0 // pred_fallthru
    _
  // Predicated region
  $region10: #{funie_discriminator.8} parent=0 // pred_check
    _
  $region11: #{funie_discriminator.8} parent=0 // pred_check_branch
    %15 = sbr.rel (0) target = $region13
  $region12: #{funie_discriminator.8} parent=0 // pred_region
    _
  $region13: #{funie_discriminator.8} parent=0 // pred_fallthru
    _
  %v17 = vld [vmem:[%s0] sm:$0xff]
  %v18 = vld [vmem:[%s0 + $0x8] sm:$0xff]
  %v19 = vld [vmem:[%s0 + $0x10] sm:$0xff]
  %v20 = vld [vmem:[%s0 + $0x18] sm:$0xff]
  %v21 = vld [vmem:[%s0 + $0x20] sm:$0xf]
  %v22 = vld [vmem:[%s1] sm:$0xff]
  %v23 = vld [vmem:[%s1 + $0x8] sm:$0xff]
  %v24 = vld [vmem:[%s1 + $0x10] sm:$0xff]
  %v25 = vld [vmem:[%s1 + $0x18] sm:$0xff]
  %v26 = vld [vmem:[%s1 + $0x20] sm:$0xff]
  %v27 = vld [vmem:[%s1 + $0x28] sm:$0xff]
  %v28 = vld [vmem:[%s1 + $0x30] sm:$0xff]
  %v29 = vld [vmem:[%s1 + $0x38] sm:$0xff]
  %v30 = vld [vmem:[%s1 + $0x40] sm:$0xff]
  %v31 = vld [vmem:[%s1 + $0x48] sm:$0xff]
  %v32 = vld [vmem:[%s1 + $0x50] sm:$0xff]
  %v33 = vld [vmem:[%s1 + $0x58] sm:$0xff]
  %v34 = vld [vmem:[%s1 + $0x60] sm:$0xff]
  %v35 = vld [vmem:[%s1 + $0x68] sm:$0xff]
  %v36 = vld [vmem:[%s1 + $0x70] sm:$0xff]
  %v37 = vld [vmem:[%s1 + $0x78] sm:$0xff]
  %v38 = vld [vmem:[%s1 + $0x80] sm:$0xff]
  %v39 = vld [vmem:[%s1 + $0x88] sm:$0xff]
  %v40 = vld [vmem:[%s1 + $0x90] sm:$0xff]
  %v41 = vld [vmem:[%s1 + $0x98] sm:$0xff]
  %v42 = vld [vmem:[%s1 + $0xa0] sm:$0xff]
  %v43 = vld [vmem:[%s1 + $0xa8] sm:$0xff]
  %v44 = vld [vmem:[%s1 + $0xb0] sm:$0xff]
  %v45 = vld [vmem:[%s1 + $0xb8] sm:$0xff]
  %v46 = vld [vmem:[%s1 + $0xc0] sm:$0xff]
  %v47 = vld [vmem:[%s1 + $0xc8] sm:$0xff]
  %v48 = vld [vmem:[%s1 + $0xd0] sm:$0xff]
  %v49 = vld [vmem:[%s1 + $0xd8] sm:$0xff]
  %v50 = vld [vmem:[%s1 + $0xe0] sm:$0xff]
  %v51 = vld [vmem:[%s1 + $0xe8] sm:$0xff]
  %v52 = vld [vmem:[%s1 + $0xf0] sm:$0xff]
  %v53 = vld [vmem:[%s1 + $0xf8] sm:$0xff]
  %v54 = vld [vmem:[%s1 + $0x100] sm:$0xff]
  %v55 = vld [vmem:[%s1 + $0x108] sm:$0xff]
  %v56 = vld [vmem:[%s1 + $0x110] sm:$0xff]
  %v57 = vld [vmem:[%s1 + $0x118] sm:$0xff]
  %v58 = vld [vmem:[%s1 + $0x120] sm:$0xff]
  %v59 = vld [vmem:[%s1 + $0x128] sm:$0xff]
  %v60 = vld [vmem:[%s1 + $0x130] sm:$0xff]
  %v61 = vld [vmem:[%s1 + $0x138] sm:$0xff]
  %v62 = vld [vmem:[%s1 + $0x140] sm:$0xff]
  %v63 = vld [vmem:[%s1 + $0x148] sm:$0xff]
  %v64 = vld [vmem:[%s1 + $0x150] sm:$0xff]
  %v65 = vld [vmem:[%s1 + $0x158] sm:$0xff]
  %v66 = vld [vmem:[%s1 + $0x160] sm:$0xff]
  %v67 = vld [vmem:[%s1 + $0x168] sm:$0xff]
  %v68 = vld [vmem:[%s1 + $0x170] sm:$0xff]
  %v69 = vld [vmem:[%s1 + $0x178] sm:$0xff]
  %v70 = vld [vmem:[%s1 + $0x180] sm:$0xff]
  %v71 = vld [vmem:[%s1 + $0x188] sm:$0xff]
  %v72 = vld [vmem:[%s1 + $0x190] sm:$0xff]
  %v73 = vld [vmem:[%s1 + $0x198] sm:$0xff]
  %v74 = vld [vmem:[%s1 + $0x1a0] sm:$0xff]
  %v75 = vld [vmem:[%s1 + $0x1a8] sm:$0xff]
  %v76 = vld [vmem:[%s1 + $0x1b0] sm:$0xff]
  %v77 = vld [vmem:[%s1 + $0x1b8] sm:$0xff]
  %v78 = vld [vmem:[%s1 + $0x1c0] sm:$0xff]
  %v79 = vld [vmem:[%s1 + $0x1c8] sm:$0xff]
  %v80 = vld [vmem:[%s1 + $0x1d0] sm:$0xff]
  %v81 = vld [vmem:[%s1 + $0x1d8] sm:$0xff]
  %v82 = vld [vmem:[%s1 + $0x1e0] sm:$0xff]
  %v83 = vld [vmem:[%s1 + $0x1e8] sm:$0xff]
  %v84 = vld [vmem:[%s1 + $0x1f0] sm:$0xff]
  %v85 = vld [vmem:[%s1 + $0x1f8] sm:$0xff]
  %v86 = vld [vmem:[%s1 + $0x200] sm:$0xff]
  %v87 = vld [vmem:[%s1 + $0x208] sm:$0xff]
  %v88 = vld [vmem:[%s1 + $0x210] sm:$0xff]
  %v89 = vld [vmem:[%s1 + $0x218] sm:$0xff]
  %v90 = vld [vmem:[%s1 + $0x220] sm:$0xff]
  %v91 = vld [vmem:[%s1 + $0x228] sm:$0xff]
  %v92 = vld [vmem:[%s1 + $0x230] sm:$0xff]
  %v93 = vld [vmem:[%s1 + $0x238] sm:$0xff]
  %v94 = vld [vmem:[%s1 + $0x240] sm:$0xff]
  %v95 = vld [vmem:[%s1 + $0x248] sm:$0xff]
  %v96 = vld [vmem:[%s1 + $0x250] sm:$0xff]
  %v97 = vld [vmem:[%s1 + $0x258] sm:$0xff]
  %v98 = vld [vmem:[%s1 + $0x260] sm:$0xff]
  %v99 = vld [vmem:[%s1 + $0x268] sm:$0xff]
  %v100 = vld [vmem:[%s1 + $0x270] sm:$0xff]
  %v101 = vld [vmem:[%s1 + $0x278] sm:$0xff]
  %v102 = vld [vmem:[%s1 + $0x280] sm:$0xff]
  %v103 = vld [vmem:[%s1 + $0x288] sm:$0xff]
  %v104 = vld [vmem:[%s1 + $0x290] sm:$0xff]
  %v105 = vld [vmem:[%s1 + $0x298] sm:$0xff]
  %v106 = vld [vmem:[%s1 + $0x2a0] sm:$0xff]
  %v107 = vld [vmem:[%s1 + $0x2a8] sm:$0xff]
  %v108 = vld [vmem:[%s1 + $0x2b0] sm:$0xff]
  %v109 = vld [vmem:[%s1 + $0x2b8] sm:$0xff]
  %v110 = vld [vmem:[%s1 + $0x2c0] sm:$0xff]
  %v111 = vld [vmem:[%s1 + $0x2c8] sm:$0xff]
  %v112 = vld [vmem:[%s1 + $0x2d0] sm:$0xff]
  %v113 = vld [vmem:[%s1 + $0x2d8] sm:$0xff]
  %v114 = vld [vmem:[%s1 + $0x2e0] sm:$0xff]
  %v115 = vld [vmem:[%s1 + $0x2e8] sm:$0xff]
  %v116 = vld [vmem:[%s1 + $0x2f0] sm:$0xff]
  %v117 = vld [vmem:[%s1 + $0x2f8] sm:$0xff]
  %v118 = vld [vmem:[%s1 + $0x300] sm:$0xff]
  %v119 = vld [vmem:[%s1 + $0x308] sm:$0xff]
  %v120 = vld [vmem:[%s1 + $0x310] sm:$0xff]
  %v121 = vld [vmem:[%s1 + $0x318] sm:$0xff]
  %v122 = vld [vmem:[%s1 + $0x320] sm:$0xff]
  %v123 = vld [vmem:[%s1 + $0x328] sm:$0xff]
  %v124 = vld [vmem:[%s1 + $0x330] sm:$0xff]
  %v125 = vld [vmem:[%s1 + $0x338] sm:$0xff]
  %v126 = vld [vmem:[%s1 + $0x340] sm:$0xff]
  %v127 = vld [vmem:[%s1 + $0x348] sm:$0xff]
  %v128 = vld [vmem:[%s1 + $0x350] sm:$0xff]
  %v129 = vld [vmem:[%s1 + $0x358] sm:$0xff]
  %v130 = vld [vmem:[%s1 + $0x360] sm:$0xff]
  %v131 = vld [vmem:[%s1 + $0x368] sm:$0xff]
  %v132 = vld [vmem:[%s1 + $0x370] sm:$0xff]
  %v133 = vld [vmem:[%s1 + $0x378] sm:$0xff]
  %v134 = vld [vmem:[%s1 + $0x380] sm:$0xff]
  %v135 = vld [vmem:[%s1 + $0x388] sm:$0xff]
  %v136 = vld [vmem:[%s1 + $0x390] sm:$0xff]
  %v137 = vld [vmem:[%s1 + $0x398] sm:$0xff]
  %v138 = vld [vmem:[%s1 + $0x3a0] sm:$0xff]
  %v139 = vld [vmem:[%s1 + $0x3a8] sm:$0xff]
  %v140 = vld [vmem:[%s1 + $0x3b0] sm:$0xff]
  %v141 = vld [vmem:[%s1 + $0x3b8] sm:$0xff]
  %v142 = vld [vmem:[%s1 + $0x3c0] sm:$0xff]
  %v143 = vld [vmem:[%s1 + $0x3c8] sm:$0xff]
  %v144 = vld [vmem:[%s1 + $0x3d0] sm:$0xff]
  %v145 = vld [vmem:[%s1 + $0x3d8] sm:$0xff]
  %v146 = vld [vmem:[%s1 + $0x3e0] sm:$0xff]
  %v147 = vld [vmem:[%s1 + $0x3e8] sm:$0xff]
  %v148 = vld [vmem:[%s1 + $0x3f0] sm:$0xff]
  %v149 = vld [vmem:[%s1 + $0x3f8] sm:$0xff]
  %v150 = vld [vmem:[%s1 + $0x400] sm:$0xff]
  %v151 = vld [vmem:[%s1 + $0x408] sm:$0xff]
  %v152 = vld [vmem:[%s1 + $0x410] sm:$0xff]
  %v153 = vld [vmem:[%s1 + $0x418] sm:$0xff]
  %v154 = vld [vmem:[%s1 + $0x420] sm:$0xff]
  %v155 = vld [vmem:[%s1 + $0x428] sm:$0xff]
  %v156 = vld [vmem:[%s1 + $0x430] sm:$0xff]
  %v157 = vld [vmem:[%s1 + $0x438] sm:$0xff]
  %v158 = vld [vmem:[%s1 + $0x440] sm:$0xff]
  %v159 = vld [vmem:[%s1 + $0x448] sm:$0xff]
  %v160 = vld [vmem:[%s1 + $0x450] sm:$0xff]
  %v161 = vld [vmem:[%s1 + $0x458] sm:$0xff]
  %v162 = vld [vmem:[%s1 + $0x460] sm:$0xff]
  %v163 = vld [vmem:[%s1 + $0x468] sm:$0xff]
  %v164 = vld [vmem:[%s1 + $0x470] sm:$0xff]
  %v165 = vld [vmem:[%s1 + $0x478] sm:$0xff]
  %v166 = vld [vmem:[%s2] sm:$0x3]
  %v168 = vlaneseq
  %v169 = vshrl.u32 %v168, 7
  %v170 = vsub.s32 0, %v169
  %v171 = vrot.slane %v166, %v170
  %v172 = vlaneseq
  %v173 = vshrl.u32 %v172, 7
  %v174 = vsub.s32 1, %v173
  %v175 = vrot.slane %v166, %v174
  %v183 = vunpack.c.l.b16 %v17
  %v184 = vunpack.c.h.b16 %v17
  %v185 = vunpack.c.l.b16 %v18
  %v186 = vunpack.c.h.b16 %v18
  %v187 = vunpack.c.l.b16 %v19
  %v188 = vunpack.c.h.b16 %v19
  %v189 = vunpack.c.l.b16 %v20
  %v190 = vunpack.c.h.b16 %v20
  %v191 = vunpack.c.l.b16 %v21
  %v192 = vpack.c.b16 %v183, %v183
  %v193 = vpack.c.b16 %v184, %v184
  %v194 = vpack.c.b16 %v185, %v185
  %v195 = vpack.c.b16 %v186, %v186
  %v196 = vpack.c.b16 %v187, %v187
  %v197 = vpack.c.b16 %v188, %v188
  %v198 = vpack.c.b16 %v189, %v189
  %v199 = vpack.c.b16 %v190, %v190
  %v200 = vpack.c.b16 %v191, %v191
  %v354 = vunpack.c.l.b16 %v22
  %v355 = vunpack.c.h.b16 %v22
  %v356 = vunpack.c.l.b16 %v23
  %v357 = vunpack.c.h.b16 %v23
  %v358 = vunpack.c.l.b16 %v24
  %v359 = vunpack.c.h.b16 %v24
  %v360 = vunpack.c.l.b16 %v25
  %v361 = vunpack.c.h.b16 %v25
  %v362 = vunpack.c.l.b16 %v26
  %v363 = vunpack.c.h.b16 %v26
  %v364 = vunpack.c.l.b16 %v27
  %v365 = vunpack.c.h.b16 %v27
  %v366 = vunpack.c.l.b16 %v28
  %v367 = vunpack.c.h.b16 %v28
  %v368 = vunpack.c.l.b16 %v29
  %v369 = vunpack.c.h.b16 %v29
  %v370 = vunpack.c.l.b16 %v30
  %v371 = vunpack.c.h.b16 %v30
  %v372 = vunpack.c.l.b16 %v31
  %v373 = vunpack.c.h.b16 %v31
  %v374 = vunpack.c.l.b16 %v32
  %v375 = vunpack.c.h.b16 %v32
  %v376 = vunpack.c.l.b16 %v33
  %v377 = vunpack.c.h.b16 %v33
  %v378 = vunpack.c.l.b16 %v34
  %v379 = vunpack.c.h.b16 %v34
  %v380 = vunpack.c.l.b16 %v35
  %v381 = vunpack.c.h.b16 %v35
  %v382 = vunpack.c.l.b16 %v36
  %v383 = vunpack.c.h.b16 %v36
  %v384 = vunpack.c.l.b16 %v37
  %v385 = vunpack.c.h.b16 %v37
  %v386 = vunpack.c.l.b16 %v38
  %v387 = vunpack.c.h.b16 %v38
  %v388 = vunpack.c.l.b16 %v39
  %v389 = vunpack.c.h.b16 %v39
  %v390 = vunpack.c.l.b16 %v40
  %v391 = vunpack.c.h.b16 %v40
  %v392 = vunpack.c.l.b16 %v41
  %v393 = vunpack.c.h.b16 %v41
  %v394 = vunpack.c.l.b16 %v42
  %v395 = vunpack.c.h.b16 %v42
  %v396 = vunpack.c.l.b16 %v43
  %v397 = vunpack.c.h.b16 %v43
  %v398 = vunpack.c.l.b16 %v44
  %v399 = vunpack.c.h.b16 %v44
  %v400 = vunpack.c.l.b16 %v45
  %v401 = vunpack.c.h.b16 %v45
  %v402 = vunpack.c.l.b16 %v46
  %v403 = vunpack.c.h.b16 %v46
  %v404 = vunpack.c.l.b16 %v47
  %v405 = vunpack.c.h.b16 %v47
  %v406 = vunpack.c.l.b16 %v48
  %v407 = vunpack.c.h.b16 %v48
  %v408 = vunpack.c.l.b16 %v49
  %v409 = vunpack.c.h.b16 %v49
  %v410 = vunpack.c.l.b16 %v50
  %v411 = vunpack.c.h.b16 %v50
  %v412 = vunpack.c.l.b16 %v51
  %v413 = vunpack.c.h.b16 %v51
  %v414 = vunpack.c.l.b16 %v52
  %v415 = vunpack.c.h.b16 %v52
  %v416 = vunpack.c.l.b16 %v53
  %v417 = vunpack.c.h.b16 %v53
  %v418 = vunpack.c.l.b16 %v54
  %v419 = vunpack.c.h.b16 %v54
  %v420 = vunpack.c.l.b16 %v55
  %v421 = vunpack.c.h.b16 %v55
  %v422 = vunpack.c.l.b16 %v56
  %v423 = vunpack.c.h.b16 %v56
  %v424 = vunpack.c.l.b16 %v57
  %v425 = vunpack.c.h.b16 %v57
  %v426 = vunpack.c.l.b16 %v58
  %v427 = vunpack.c.h.b16 %v58
  %v428 = vunpack.c.l.b16 %v59
  %v429 = vunpack.c.h.b16 %v59
  %v430 = vunpack.c.l.b16 %v60
  %v431 = vunpack.c.h.b16 %v60
  %v432 = vunpack.c.l.b16 %v61
  %v433 = vunpack.c.h.b16 %v61
  %v434 = vunpack.c.l.b16 %v62
  %v435 = vunpack.c.h.b16 %v62
  %v436 = vunpack.c.l.b16 %v63
  %v437 = vunpack.c.h.b16 %v63
  %v438 = vunpack.c.l.b16 %v64
  %v439 = vunpack.c.h.b16 %v64
  %v440 = vunpack.c.l.b16 %v65
  %v441 = vunpack.c.h.b16 %v65
  %v442 = vunpack.c.l.b16 %v66
  %v443 = vunpack.c.h.b16 %v66
  %v444 = vunpack.c.l.b16 %v67
  %v445 = vunpack.c.h.b16 %v67
  %v446 = vunpack.c.l.b16 %v68
  %v447 = vunpack.c.h.b16 %v68
  %v448 = vunpack.c.l.b16 %v69
  %v449 = vunpack.c.h.b16 %v69
  %v450 = vunpack.c.l.b16 %v70
  %v451 = vunpack.c.h.b16 %v70
  %v452 = vunpack.c.l.b16 %v71
  %v453 = vunpack.c.h.b16 %v71
  %v454 = vunpack.c.l.b16 %v72
  %v455 = vunpack.c.h.b16 %v72
  %v456 = vunpack.c.l.b16 %v73
  %v457 = vunpack.c.h.b16 %v73
  %v458 = vunpack.c.l.b16 %v74
  %v459 = vunpack.c.h.b16 %v74
  %v460 = vunpack.c.l.b16 %v75
  %v461 = vunpack.c.h.b16 %v75
  %v462 = vunpack.c.l.b16 %v76
  %v463 = vunpack.c.h.b16 %v76
  %v464 = vunpack.c.l.b16 %v77
  %v465 = vunpack.c.h.b16 %v77
  %v466 = vunpack.c.l.b16 %v78
  %v467 = vunpack.c.h.b16 %v78
  %v468 = vunpack.c.l.b16 %v79
  %v469 = vunpack.c.h.b16 %v79
  %v470 = vunpack.c.l.b16 %v80
  %v471 = vunpack.c.h.b16 %v80
  %v472 = vunpack.c.l.b16 %v81
  %v473 = vunpack.c.h.b16 %v81
  %v474 = vunpack.c.l.b16 %v82
  %v475 = vunpack.c.h.b16 %v82
  %v476 = vunpack.c.l.b16 %v83
  %v477 = vunpack.c.h.b16 %v83
  %v478 = vunpack.c.l.b16 %v84
  %v479 = vunpack.c.h.b16 %v84
  %v480 = vunpack.c.l.b16 %v85
  %v481 = vunpack.c.h.b16 %v85
  %v482 = vunpack.c.l.b16 %v86
  %v483 = vunpack.c.h.b16 %v86
  %v484 = vunpack.c.l.b16 %v87
  %v485 = vunpack.c.h.b16 %v87
  %v486 = vunpack.c.l.b16 %v88
  %v487 = vunpack.c.h.b16 %v88
  %v488 = vunpack.c.l.b16 %v89
  %v489 = vunpack.c.h.b16 %v89
  %v490 = vunpack.c.l.b16 %v90
  %v491 = vunpack.c.h.b16 %v90
  %v492 = vunpack.c.l.b16 %v91
  %v493 = vunpack.c.h.b16 %v91
  %v494 = vunpack.c.l.b16 %v92
  %v495 = vunpack.c.h.b16 %v92
  %v496 = vunpack.c.l.b16 %v93
  %v497 = vunpack.c.h.b16 %v93
  %v498 = vunpack.c.l.b16 %v94
  %v499 = vunpack.c.h.b16 %v94
  %v500 = vunpack.c.l.b16 %v95
  %v501 = vunpack.c.h.b16 %v95
  %v502 = vunpack.c.l.b16 %v96
  %v503 = vunpack.c.h.b16 %v96
  %v504 = vunpack.c.l.b16 %v97
  %v505 = vunpack.c.h.b16 %v97
  %v506 = vunpack.c.l.b16 %v98
  %v507 = vunpack.c.h.b16 %v98
  %v508 = vunpack.c.l.b16 %v99
  %v509 = vunpack.c.h.b16 %v99
  %v510 = vunpack.c.l.b16 %v100
  %v511 = vunpack.c.h.b16 %v100
  %v512 = vunpack.c.l.b16 %v101
  %v513 = vunpack.c.h.b16 %v101
  %v514 = vunpack.c.l.b16 %v102
  %v515 = vunpack.c.h.b16 %v102
  %v516 = vunpack.c.l.b16 %v103
  %v517 = vunpack.c.h.b16 %v103
  %v518 = vunpack.c.l.b16 %v104
  %v519 = vunpack.c.h.b16 %v104
  %v520 = vunpack.c.l.b16 %v105
  %v521 = vunpack.c.h.b16 %v105
  %v522 = vunpack.c.l.b16 %v106
  %v523 = vunpack.c.h.b16 %v106
  %v524 = vunpack.c.l.b16 %v107
  %v525 = vunpack.c.h.b16 %v107
  %v526 = vunpack.c.l.b16 %v108
  %v527 = vunpack.c.h.b16 %v108
  %v528 = vunpack.c.l.b16 %v109
  %v529 = vunpack.c.h.b16 %v109
  %v530 = vunpack.c.l.b16 %v110
  %v531 = vunpack.c.h.b16 %v110
  %v532 = vunpack.c.l.b16 %v111
  %v533 = vunpack.c.h.b16 %v111
  %v534 = vunpack.c.l.b16 %v112
  %v535 = vunpack.c.h.b16 %v112
  %v536 = vunpack.c.l.b16 %v113
  %v537 = vunpack.c.h.b16 %v113
  %v538 = vunpack.c.l.b16 %v114
  %v539 = vunpack.c.h.b16 %v114
  %v540 = vunpack.c.l.b16 %v115
  %v541 = vunpack.c.h.b16 %v115
  %v542 = vunpack.c.l.b16 %v116
  %v543 = vunpack.c.h.b16 %v116
  %v544 = vunpack.c.l.b16 %v117
  %v545 = vunpack.c.h.b16 %v117
  %v546 = vunpack.c.l.b16 %v118
  %v547 = vunpack.c.h.b16 %v118
  %v548 = vunpack.c.l.b16 %v119
  %v549 = vunpack.c.h.b16 %v119
  %v550 = vunpack.c.l.b16 %v120
  %v551 = vunpack.c.h.b16 %v120
  %v552 = vunpack.c.l.b16 %v121
  %v553 = vunpack.c.h.b16 %v121
  %v554 = vunpack.c.l.b16 %v122
  %v555 = vunpack.c.h.b16 %v122
  %v556 = vunpack.c.l.b16 %v123
  %v557 = vunpack.c.h.b16 %v123
  %v558 = vunpack.c.l.b16 %v124
  %v559 = vunpack.c.h.b16 %v124
  %v560 = vunpack.c.l.b16 %v125
  %v561 = vunpack.c.h.b16 %v125
  %v562 = vunpack.c.l.b16 %v126
  %v563 = vunpack.c.h.b16 %v126
  %v564 = vunpack.c.l.b16 %v127
  %v565 = vunpack.c.h.b16 %v127
  %v566 = vunpack.c.l.b16 %v128
  %v567 = vunpack.c.h.b16 %v128
  %v568 = vunpack.c.l.b16 %v129
  %v569 = vunpack.c.h.b16 %v129
  %v570 = vunpack.c.l.b16 %v130
  %v571 = vunpack.c.h.b16 %v130
  %v572 = vunpack.c.l.b16 %v131
  %v573 = vunpack.c.h.b16 %v131
  %v574 = vunpack.c.l.b16 %v132
  %v575 = vunpack.c.h.b16 %v132
  %v576 = vunpack.c.l.b16 %v133
  %v577 = vunpack.c.h.b16 %v133
  %v578 = vunpack.c.l.b16 %v134
  %v579 = vunpack.c.h.b16 %v134
  %v580 = vunpack.c.l.b16 %v135
  %v581 = vunpack.c.h.b16 %v135
  %v582 = vunpack.c.l.b16 %v136
  %v583 = vunpack.c.h.b16 %v136
  %v584 = vunpack.c.l.b16 %v137
  %v585 = vunpack.c.h.b16 %v137
  %v586 = vunpack.c.l.b16 %v138
  %v587 = vunpack.c.h.b16 %v138
  %v588 = vunpack.c.l.b16 %v139
  %v589 = vunpack.c.h.b16 %v139
  %v590 = vunpack.c.l.b16 %v140
  %v591 = vunpack.c.h.b16 %v140
  %v592 = vunpack.c.l.b16 %v141
  %v593 = vunpack.c.h.b16 %v141
  %v594 = vunpack.c.l.b16 %v142
  %v595 = vunpack.c.h.b16 %v142
  %v596 = vunpack.c.l.b16 %v143
  %v597 = vunpack.c.h.b16 %v143
  %v598 = vunpack.c.l.b16 %v144
  %v599 = vunpack.c.h.b16 %v144
  %v600 = vunpack.c.l.b16 %v145
  %v601 = vunpack.c.h.b16 %v145
  %v602 = vunpack.c.l.b16 %v146
  %v603 = vunpack.c.h.b16 %v146
  %v604 = vunpack.c.l.b16 %v147
  %v605 = vunpack.c.h.b16 %v147
  %v606 = vunpack.c.l.b16 %v148
  %v607 = vunpack.c.h.b16 %v148
  %v608 = vunpack.c.l.b16 %v149
  %v609 = vunpack.c.h.b16 %v149
  %v610 = vunpack.c.l.b16 %v150
  %v611 = vunpack.c.h.b16 %v150
  %v612 = vunpack.c.l.b16 %v151
  %v613 = vunpack.c.h.b16 %v151
  %v614 = vunpack.c.l.b16 %v152
  %v615 = vunpack.c.h.b16 %v152
  %v616 = vunpack.c.l.b16 %v153
  %v617 = vunpack.c.h.b16 %v153
  %v618 = vunpack.c.l.b16 %v154
  %v619 = vunpack.c.h.b16 %v154
  %v620 = vunpack.c.l.b16 %v155
  %v621 = vunpack.c.h.b16 %v155
  %v622 = vunpack.c.l.b16 %v156
  %v623 = vunpack.c.h.b16 %v156
  %v624 = vunpack.c.l.b16 %v157
  %v625 = vunpack.c.h.b16 %v157
  %v626 = vunpack.c.l.b16 %v158
  %v627 = vunpack.c.h.b16 %v158
  %v628 = vunpack.c.l.b16 %v159
  %v629 = vunpack.c.h.b16 %v159
  %v630 = vunpack.c.l.b16 %v160
  %v631 = vunpack.c.h.b16 %v160
  %v632 = vunpack.c.l.b16 %v161
  %v633 = vunpack.c.h.b16 %v161
  %v634 = vunpack.c.l.b16 %v162
  %v635 = vunpack.c.h.b16 %v162
  %v636 = vunpack.c.l.b16 %v163
  %v637 = vunpack.c.h.b16 %v163
  %v638 = vunpack.c.l.b16 %v164
  %v639 = vunpack.c.h.b16 %v164
  %v640 = vunpack.c.l.b16 %v165
  %v641 = vunpack.c.h.b16 %v165
  %v642 = vpack.c.b16 %v356, %v354
  %v643 = vpack.c.b16 %v357, %v355
  %v644 = vpack.c.b16 %v360, %v358
  %v645 = vpack.c.b16 %v361, %v359
  %v646 = vpack.c.b16 %v364, %v362
  %v647 = vpack.c.b16 %v365, %v363
  %v648 = vpack.c.b16 %v368, %v366
  %v649 = vpack.c.b16 %v369, %v367
  %v650 = vpack.c.b16 %v372, %v370
  %v651 = vpack.c.b16 %v373, %v371
  %v652 = vpack.c.b16 %v376, %v374
  %v653 = vpack.c.b16 %v377, %v375
  %v654 = vpack.c.b16 %v380, %v378
  %v655 = vpack.c.b16 %v381, %v379
  %v656 = vpack.c.b16 %v384, %v382
  %v657 = vpack.c.b16 %v385, %v383
  %v658 = vpack.c.b16 %v388, %v386
  %v659 = vpack.c.b16 %v389, %v387
  %v660 = vpack.c.b16 %v392, %v390
  %v661 = vpack.c.b16 %v393, %v391
  %v662 = vpack.c.b16 %v396, %v394
  %v663 = vpack.c.b16 %v397, %v395
  %v664 = vpack.c.b16 %v400, %v398
  %v665 = vpack.c.b16 %v401, %v399
  %v666 = vpack.c.b16 %v404, %v402
  %v667 = vpack.c.b16 %v405, %v403
  %v668 = vpack.c.b16 %v408, %v406
  %v669 = vpack.c.b16 %v409, %v407
  %v670 = vpack.c.b16 %v412, %v410
  %v671 = vpack.c.b16 %v413, %v411
  %v672 = vpack.c.b16 %v416, %v414
  %v673 = vpack.c.b16 %v417, %v415
  %v674 = vpack.c.b16 %v420, %v418
  %v675 = vpack.c.b16 %v421, %v419
  %v676 = vpack.c.b16 %v424, %v422
  %v677 = vpack.c.b16 %v425, %v423
  %v678 = vpack.c.b16 %v428, %v426
  %v679 = vpack.c.b16 %v429, %v427
  %v680 = vpack.c.b16 %v432, %v430
  %v681 = vpack.c.b16 %v433, %v431
  %v682 = vpack.c.b16 %v436, %v434
  %v683 = vpack.c.b16 %v437, %v435
  %v684 = vpack.c.b16 %v440, %v438
  %v685 = vpack.c.b16 %v441, %v439
  %v686 = vpack.c.b16 %v444, %v442
  %v687 = vpack.c.b16 %v445, %v443
  %v688 = vpack.c.b16 %v448, %v446
  %v689 = vpack.c.b16 %v449, %v447
  %v690 = vpack.c.b16 %v452, %v450
  %v691 = vpack.c.b16 %v453, %v451
  %v692 = vpack.c.b16 %v456, %v454
  %v693 = vpack.c.b16 %v457, %v455
  %v694 = vpack.c.b16 %v460, %v458
  %v695 = vpack.c.b16 %v461, %v459
  %v696 = vpack.c.b16 %v464, %v462
  %v697 = vpack.c.b16 %v465, %v463
  %v698 = vpack.c.b16 %v468, %v466
  %v699 = vpack.c.b16 %v469, %v467
  %v700 = vpack.c.b16 %v472, %v470
  %v701 = vpack.c.b16 %v473, %v471
  %v702 = vpack.c.b16 %v476, %v474
  %v703 = vpack.c.b16 %v477, %v475
  %v704 = vpack.c.b16 %v480, %v478
  %v705 = vpack.c.b16 %v481, %v479
  %v706 = vpack.c.b16 %v484, %v482
  %v707 = vpack.c.b16 %v485, %v483
  %v708 = vpack.c.b16 %v488, %v486
  %v709 = vpack.c.b16 %v489, %v487
  %v710 = vpack.c.b16 %v492, %v490
  %v711 = vpack.c.b16 %v493, %v491
  %v712 = vpack.c.b16 %v496, %v494
  %v713 = vpack.c.b16 %v497, %v495
  %v714 = vpack.c.b16 %v500, %v498
  %v715 = vpack.c.b16 %v501, %v499
  %v716 = vpack.c.b16 %v504, %v502
  %v717 = vpack.c.b16 %v505, %v503
  %v718 = vpack.c.b16 %v508, %v506
  %v719 = vpack.c.b16 %v509, %v507
  %v720 = vpack.c.b16 %v512, %v510
  %v721 = vpack.c.b16 %v513, %v511
  %v722 = vpack.c.b16 %v516, %v514
  %v723 = vpack.c.b16 %v517, %v515
  %v724 = vpack.c.b16 %v520, %v518
  %v725 = vpack.c.b16 %v521, %v519
  %v726 = vpack.c.b16 %v524, %v522
  %v727 = vpack.c.b16 %v525, %v523
  %v728 = vpack.c.b16 %v528, %v526
  %v729 = vpack.c.b16 %v529, %v527
  %v730 = vpack.c.b16 %v532, %v530
  %v731 = vpack.c.b16 %v533, %v531
  %v732 = vpack.c.b16 %v536, %v534
  %v733 = vpack.c.b16 %v537, %v535
  %v734 = vpack.c.b16 %v540, %v538
  %v735 = vpack.c.b16 %v541, %v539
  %v736 = vpack.c.b16 %v544, %v542
  %v737 = vpack.c.b16 %v545, %v543
  %v738 = vpack.c.b16 %v548, %v546
  %v739 = vpack.c.b16 %v549, %v547
  %v740 = vpack.c.b16 %v552, %v550
  %v741 = vpack.c.b16 %v553, %v551
  %v742 = vpack.c.b16 %v556, %v554
  %v743 = vpack.c.b16 %v557, %v555
  %v744 = vpack.c.b16 %v560, %v558
  %v745 = vpack.c.b16 %v561, %v559
  %v746 = vpack.c.b16 %v564, %v562
  %v747 = vpack.c.b16 %v565, %v563
  %v748 = vpack.c.b16 %v568, %v566
  %v749 = vpack.c.b16 %v569, %v567
  %v750 = vpack.c.b16 %v572, %v570
  %v751 = vpack.c.b16 %v573, %v571
  %v752 = vpack.c.b16 %v576, %v574
  %v753 = vpack.c.b16 %v577, %v575
  %v754 = vpack.c.b16 %v580, %v578
  %v755 = vpack.c.b16 %v581, %v579
  %v756 = vpack.c.b16 %v584, %v582
  %v757 = vpack.c.b16 %v585, %v583
  %v758 = vpack.c.b16 %v588, %v586
  %v759 = vpack.c.b16 %v589, %v587
  %v760 = vpack.c.b16 %v592, %v590
  %v761 = vpack.c.b16 %v593, %v591
  %v762 = vpack.c.b16 %v596, %v594
  %v763 = vpack.c.b16 %v597, %v595
  %v764 = vpack.c.b16 %v600, %v598
  %v765 = vpack.c.b16 %v601, %v599
  %v766 = vpack.c.b16 %v604, %v602
  %v767 = vpack.c.b16 %v605, %v603
  %v768 = vpack.c.b16 %v608, %v606
  %v769 = vpack.c.b16 %v609, %v607
  %v770 = vpack.c.b16 %v612, %v610
  %v771 = vpack.c.b16 %v613, %v611
  %v772 = vpack.c.b16 %v616, %v614
  %v773 = vpack.c.b16 %v617, %v615
  %v774 = vpack.c.b16 %v620, %v618
  %v775 = vpack.c.b16 %v621, %v619
  %v776 = vpack.c.b16 %v624, %v622
  %v777 = vpack.c.b16 %v625, %v623
  %v778 = vpack.c.b16 %v628, %v626
  %v779 = vpack.c.b16 %v629, %v627
  %v780 = vpack.c.b16 %v632, %v630
  %v781 = vpack.c.b16 %v633, %v631
  %v782 = vpack.c.b16 %v636, %v634
  %v783 = vpack.c.b16 %v637, %v635
  %v784 = vpack.c.b16 %v640, %v638
  %v785 = vpack.c.b16 %v641, %v639
  %930 = vmatprep.subr.bf16.mxu0 %v643
  %931 = vmatpush1.bf16.msra.mxu0 %v642
  %932 = vmatprep.subr.bf16.mxu0 %v645
  %933 = vmatpush1.bf16.msra.mxu0 %v644
  %934 = vmatprep.subr.bf16.mxu0 %v647
  %935 = vmatpush1.bf16.msra.mxu0 %v646
  %936 = vmatprep.subr.bf16.mxu0 %v649
  %937 = vmatpush1.bf16.msra.mxu0 %v648
  %938 = vmatprep.subr.bf16.mxu0 %v651
  %939 = vmatpush1.bf16.msra.mxu0 %v650
  %940 = vmatprep.subr.bf16.mxu0 %v653
  %941 = vmatpush1.bf16.msra.mxu0 %v652
  %942 = vmatprep.subr.bf16.mxu0 %v655
  %943 = vmatpush1.bf16.msra.mxu0 %v654
  %944 = vmatprep.subr.bf16.mxu0 %v657
  %945 = vmatpush1.bf16.msra.mxu0 %v656
  %946 = vmatprep.subr.bf16.mxu0 %v659
  %947 = vmatpush1.bf16.msra.mxu0 %v658
  %948 = vmatprep.subr.bf16.mxu0 %v661
  %949 = vmatpush1.bf16.msra.mxu0 %v660
  %950 = vmatprep.subr.bf16.mxu0 %v663
  %951 = vmatpush1.bf16.msra.mxu0 %v662
  %952 = vmatprep.subr.bf16.mxu0 %v665
  %953 = vmatpush1.bf16.msra.mxu0 %v664
  %954 = vmatprep.subr.bf16.mxu0 %v667
  %955 = vmatpush1.bf16.msra.mxu0 %v666
  %956 = vmatprep.subr.bf16.mxu0 %v669
  %957 = vmatpush1.bf16.msra.mxu0 %v668
  %958 = vmatprep.subr.bf16.mxu0 %v671
  %959 = vmatpush1.bf16.msra.mxu0 %v670
  %960 = vmatprep.subr.bf16.mxu0 %v673
  %961 = vmatpush1.bf16.msra.mxu0 %v672
  %962 = vmatprep.mubr.bf16.mxu0 %v193
  %963 = vmatmul.mubr.bf16.gmra.mrb[0].mxu0 %v192
  %v964 = vpop.f32.mrb[0].mxu0
  %v965 = vadd.f32 %v171, %v964
  %v966 = vpop.f32.mrb[0].mxu0
  %v967 = vadd.f32 %v175, %v966
  %v968 = vpop.f32.mrb[0].mxu0
  %v969 = vpop.f32.mrb[0].mxu0
  %970 = vdwg.mxu0
  %971 = vmatprep.subr.bf16.mxu0 %v675
  %972 = vmatpush1.bf16.msra.mxu0 %v674
  %973 = vmatprep.subr.bf16.mxu0 %v677
  %974 = vmatpush1.bf16.msra.mxu0 %v676
  %975 = vmatprep.subr.bf16.mxu0 %v679
  %976 = vmatpush1.bf16.msra.mxu0 %v678
  %977 = vmatprep.subr.bf16.mxu0 %v681
  %978 = vmatpush1.bf16.msra.mxu0 %v680
  %979 = vmatprep.subr.bf16.mxu0 %v683
  %980 = vmatpush1.bf16.msra.mxu0 %v682
  %981 = vmatprep.subr.bf16.mxu0 %v685
  %982 = vmatpush1.bf16.msra.mxu0 %v684
  %983 = vmatprep.subr.bf16.mxu0 %v687
  %984 = vmatpush1.bf16.msra.mxu0 %v686
  %985 = vmatprep.subr.bf16.mxu0 %v689
  %986 = vmatpush1.bf16.msra.mxu0 %v688
  %987 = vmatprep.subr.bf16.mxu0 %v691
  %988 = vmatpush1.bf16.msra.mxu0 %v690
  %989 = vmatprep.subr.bf16.mxu0 %v693
  %990 = vmatpush1.bf16.msra.mxu0 %v692
  %991 = vmatprep.subr.bf16.mxu0 %v695
  %992 = vmatpush1.bf16.msra.mxu0 %v694
  %993 = vmatprep.subr.bf16.mxu0 %v697
  %994 = vmatpush1.bf16.msra.mxu0 %v696
  %995 = vmatprep.subr.bf16.mxu0 %v699
  %996 = vmatpush1.bf16.msra.mxu0 %v698
  %997 = vmatprep.subr.bf16.mxu0 %v701
  %998 = vmatpush1.bf16.msra.mxu0 %v700
  %999 = vmatprep.subr.bf16.mxu0 %v703
  %1000 = vmatpush1.bf16.msra.mxu0 %v702
  %1001 = vmatprep.subr.bf16.mxu0 %v705
  %1002 = vmatpush1.bf16.msra.mxu0 %v704
  %1003 = vmatprep.mubr.bf16.mxu0 %v195
  %1004 = vmatmul.mubr.bf16.gmra.mrb[0].mxu0 %v194
  %v1005 = vpop.f32.mrb[0].mxu0
  %v1006 = vadd.f32 %v965, %v1005
  %v1007 = vpop.f32.mrb[0].mxu0
  %v1008 = vadd.f32 %v967, %v1007
  %v1009 = vpop.f32.mrb[0].mxu0
  %v1010 = vpop.f32.mrb[0].mxu0
  %1011 = vdwg.mxu0
  %1012 = vmatprep.subr.bf16.mxu0 %v707
  %1013 = vmatpush1.bf16.msra.mxu0 %v706
  %1014 = vmatprep.subr.bf16.mxu0 %v709
  %1015 = vmatpush1.bf16.msra.mxu0 %v708
  %1016 = vmatprep.subr.bf16.mxu0 %v711
  %1017 = vmatpush1.bf16.msra.mxu0 %v710
  %1018 = vmatprep.subr.bf16.mxu0 %v713
  %1019 = vmatpush1.bf16.msra.mxu0 %v712
  %1020 = vmatprep.subr.bf16.mxu0 %v715
  %1021 = vmatpush1.bf16.msra.mxu0 %v714
  %1022 = vmatprep.subr.bf16.mxu0 %v717
  %1023 = vmatpush1.bf16.msra.mxu0 %v716
  %1024 = vmatprep.subr.bf16.mxu0 %v719
  %1025 = vmatpush1.bf16.msra.mxu0 %v718
  %1026 = vmatprep.subr.bf16.mxu0 %v721
  %1027 = vmatpush1.bf16.msra.mxu0 %v720
  %1028 = vmatprep.subr.bf16.mxu0 %v723
  %1029 = vmatpush1.bf16.msra.mxu0 %v722
  %1030 = vmatprep.subr.bf16.mxu0 %v725
  %1031 = vmatpush1.bf16.msra.mxu0 %v724
  %1032 = vmatprep.subr.bf16.mxu0 %v727
  %1033 = vmatpush1.bf16.msra.mxu0 %v726
  %1034 = vmatprep.subr.bf16.mxu0 %v729
  %1035 = vmatpush1.bf16.msra.mxu0 %v728
  %1036 = vmatprep.subr.bf16.mxu0 %v731
  %1037 = vmatpush1.bf16.msra.mxu0 %v730
  %1038 = vmatprep.subr.bf16.mxu0 %v733
  %1039 = vmatpush1.bf16.msra.mxu0 %v732
  %1040 = vmatprep.subr.bf16.mxu0 %v735
  %1041 = vmatpush1.bf16.msra.mxu0 %v734
  %1042 = vmatprep.subr.bf16.mxu0 %v737
  %1043 = vmatpush1.bf16.msra.mxu0 %v736
  %1044 = vmatprep.mubr.bf16.mxu0 %v197
  %1045 = vmatmul.mubr.bf16.gmra.mrb[0].mxu0 %v196
  %v1046 = vpop.f32.mrb[0].mxu0
  %v1047 = vadd.f32 %v1006, %v1046
  %v1048 = vpop.f32.mrb[0].mxu0
  %v1049 = vadd.f32 %v1008, %v1048
  %v1050 = vpop.f32.mrb[0].mxu0
  %v1051 = vpop.f32.mrb[0].mxu0
  %1052 = vdwg.mxu0
  %1053 = vmatprep.subr.bf16.mxu0 %v739
  %1054 = vmatpush1.bf16.msra.mxu0 %v738
  %1055 = vmatprep.subr.bf16.mxu0 %v741
  %1056 = vmatpush1.bf16.msra.mxu0 %v740
  %1057 = vmatprep.subr.bf16.mxu0 %v743
  %1058 = vmatpush1.bf16.msra.mxu0 %v742
  %1059 = vmatprep.subr.bf16.mxu0 %v745
  %1060 = vmatpush1.bf16.msra.mxu0 %v744
  %1061 = vmatprep.subr.bf16.mxu0 %v747
  %1062 = vmatpush1.bf16.msra.mxu0 %v746
  %1063 = vmatprep.subr.bf16.mxu0 %v749
  %1064 = vmatpush1.bf16.msra.mxu0 %v748
  %1065 = vmatprep.subr.bf16.mxu0 %v751
  %1066 = vmatpush1.bf16.msra.mxu0 %v750
  %1067 = vmatprep.subr.bf16.mxu0 %v753
  %1068 = vmatpush1.bf16.msra.mxu0 %v752
  %1069 = vmatprep.subr.bf16.mxu0 %v755
  %1070 = vmatpush1.bf16.msra.mxu0 %v754
  %1071 = vmatprep.subr.bf16.mxu0 %v757
  %1072 = vmatpush1.bf16.msra.mxu0 %v756
  %1073 = vmatprep.subr.bf16.mxu0 %v759
  %1074 = vmatpush1.bf16.msra.mxu0 %v758
  %1075 = vmatprep.subr.bf16.mxu0 %v761
  %1076 = vmatpush1.bf16.msra.mxu0 %v760
  %1077 = vmatprep.subr.bf16.mxu0 %v763
  %1078 = vmatpush1.bf16.msra.mxu0 %v762
  %1079 = vmatprep.subr.bf16.mxu0 %v765
  %1080 = vmatpush1.bf16.msra.mxu0 %v764
  %1081 = vmatprep.subr.bf16.mxu0 %v767
  %1082 = vmatpush1.bf16.msra.mxu0 %v766
  %1083 = vmatprep.subr.bf16.mxu0 %v769
  %1084 = vmatpush1.bf16.msra.mxu0 %v768
  %1085 = vmatprep.mubr.bf16.mxu0 %v199
  %1086 = vmatmul.mubr.bf16.gmra.mrb[0].mxu0 %v198
  %v1087 = vpop.f32.mrb[0].mxu0
  %v1088 = vadd.f32 %v1047, %v1087
  %v1089 = vpop.f32.mrb[0].mxu0
  %v1090 = vadd.f32 %v1049, %v1089
  %v1091 = vpop.f32.mrb[0].mxu0
  %v1092 = vpop.f32.mrb[0].mxu0
  %1093 = vdwg.mxu0
  %1094 = vmatprep.subr.bf16.mxu0 %v771
  %1095 = vmatpush1.bf16.msra.mxu0 %v770
  %1096 = vmatprep.subr.bf16.mxu0 %v773
  %1097 = vmatpush1.bf16.msra.mxu0 %v772
  %1098 = vmatprep.subr.bf16.mxu0 %v775
  %1099 = vmatpush1.bf16.msra.mxu0 %v774
  %1100 = vmatprep.subr.bf16.mxu0 %v777
  %1101 = vmatpush1.bf16.msra.mxu0 %v776
  %1102 = vmatprep.subr.bf16.mxu0 %v779
  %1103 = vmatpush1.bf16.msra.mxu0 %v778
  %1104 = vmatprep.subr.bf16.mxu0 %v781
  %1105 = vmatpush1.bf16.msra.mxu0 %v780
  %1106 = vmatprep.subr.bf16.mxu0 %v783
  %1107 = vmatpush1.bf16.msra.mxu0 %v782
  %1108 = vmatprep.subr.bf16.mxu0 %v785
  %1109 = vmatpush1.bf16.msra.mxu0 %v784
  %1110 = vmatprep.subr.bf16.mxu0 0
  %1111 = vmatpush1.bf16.msra.mxu0 0
  %1112 = vmatprep.subr.bf16.mxu0 0
  %1113 = vmatpush1.bf16.msra.mxu0 0
  %1114 = vmatprep.subr.bf16.mxu0 0
  %1115 = vmatpush1.bf16.msra.mxu0 0
  %1116 = vmatprep.subr.bf16.mxu0 0
  %1117 = vmatpush1.bf16.msra.mxu0 0
  %1118 = vmatprep.subr.bf16.mxu0 0
  %1119 = vmatpush1.bf16.msra.mxu0 0
  %1120 = vmatprep.subr.bf16.mxu0 0
  %1121 = vmatpush1.bf16.msra.mxu0 0
  %1122 = vmatprep.subr.bf16.mxu0 0
  %1123 = vmatpush1.bf16.msra.mxu0 0
  %1124 = vmatprep.subr.bf16.mxu0 0
  %1125 = vmatpush1.bf16.msra.mxu0 0
  %1126 = vmatprep.mubr.bf16.mxu0 0
  %1127 = vmatmul.mubr.bf16.gmra.mrb[0].mxu0 %v200
  %v1128 = vpop.f32.mrb[0].mxu0
  %v1129 = vadd.f32 %v1088, %v1128
  %v1130 = vpop.f32.mrb[0].mxu0
  %v1131 = vadd.f32 %v1090, %v1130
  %v1132 = vpop.f32.mrb[0].mxu0
  %v1133 = vpop.f32.mrb[0].mxu0
  %1134 = vdwg.mxu0
  %v1135 = vmax.f32 %v1129, 0.0
  %v1136 = vmax.f32 %v1131, 0.0
  %v1137 = vpack.c.bf16 %v1135, %v1135
  %v1138 = vpack.c.bf16 %v1136, %v1136
  %v1141 = vunpack.c.l.b16 %v1137
  %v1142 = vunpack.c.l.b16 %v1138
  %v1143 = vpack.c.b16 %v1142, %v1141
  %1145 = vst [vmem:[%s3] sm:$0xff] %v1143
  %s1146 = smul.u32 0, 8
  %v1147 = vlaneseq
  %v1148 = vshrl.u32 %v1147, 7
  %v1149 = vstv %s1146
  %v1150 = vadd.s32 %v1149, %v1148
  %vm1151 = vcmp.lt.s32.totalorder %v1150, 2
  %v1152 = vsel %vm1151, %v1135, 0.0
  %v1153 = vsel %vm1151, %v1136, 0.0
  %v1154 = vrot.slane %v1152, 4
  %v1155 = vadd.f32 %v1152, %v1154
  %v1156 = vrot.slane %v1155, 2
  %v1157 = vadd.f32 %v1155, %v1156
  %v1158 = vrot.slane %v1157, 1
  %v1159 = vadd.f32 %v1157, %v1158
  %v1160 = vrot.slane %v1153, 4
  %v1161 = vadd.f32 %v1153, %v1160
  %v1162 = vrot.slane %v1161, 2
  %v1163 = vadd.f32 %v1161, %v1162
  %v1164 = vrot.slane %v1163, 1
  %v1165 = vadd.f32 %v1163, %v1164
  %v1166 = vmul.f32 %v1152, %v1152
  %v1167 = vmul.f32 %v1153, %v1153
  %v1168 = vrot.slane %v1166, 4
  %v1169 = vadd.f32 %v1166, %v1168
  %v1170 = vrot.slane %v1169, 2
  %v1171 = vadd.f32 %v1169, %v1170
  %v1172 = vrot.slane %v1171, 1
  %v1173 = vadd.f32 %v1171, %v1172
  %v1174 = vrot.slane %v1167, 4
  %v1175 = vadd.f32 %v1167, %v1174
  %v1176 = vrot.slane %v1175, 2
  %v1177 = vadd.f32 %v1175, %v1176
  %v1178 = vrot.slane %v1177, 1
  %v1179 = vadd.f32 %v1177, %v1178
  %v1182 = vcombine.low %v1159, %v1165
  %v1184 = vunpack.c.l.s4 1966171168
  %v1185 = vunpack.c.0.s8 %v1184
  %v1186 = vlaneseq
  %v1187 = vshrl.u32 %v1186, 7
  %v1188 = vsub.s32 %v1185, %v1187
  %v1189 = vrot.slane %v1182, %v1188
  %v1191 = vunpack.c.l.s4 1966171168
  %v1192 = vunpack.c.0.s8 %v1191
  %v1193 = vlaneseq
  %v1194 = vshrl.u32 %v1193, 7
  %v1195 = vsub.s32 %v1192, %v1194
  %v1196 = vrot.slane %v1189, %v1195
  %v1198 = vlaneseq
  %vm1199 = vcmp.ge.s32.totalorder %v1198, 0
  %vm1200 = vcmp.lt.s32.totalorder %v1198, 256
  %vm1201 = vmand %vm1199, %vm1200
  %1202 = vst.msk [vmem:[%s4] ss:$8 sm:$0x3] %vm1201, %v1196
  %1203 = vst.msk [vmem:[%s4] ss:$8 sm:$0x0] %vm1201, %v1196
  %v1206 = vcombine.low %v1173, %v1179
  %v1208 = vunpack.c.l.s4 1966171168
  %v1209 = vunpack.c.0.s8 %v1208
  %v1210 = vlaneseq
  %v1211 = vshrl.u32 %v1210, 7
  %v1212 = vsub.s32 %v1209, %v1211
  %v1213 = vrot.slane %v1206, %v1212
  %v1215 = vunpack.c.l.s4 1966171168
  %v1216 = vunpack.c.0.s8 %v1215
  %v1217 = vlaneseq
  %v1218 = vshrl.u32 %v1217, 7
  %v1219 = vsub.s32 %v1216, %v1218
  %v1220 = vrot.slane %v1213, %v1219
  %s1222 = scalar_lea.vmem %s4, 1
  %1223 = vst.msk [vmem:[%s1222] ss:$8 sm:$0x3] %vm1201, %v1220
  %1224 = vst.msk [vmem:[%s1222] ss:$8 sm:$0x0] %vm1201, %v1220
  // Predicated region
  $region14: #{funie_discriminator.8} parent=0 // pred_check
    _
  $region15: #{funie_discriminator.8} parent=0 // pred_check_branch
    %1226 = sbr.rel (0) target = $region17
  $region16: #{funie_discriminator.8} parent=0 // pred_region
    _
  $region17: #{funie_discriminator.8} parent=0 // pred_fallthru
    _
  // Predicated region
  $region18: #{funie_discriminator.8} parent=0 // pred_check
    _
  $region19: #{funie_discriminator.8} parent=0 // pred_check_branch
    %1228 = sbr.rel (0) target = $region21
  $region20: #{funie_discriminator.8} parent=0 // pred_region
    _
  $region21: #{funie_discriminator.8} parent=0 // pred_fallthru
    _
  // Predicated region
  $region22: #{funie_discriminator.8} parent=0 // pred_check
    _
  $region23: #{funie_discriminator.8} parent=0 // pred_check_branch
    %1230 = sbr.rel (0) target = $region25
  $region24: #{funie_discriminator.8} parent=0 // pred_region
    _
  $region25: #{funie_discriminator.8} parent=0 // pred_fallthru
    _
  // Predicated region
  $region26: #{funie_discriminator.8} parent=0 // pred_check
    _
  $region27: #{funie_discriminator.8} parent=0 // pred_check_branch
    %1232 = sbr.rel (0) target = $region29
  $region28: #{funie_discriminator.8} parent=0 // pred_region
    _
  $region29: #{funie_discriminator.8} parent=0 // pred_fallthru
    _

// kernel: funie_discriminator.9
$region0: #{funie_discriminator.9}
  #allocation0 [shape = 'u32[]', space=smem, size = 0x4, offset = 0x4, fixed_abs, tag = 'smem constant byte address 0x4 - core index']
  #allocation1 [shape = 'u32[144,128]{1,0:T(1,128)}', space=vmem, size = 0x12000, scoped, tag = 'internal scratch']
  %s0 = inlined_call_operand.vmem [shape: bf16[8,2304], index: 0, kind: input, shape index: {}]
  %s1 = inlined_call_operand.vmem [shape: bf16[2304,128], index: 1, kind: input, shape index: {}]
  %s2 = inlined_call_operand.vmem [shape: f32[1,128], index: 2, kind: input, shape index: {}]
  %s3 = inlined_call_operand.vmem [shape: f32[8,128], index: 3, kind: output, shape index: {}]
  %s4 = sld [smem:[#allocation0]]
  $region22: #{funie_discriminator.9} parent=0
    _
  %s6 = ssub.s32 1, %s4
  %s7 = scalar_select 0, %s6, %s4
  // Predicated region
  $region2: #{funie_discriminator.9} parent=0 // pred_check
    _
  $region3: #{funie_discriminator.9} parent=0 // pred_check_branch
    %9 = sbr.rel (0) target = $region5
  $region4: #{funie_discriminator.9} parent=0 // pred_region
    _
  $region5: #{funie_discriminator.9} parent=0 // pred_fallthru
    _
  // Predicated region
  $region6: #{funie_discriminator.9} parent=0 // pred_check
    _
  $region7: #{funie_discriminator.9} parent=0 // pred_check_branch
    %11 = sbr.rel (0) target = $region9
  $region8: #{funie_discriminator.9} parent=0 // pred_region
    _
  $region9: #{funie_discriminator.9} parent=0 // pred_fallthru
    _
  // Predicated region
  $region10: #{funie_discriminator.9} parent=0 // pred_check
    _
  $region11: #{funie_discriminator.9} parent=0 // pred_check_branch
    %13 = sbr.rel (0) target = $region13
  $region12: #{funie_discriminator.9} parent=0 // pred_region
    _
  $region13: #{funie_discriminator.9} parent=0 // pred_fallthru
    _
  %v15 = vld [vmem:[%s0] sm:$0xff]
  %v16 = vld [vmem:[%s0 + $0x8] sm:$0xff]
  %v17 = vld [vmem:[%s0 + $0x10] sm:$0xff]
  %v18 = vld [vmem:[%s0 + $0x18] sm:$0xff]
  %v19 = vld [vmem:[%s0 + $0x20] sm:$0xff]
  %v20 = vld [vmem:[%s0 + $0x28] sm:$0xff]
  %v21 = vld [vmem:[%s0 + $0x30] sm:$0xff]
  %v22 = vld [vmem:[%s0 + $0x38] sm:$0xff]
  %v23 = vld [vmem:[%s0 + $0x40] sm:$0xff]
  %v24 = vld [vmem:[%s1] sm:$0xf]
  %v25 = vld [vmem:[%s1 + $0x4] sm:$0xf]
  %v26 = vld [vmem:[%s1 + $0x8] sm:$0xf]
  %v27 = vld [vmem:[%s1 + $0xc] sm:$0xf]
  %v28 = vld [vmem:[%s1 + $0x10] sm:$0xf]
  %v29 = vld [vmem:[%s1 + $0x14] sm:$0xf]
  %v30 = vld [vmem:[%s1 + $0x18] sm:$0xf]
  %v31 = vld [vmem:[%s1 + $0x1c] sm:$0xf]
  %v32 = vld [vmem:[%s1 + $0x20] sm:$0xf]
  %v33 = vld [vmem:[%s1 + $0x24] sm:$0xf]
  %v34 = vld [vmem:[%s1 + $0x28] sm:$0xf]
  %v35 = vld [vmem:[%s1 + $0x2c] sm:$0xf]
  %v36 = vld [vmem:[%s1 + $0x30] sm:$0xf]
  %v37 = vld [vmem:[%s1 + $0x34] sm:$0xf]
  %v38 = vld [vmem:[%s1 + $0x38] sm:$0xf]
  %v39 = vld [vmem:[%s1 + $0x3c] sm:$0xf]
  %v40 = vld [vmem:[%s1 + $0x40] sm:$0xf]
  %v41 = vld [vmem:[%s1 + $0x44] sm:$0xf]
  %v42 = vld [vmem:[%s1 + $0x48] sm:$0xf]
  %v43 = vld [vmem:[%s1 + $0x4c] sm:$0xf]
  %v44 = vld [vmem:[%s1 + $0x50] sm:$0xf]
  %v45 = vld [vmem:[%s1 + $0x54] sm:$0xf]
  %v46 = vld [vmem:[%s1 + $0x58] sm:$0xf]
  %v47 = vld [vmem:[%s1 + $0x5c] sm:$0xf]
  %v48 = vld [vmem:[%s1 + $0x60] sm:$0xf]
  %v49 = vld [vmem:[%s1 + $0x64] sm:$0xf]
  %v50 = vld [vmem:[%s1 + $0x68] sm:$0xf]
  %v51 = vld [vmem:[%s1 + $0x6c] sm:$0xf]
  %v52 = vld [vmem:[%s1 + $0x70] sm:$0xf]
  %v53 = vld [vmem:[%s1 + $0x74] sm:$0xf]
  %v54 = vld [vmem:[%s1 + $0x78] sm:$0xf]
  %v55 = vld [vmem:[%s1 + $0x7c] sm:$0xf]
  %v56 = vld [vmem:[%s1 + $0x80] sm:$0xf]
  %v57 = vld [vmem:[%s1 + $0x84] sm:$0xf]
  %v58 = vld [vmem:[%s1 + $0x88] sm:$0xf]
  %v59 = vld [vmem:[%s1 + $0x8c] sm:$0xf]
  %v60 = vld [vmem:[%s1 + $0x90] sm:$0xf]
  %v61 = vld [vmem:[%s1 + $0x94] sm:$0xf]
  %v62 = vld [vmem:[%s1 + $0x98] sm:$0xf]
  %v63 = vld [vmem:[%s1 + $0x9c] sm:$0xf]
  %v64 = vld [vmem:[%s1 + $0xa0] sm:$0xf]
  %v65 = vld [vmem:[%s1 + $0xa4] sm:$0xf]
  %v66 = vld [vmem:[%s1 + $0xa8] sm:$0xf]
  %v67 = vld [vmem:[%s1 + $0xac] sm:$0xf]
  %v68 = vld [vmem:[%s1 + $0xb0] sm:$0xf]
  %v69 = vld [vmem:[%s1 + $0xb4] sm:$0xf]
  %v70 = vld [vmem:[%s1 + $0xb8] sm:$0xf]
  %v71 = vld [vmem:[%s1 + $0xbc] sm:$0xf]
  %v72 = vld [vmem:[%s1 + $0xc0] sm:$0xf]
  %v73 = vld [vmem:[%s1 + $0xc4] sm:$0xf]
  %v74 = vld [vmem:[%s1 + $0xc8] sm:$0xf]
  %v75 = vld [vmem:[%s1 + $0xcc] sm:$0xf]
  %v76 = vld [vmem:[%s1 + $0xd0] sm:$0xf]
  %v77 = vld [vmem:[%s1 + $0xd4] sm:$0xf]
  %v78 = vld [vmem:[%s1 + $0xd8] sm:$0xf]
  %v79 = vld [vmem:[%s1 + $0xdc] sm:$0xf]
  %v80 = vld [vmem:[%s1 + $0xe0] sm:$0xf]
  %v81 = vld [vmem:[%s1 + $0xe4] sm:$0xf]
  %v82 = vld [vmem:[%s1 + $0xe8] sm:$0xf]
  %v83 = vld [vmem:[%s1 + $0xec] sm:$0xf]
  %v84 = vld [vmem:[%s1 + $0xf0] sm:$0xf]
  %v85 = vld [vmem:[%s1 + $0xf4] sm:$0xf]
  %v86 = vld [vmem:[%s1 + $0xf8] sm:$0xf]
  %v87 = vld [vmem:[%s1 + $0xfc] sm:$0xf]
  %v88 = vld [vmem:[%s1 + $0x100] sm:$0xf]
  %v89 = vld [vmem:[%s1 + $0x104] sm:$0xf]
  %v90 = vld [vmem:[%s1 + $0x108] sm:$0xf]
  %v91 = vld [vmem:[%s1 + $0x10c] sm:$0xf]
  %v92 = vld [vmem:[%s1 + $0x110] sm:$0xf]
  %v93 = vld [vmem:[%s1 + $0x114] sm:$0xf]
  %v94 = vld [vmem:[%s1 + $0x118] sm:$0xf]
  %v95 = vld [vmem:[%s1 + $0x11c] sm:$0xf]
  %v96 = vld [vmem:[%s1 + $0x120] sm:$0xf]
  %v97 = vld [vmem:[%s1 + $0x124] sm:$0xf]
  %v98 = vld [vmem:[%s1 + $0x128] sm:$0xf]
  %v99 = vld [vmem:[%s1 + $0x12c] sm:$0xf]
  %v100 = vld [vmem:[%s1 + $0x130] sm:$0xf]
  %v101 = vld [vmem:[%s1 + $0x134] sm:$0xf]
  %v102 = vld [vmem:[%s1 + $0x138] sm:$0xf]
  %v103 = vld [vmem:[%s1 + $0x13c] sm:$0xf]
  %v104 = vld [vmem:[%s1 + $0x140] sm:$0xf]
  %v105 = vld [vmem:[%s1 + $0x144] sm:$0xf]
  %v106 = vld [vmem:[%s1 + $0x148] sm:$0xf]
  %v107 = vld [vmem:[%s1 + $0x14c] sm:$0xf]
  %v108 = vld [vmem:[%s1 + $0x150] sm:$0xf]
  %v109 = vld [vmem:[%s1 + $0x154] sm:$0xf]
  %v110 = vld [vmem:[%s1 + $0x158] sm:$0xf]
  %v111 = vld [vmem:[%s1 + $0x15c] sm:$0xf]
  %v112 = vld [vmem:[%s1 + $0x160] sm:$0xf]
  %v113 = vld [vmem:[%s1 + $0x164] sm:$0xf]
  %v114 = vld [vmem:[%s1 + $0x168] sm:$0xf]
  %v115 = vld [vmem:[%s1 + $0x16c] sm:$0xf]
  %v116 = vld [vmem:[%s1 + $0x170] sm:$0xf]
  %v117 = vld [vmem:[%s1 + $0x174] sm:$0xf]
  %v118 = vld [vmem:[%s1 + $0x178] sm:$0xf]
  %v119 = vld [vmem:[%s1 + $0x17c] sm:$0xf]
  %v120 = vld [vmem:[%s1 + $0x180] sm:$0xf]
  %v121 = vld [vmem:[%s1 + $0x184] sm:$0xf]
  %v122 = vld [vmem:[%s1 + $0x188] sm:$0xf]
  %v123 = vld [vmem:[%s1 + $0x18c] sm:$0xf]
  %v124 = vld [vmem:[%s1 + $0x190] sm:$0xf]
  %v125 = vld [vmem:[%s1 + $0x194] sm:$0xf]
  %v126 = vld [vmem:[%s1 + $0x198] sm:$0xf]
  %v127 = vld [vmem:[%s1 + $0x19c] sm:$0xf]
  %v128 = vld [vmem:[%s1 + $0x1a0] sm:$0xf]
  %v129 = vld [vmem:[%s1 + $0x1a4] sm:$0xf]
  %v130 = vld [vmem:[%s1 + $0x1a8] sm:$0xf]
  %v131 = vld [vmem:[%s1 + $0x1ac] sm:$0xf]
  %v132 = vld [vmem:[%s1 + $0x1b0] sm:$0xf]
  %v133 = vld [vmem:[%s1 + $0x1b4] sm:$0xf]
  %v134 = vld [vmem:[%s1 + $0x1b8] sm:$0xf]
  %v135 = vld [vmem:[%s1 + $0x1bc] sm:$0xf]
  %v136 = vld [vmem:[%s1 + $0x1c0] sm:$0xf]
  %v137 = vld [vmem:[%s1 + $0x1c4] sm:$0xf]
  %v138 = vld [vmem:[%s1 + $0x1c8] sm:$0xf]
  %v139 = vld [vmem:[%s1 + $0x1cc] sm:$0xf]
  %v140 = vld [vmem:[%s1 + $0x1d0] sm:$0xf]
  %v141 = vld [vmem:[%s1 + $0x1d4] sm:$0xf]
  %v142 = vld [vmem:[%s1 + $0x1d8] sm:$0xf]
  %v143 = vld [vmem:[%s1 + $0x1dc] sm:$0xf]
  %v144 = vld [vmem:[%s1 + $0x1e0] sm:$0xf]
  %v145 = vld [vmem:[%s1 + $0x1e4] sm:$0xf]
  %v146 = vld [vmem:[%s1 + $0x1e8] sm:$0xf]
  %v147 = vld [vmem:[%s1 + $0x1ec] sm:$0xf]
  %v148 = vld [vmem:[%s1 + $0x1f0] sm:$0xf]
  %v149 = vld [vmem:[%s1 + $0x1f4] sm:$0xf]
  %v150 = vld [vmem:[%s1 + $0x1f8] sm:$0xf]
  %v151 = vld [vmem:[%s1 + $0x1fc] sm:$0xf]
  %v152 = vld [vmem:[%s1 + $0x200] sm:$0xf]
  %v153 = vld [vmem:[%s1 + $0x204] sm:$0xf]
  %v154 = vld [vmem:[%s1 + $0x208] sm:$0xf]
  %v155 = vld [vmem:[%s1 + $0x20c] sm:$0xf]
  %v156 = vld [vmem:[%s1 + $0x210] sm:$0xf]
  %v157 = vld [vmem:[%s1 + $0x214] sm:$0xf]
  %v158 = vld [vmem:[%s1 + $0x218] sm:$0xf]
  %v159 = vld [vmem:[%s1 + $0x21c] sm:$0xf]
  %v160 = vld [vmem:[%s1 + $0x220] sm:$0xf]
  %v161 = vld [vmem:[%s1 + $0x224] sm:$0xf]
  %v162 = vld [vmem:[%s1 + $0x228] sm:$0xf]
  %v163 = vld [vmem:[%s1 + $0x22c] sm:$0xf]
  %v164 = vld [vmem:[%s1 + $0x230] sm:$0xf]
  %v165 = vld [vmem:[%s1 + $0x234] sm:$0xf]
  %v166 = vld [vmem:[%s1 + $0x238] sm:$0xf]
  %v167 = vld [vmem:[%s1 + $0x23c] sm:$0xf]
  %v168 = vld [vmem:[%s1 + $0x240] sm:$0xf]
  %v169 = vld [vmem:[%s1 + $0x244] sm:$0xf]
  %v170 = vld [vmem:[%s1 + $0x248] sm:$0xf]
  %v171 = vld [vmem:[%s1 + $0x24c] sm:$0xf]
  %v172 = vld [vmem:[%s1 + $0x250] sm:$0xf]
  %v173 = vld [vmem:[%s1 + $0x254] sm:$0xf]
  %v174 = vld [vmem:[%s1 + $0x258] sm:$0xf]
  %v175 = vld [vmem:[%s1 + $0x25c] sm:$0xf]
  %v176 = vld [vmem:[%s1 + $0x260] sm:$0xf]
  %v177 = vld [vmem:[%s1 + $0x264] sm:$0xf]
  %v178 = vld [vmem:[%s1 + $0x268] sm:$0xf]
  %v179 = vld [vmem:[%s1 + $0x26c] sm:$0xf]
  %v180 = vld [vmem:[%s1 + $0x270] sm:$0xf]
  %v181 = vld [vmem:[%s1 + $0x274] sm:$0xf]
  %v182 = vld [vmem:[%s1 + $0x278] sm:$0xf]
  %v183 = vld [vmem:[%s1 + $0x27c] sm:$0xf]
  %v184 = vld [vmem:[%s1 + $0x280] sm:$0xf]
  %v185 = vld [vmem:[%s1 + $0x284] sm:$0xf]
  %v186 = vld [vmem:[%s1 + $0x288] sm:$0xf]
  %v187 = vld [vmem:[%s1 + $0x28c] sm:$0xf]
  %v188 = vld [vmem:[%s1 + $0x290] sm:$0xf]
  %v189 = vld [vmem:[%s1 + $0x294] sm:$0xf]
  %v190 = vld [vmem:[%s1 + $0x298] sm:$0xf]
  %v191 = vld [vmem:[%s1 + $0x29c] sm:$0xf]
  %v192 = vld [vmem:[%s1 + $0x2a0] sm:$0xf]
  %v193 = vld [vmem:[%s1 + $0x2a4] sm:$0xf]
  %v194 = vld [vmem:[%s1 + $0x2a8] sm:$0xf]
  %v195 = vld [vmem:[%s1 + $0x2ac] sm:$0xf]
  %v196 = vld [vmem:[%s1 + $0x2b0] sm:$0xf]
  %v197 = vld [vmem:[%s1 + $0x2b4] sm:$0xf]
  %v198 = vld [vmem:[%s1 + $0x2b8] sm:$0xf]
  %v199 = vld [vmem:[%s1 + $0x2bc] sm:$0xf]
  %v200 = vld [vmem:[%s1 + $0x2c0] sm:$0xf]
  %v201 = vld [vmem:[%s1 + $0x2c4] sm:$0xf]
  %v202 = vld [vmem:[%s1 + $0x2c8] sm:$0xf]
  %v203 = vld [vmem:[%s1 + $0x2cc] sm:$0xf]
  %v204 = vld [vmem:[%s1 + $0x2d0] sm:$0xf]
  %v205 = vld [vmem:[%s1 + $0x2d4] sm:$0xf]
  %v206 = vld [vmem:[%s1 + $0x2d8] sm:$0xf]
  %v207 = vld [vmem:[%s1 + $0x2dc] sm:$0xf]
  %v208 = vld [vmem:[%s1 + $0x2e0] sm:$0xf]
  %v209 = vld [vmem:[%s1 + $0x2e4] sm:$0xf]
  %v210 = vld [vmem:[%s1 + $0x2e8] sm:$0xf]
  %v211 = vld [vmem:[%s1 + $0x2ec] sm:$0xf]
  %v212 = vld [vmem:[%s1 + $0x2f0] sm:$0xf]
  %v213 = vld [vmem:[%s1 + $0x2f4] sm:$0xf]
  %v214 = vld [vmem:[%s1 + $0x2f8] sm:$0xf]
  %v215 = vld [vmem:[%s1 + $0x2fc] sm:$0xf]
  %v216 = vld [vmem:[%s1 + $0x300] sm:$0xf]
  %v217 = vld [vmem:[%s1 + $0x304] sm:$0xf]
  %v218 = vld [vmem:[%s1 + $0x308] sm:$0xf]
  %v219 = vld [vmem:[%s1 + $0x30c] sm:$0xf]
  %v220 = vld [vmem:[%s1 + $0x310] sm:$0xf]
  %v221 = vld [vmem:[%s1 + $0x314] sm:$0xf]
  %v222 = vld [vmem:[%s1 + $0x318] sm:$0xf]
  %v223 = vld [vmem:[%s1 + $0x31c] sm:$0xf]
  %v224 = vld [vmem:[%s1 + $0x320] sm:$0xf]
  %v225 = vld [vmem:[%s1 + $0x324] sm:$0xf]
  %v226 = vld [vmem:[%s1 + $0x328] sm:$0xf]
  %v227 = vld [vmem:[%s1 + $0x32c] sm:$0xf]
  %v228 = vld [vmem:[%s1 + $0x330] sm:$0xf]
  %v229 = vld [vmem:[%s1 + $0x334] sm:$0xf]
  %v230 = vld [vmem:[%s1 + $0x338] sm:$0xf]
  %v231 = vld [vmem:[%s1 + $0x33c] sm:$0xf]
  %v232 = vld [vmem:[%s1 + $0x340] sm:$0xf]
  %v233 = vld [vmem:[%s1 + $0x344] sm:$0xf]
  %v234 = vld [vmem:[%s1 + $0x348] sm:$0xf]
  %v235 = vld [vmem:[%s1 + $0x34c] sm:$0xf]
  %v236 = vld [vmem:[%s1 + $0x350] sm:$0xf]
  %v237 = vld [vmem:[%s1 + $0x354] sm:$0xf]
  %v238 = vld [vmem:[%s1 + $0x358] sm:$0xf]
  %v239 = vld [vmem:[%s1 + $0x35c] sm:$0xf]
  %v240 = vld [vmem:[%s1 + $0x360] sm:$0xf]
  %v241 = vld [vmem:[%s1 + $0x364] sm:$0xf]
  %v242 = vld [vmem:[%s1 + $0x368] sm:$0xf]
  %v243 = vld [vmem:[%s1 + $0x36c] sm:$0xf]
  %v244 = vld [vmem:[%s1 + $0x370] sm:$0xf]
  %v245 = vld [vmem:[%s1 + $0x374] sm:$0xf]
  %v246 = vld [vmem:[%s1 + $0x378] sm:$0xf]
  %v247 = vld [vmem:[%s1 + $0x37c] sm:$0xf]
  %v248 = vld [vmem:[%s1 + $0x380] sm:$0xf]
  %v249 = vld [vmem:[%s1 + $0x384] sm:$0xf]
  %v250 = vld [vmem:[%s1 + $0x388] sm:$0xf]
  %v251 = vld [vmem:[%s1 + $0x38c] sm:$0xf]
  %v252 = vld [vmem:[%s1 + $0x390] sm:$0xf]
  %v253 = vld [vmem:[%s1 + $0x394] sm:$0xf]
  %v254 = vld [vmem:[%s1 + $0x398] sm:$0xf]
  %v255 = vld [vmem:[%s1 + $0x39c] sm:$0xf]
  %v256 = vld [vmem:[%s1 + $0x3a0] sm:$0xf]
  %v257 = vld [vmem:[%s1 + $0x3a4] sm:$0xf]
  %v258 = vld [vmem:[%s1 + $0x3a8] sm:$0xf]
  %v259 = vld [vmem:[%s1 + $0x3ac] sm:$0xf]
  %v260 = vld [vmem:[%s1 + $0x3b0] sm:$0xf]
  %v261 = vld [vmem:[%s1 + $0x3b4] sm:$0xf]
  %v262 = vld [vmem:[%s1 + $0x3b8] sm:$0xf]
  %v263 = vld [vmem:[%s1 + $0x3bc] sm:$0xf]
  %v264 = vld [vmem:[%s1 + $0x3c0] sm:$0xf]
  %v265 = vld [vmem:[%s1 + $0x3c4] sm:$0xf]
  %v266 = vld [vmem:[%s1 + $0x3c8] sm:$0xf]
  %v267 = vld [vmem:[%s1 + $0x3cc] sm:$0xf]
  %v268 = vld [vmem:[%s1 + $0x3d0] sm:$0xf]
  %v269 = vld [vmem:[%s1 + $0x3d4] sm:$0xf]
  %v270 = vld [vmem:[%s1 + $0x3d8] sm:$0xf]
  %v271 = vld [vmem:[%s1 + $0x3dc] sm:$0xf]
  %v272 = vld [vmem:[%s1 + $0x3e0] sm:$0xf]
  %v273 = vld [vmem:[%s1 + $0x3e4] sm:$0xf]
  %v274 = vld [vmem:[%s1 + $0x3e8] sm:$0xf]
  %v275 = vld [vmem:[%s1 + $0x3ec] sm:$0xf]
  %v276 = vld [vmem:[%s1 + $0x3f0] sm:$0xf]
  %v277 = vld [vmem:[%s1 + $0x3f4] sm:$0xf]
  %v278 = vld [vmem:[%s1 + $0x3f8] sm:$0xf]
  %v279 = vld [vmem:[%s1 + $0x3fc] sm:$0xf]
  %v280 = vld [vmem:[%s1 + $0x400] sm:$0xf]
  %v281 = vld [vmem:[%s1 + $0x404] sm:$0xf]
  %v282 = vld [vmem:[%s1 + $0x408] sm:$0xf]
  %v283 = vld [vmem:[%s1 + $0x40c] sm:$0xf]
  %v284 = vld [vmem:[%s1 + $0x410] sm:$0xf]
  %v285 = vld [vmem:[%s1 + $0x414] sm:$0xf]
  %v286 = vld [vmem:[%s1 + $0x418] sm:$0xf]
  %v287 = vld [vmem:[%s1 + $0x41c] sm:$0xf]
  %v288 = vld [vmem:[%s1 + $0x420] sm:$0xf]
  %v289 = vld [vmem:[%s1 + $0x424] sm:$0xf]
  %v290 = vld [vmem:[%s1 + $0x428] sm:$0xf]
  %v291 = vld [vmem:[%s1 + $0x42c] sm:$0xf]
  %v292 = vld [vmem:[%s1 + $0x430] sm:$0xf]
  %v293 = vld [vmem:[%s1 + $0x434] sm:$0xf]
  %v294 = vld [vmem:[%s1 + $0x438] sm:$0xf]
  %v295 = vld [vmem:[%s1 + $0x43c] sm:$0xf]
  %v296 = vld [vmem:[%s1 + $0x440] sm:$0xf]
  %v297 = vld [vmem:[%s1 + $0x444] sm:$0xf]
  %v298 = vld [vmem:[%s1 + $0x448] sm:$0xf]
  %v299 = vld [vmem:[%s1 + $0x44c] sm:$0xf]
  %v300 = vld [vmem:[%s1 + $0x450] sm:$0xf]
  %v301 = vld [vmem:[%s1 + $0x454] sm:$0xf]
  %v302 = vld [vmem:[%s1 + $0x458] sm:$0xf]
  %v303 = vld [vmem:[%s1 + $0x45c] sm:$0xf]
  %v304 = vld [vmem:[%s1 + $0x460] sm:$0xf]
  %v305 = vld [vmem:[%s1 + $0x464] sm:$0xf]
  %v306 = vld [vmem:[%s1 + $0x468] sm:$0xf]
  %v307 = vld [vmem:[%s1 + $0x46c] sm:$0xf]
  %v308 = vld [vmem:[%s1 + $0x470] sm:$0xf]
  %v309 = vld [vmem:[%s1 + $0x474] sm:$0xf]
  %v310 = vld [vmem:[%s1 + $0x478] sm:$0xf]
  %v311 = vld [vmem:[%s1 + $0x47c] sm:$0xf]
  %v312 = vld [vmem:[%s2] sm:$0x1]
  %v314 = vlaneseq
  %v315 = vshrl.u32 %v314, 7
  %v316 = vsub.s32 0, %v315
  %v317 = vrot.slane %v312, %v316
  %v328 = vunpack.c.l.b16 %v15
  %v329 = vunpack.c.h.b16 %v15
  %v330 = vunpack.c.l.b16 %v16
  %v331 = vunpack.c.h.b16 %v16
  %v332 = vunpack.c.l.b16 %v17
  %v333 = vunpack.c.h.b16 %v17
  %v334 = vunpack.c.l.b16 %v18
  %v335 = vunpack.c.h.b16 %v18
  %v336 = vunpack.c.l.b16 %v19
  %v337 = vunpack.c.h.b16 %v19
  %v338 = vunpack.c.l.b16 %v20
  %v339 = vunpack.c.h.b16 %v20
  %v340 = vunpack.c.l.b16 %v21
  %v341 = vunpack.c.h.b16 %v21
  %v342 = vunpack.c.l.b16 %v22
  %v343 = vunpack.c.h.b16 %v22
  %v344 = vunpack.c.l.b16 %v23
  %v345 = vunpack.c.h.b16 %v23
  %v346 = vpack.c.b16 %v328, %v328
  %v347 = vpack.c.b16 %v329, %v329
  %v348 = vpack.c.b16 %v330, %v330
  %v349 = vpack.c.b16 %v331, %v331
  %v350 = vpack.c.b16 %v332, %v332
  %v351 = vpack.c.b16 %v333, %v333
  %v352 = vpack.c.b16 %v334, %v334
  %v353 = vpack.c.b16 %v335, %v335
  %v354 = vpack.c.b16 %v336, %v336
  %v355 = vpack.c.b16 %v337, %v337
  %v356 = vpack.c.b16 %v338, %v338
  %v357 = vpack.c.b16 %v339, %v339
  %v358 = vpack.c.b16 %v340, %v340
  %v359 = vpack.c.b16 %v341, %v341
  %v360 = vpack.c.b16 %v342, %v342
  %v361 = vpack.c.b16 %v343, %v343
  %v362 = vpack.c.b16 %v344, %v344
  %v363 = vpack.c.b16 %v345, %v345
  %v670 = vunpack.c.l.b16 %v24
  %v671 = vunpack.c.l.b16 %v25
  %v672 = vunpack.c.l.b16 %v26
  %v673 = vunpack.c.l.b16 %v27
  %v674 = vunpack.c.l.b16 %v28
  %v675 = vunpack.c.l.b16 %v29
  %v676 = vunpack.c.l.b16 %v30
  %v677 = vunpack.c.l.b16 %v31
  %v678 = vunpack.c.l.b16 %v32
  %v679 = vunpack.c.l.b16 %v33
  %v680 = vunpack.c.l.b16 %v34
  %v681 = vunpack.c.l.b16 %v35
  %v682 = vunpack.c.l.b16 %v36
  %v683 = vunpack.c.l.b16 %v37
  %v684 = vunpack.c.l.b16 %v38
  %v685 = vunpack.c.l.b16 %v39
  %v686 = vunpack.c.l.b16 %v40
  %v687 = vunpack.c.l.b16 %v41
  %v688 = vunpack.c.l.b16 %v42
  %v689 = vunpack.c.l.b16 %v43
  %v690 = vunpack.c.l.b16 %v44
  %v691 = vunpack.c.l.b16 %v45
  %v692 = vunpack.c.l.b16 %v46
  %v693 = vunpack.c.l.b16 %v47
  %v694 = vunpack.c.l.b16 %v48
  %v695 = vunpack.c.l.b16 %v49
  %v696 = vunpack.c.l.b16 %v50
  %v697 = vunpack.c.l.b16 %v51
  %v698 = vunpack.c.l.b16 %v52
  %v699 = vunpack.c.l.b16 %v53
  %v700 = vunpack.c.l.b16 %v54
  %v701 = vunpack.c.l.b16 %v55
  %v702 = vunpack.c.l.b16 %v56
  %v703 = vunpack.c.l.b16 %v57
  %v704 = vunpack.c.l.b16 %v58
  %v705 = vunpack.c.l.b16 %v59
  %v706 = vunpack.c.l.b16 %v60
  %v707 = vunpack.c.l.b16 %v61
  %v708 = vunpack.c.l.b16 %v62
  %v709 = vunpack.c.l.b16 %v63
  %v710 = vunpack.c.l.b16 %v64
  %v711 = vunpack.c.l.b16 %v65
  %v712 = vunpack.c.l.b16 %v66
  %v713 = vunpack.c.l.b16 %v67
  %v714 = vunpack.c.l.b16 %v68
  %v715 = vunpack.c.l.b16 %v69
  %v716 = vunpack.c.l.b16 %v70
  %v717 = vunpack.c.l.b16 %v71
  %v718 = vunpack.c.l.b16 %v72
  %v719 = vunpack.c.l.b16 %v73
  %v720 = vunpack.c.l.b16 %v74
  %v721 = vunpack.c.l.b16 %v75
  %v722 = vunpack.c.l.b16 %v76
  %v723 = vunpack.c.l.b16 %v77
  %v724 = vunpack.c.l.b16 %v78
  %v725 = vunpack.c.l.b16 %v79
  %v726 = vunpack.c.l.b16 %v80
  %v727 = vunpack.c.l.b16 %v81
  %v728 = vunpack.c.l.b16 %v82
  %v729 = vunpack.c.l.b16 %v83
  %v730 = vunpack.c.l.b16 %v84
  %v731 = vunpack.c.l.b16 %v85
  %v732 = vunpack.c.l.b16 %v86
  %v733 = vunpack.c.l.b16 %v87
  %v734 = vunpack.c.l.b16 %v88
  %v735 = vunpack.c.l.b16 %v89
  %v736 = vunpack.c.l.b16 %v90
  %v737 = vunpack.c.l.b16 %v91
  %v738 = vunpack.c.l.b16 %v92
  %v739 = vunpack.c.l.b16 %v93
  %v740 = vunpack.c.l.b16 %v94
  %v741 = vunpack.c.l.b16 %v95
  %v742 = vunpack.c.l.b16 %v96
  %v743 = vunpack.c.l.b16 %v97
  %v744 = vunpack.c.l.b16 %v98
  %v745 = vunpack.c.l.b16 %v99
  %v746 = vunpack.c.l.b16 %v100
  %v747 = vunpack.c.l.b16 %v101
  %v748 = vunpack.c.l.b16 %v102
  %v749 = vunpack.c.l.b16 %v103
  %v750 = vunpack.c.l.b16 %v104
  %v751 = vunpack.c.l.b16 %v105
  %v752 = vunpack.c.l.b16 %v106
  %v753 = vunpack.c.l.b16 %v107
  %v754 = vunpack.c.l.b16 %v108
  %v755 = vunpack.c.l.b16 %v109
  %v756 = vunpack.c.l.b16 %v110
  %v757 = vunpack.c.l.b16 %v111
  %v758 = vunpack.c.l.b16 %v112
  %v759 = vunpack.c.l.b16 %v113
  %v760 = vunpack.c.l.b16 %v114
  %v761 = vunpack.c.l.b16 %v115
  %v762 = vunpack.c.l.b16 %v116
  %v763 = vunpack.c.l.b16 %v117
  %v764 = vunpack.c.l.b16 %v118
  %v765 = vunpack.c.l.b16 %v119
  %v766 = vunpack.c.l.b16 %v120
  %v767 = vunpack.c.l.b16 %v121
  %v768 = vunpack.c.l.b16 %v122
  %v769 = vunpack.c.l.b16 %v123
  %v770 = vunpack.c.l.b16 %v124
  %v771 = vunpack.c.l.b16 %v125
  %v772 = vunpack.c.l.b16 %v126
  %v773 = vunpack.c.l.b16 %v127
  %v774 = vunpack.c.l.b16 %v128
  %v775 = vunpack.c.l.b16 %v129
  %v776 = vunpack.c.l.b16 %v130
  %v777 = vunpack.c.l.b16 %v131
  %v778 = vunpack.c.l.b16 %v132
  %v779 = vunpack.c.l.b16 %v133
  %v780 = vunpack.c.l.b16 %v134
  %v781 = vunpack.c.l.b16 %v135
  %v782 = vunpack.c.l.b16 %v136
  %v783 = vunpack.c.l.b16 %v137
  %v784 = vunpack.c.l.b16 %v138
  %v785 = vunpack.c.l.b16 %v139
  %v786 = vunpack.c.l.b16 %v140
  %v787 = vunpack.c.l.b16 %v141
  %v788 = vunpack.c.l.b16 %v142
  %v789 = vunpack.c.l.b16 %v143
  %v790 = vunpack.c.l.b16 %v144
  %v791 = vunpack.c.l.b16 %v145
  %v792 = vunpack.c.l.b16 %v146
  %v793 = vunpack.c.l.b16 %v147
  %v794 = vunpack.c.l.b16 %v148
  %v795 = vunpack.c.l.b16 %v149
  %v796 = vunpack.c.l.b16 %v150
  %v797 = vunpack.c.l.b16 %v151
  %v798 = vunpack.c.l.b16 %v152
  %v799 = vunpack.c.l.b16 %v153
  %v800 = vunpack.c.l.b16 %v154
  %v801 = vunpack.c.l.b16 %v155
  %v802 = vunpack.c.l.b16 %v156
  %v803 = vunpack.c.l.b16 %v157
  %v804 = vunpack.c.l.b16 %v158
  %v805 = vunpack.c.l.b16 %v159
  %v806 = vunpack.c.l.b16 %v160
  %v807 = vunpack.c.l.b16 %v161
  %v808 = vunpack.c.l.b16 %v162
  %v809 = vunpack.c.l.b16 %v163
  %v810 = vunpack.c.l.b16 %v164
  %v811 = vunpack.c.l.b16 %v165
  %v812 = vunpack.c.l.b16 %v166
  %v813 = vunpack.c.l.b16 %v167
  %v814 = vunpack.c.l.b16 %v168
  %v815 = vunpack.c.l.b16 %v169
  %v816 = vunpack.c.l.b16 %v170
  %v817 = vunpack.c.l.b16 %v171
  %v818 = vunpack.c.l.b16 %v172
  %v819 = vunpack.c.l.b16 %v173
  %v820 = vunpack.c.l.b16 %v174
  %v821 = vunpack.c.l.b16 %v175
  %v822 = vunpack.c.l.b16 %v176
  %v823 = vunpack.c.l.b16 %v177
  %v824 = vunpack.c.l.b16 %v178
  %v825 = vunpack.c.l.b16 %v179
  %v826 = vunpack.c.l.b16 %v180
  %v827 = vunpack.c.l.b16 %v181
  %v828 = vunpack.c.l.b16 %v182
  %v829 = vunpack.c.l.b16 %v183
  %v830 = vunpack.c.l.b16 %v184
  %v831 = vunpack.c.l.b16 %v185
  %v832 = vunpack.c.l.b16 %v186
  %v833 = vunpack.c.l.b16 %v187
  %v834 = vunpack.c.l.b16 %v188
  %v835 = vunpack.c.l.b16 %v189
  %v836 = vunpack.c.l.b16 %v190
  %v837 = vunpack.c.l.b16 %v191
  %v838 = vunpack.c.l.b16 %v192
  %v839 = vunpack.c.l.b16 %v193
  %v840 = vunpack.c.l.b16 %v194
  %v841 = vunpack.c.l.b16 %v195
  %v842 = vunpack.c.l.b16 %v196
  %v843 = vunpack.c.l.b16 %v197
  %v844 = vunpack.c.l.b16 %v198
  %v845 = vunpack.c.l.b16 %v199
  %v846 = vunpack.c.l.b16 %v200
  %v847 = vunpack.c.l.b16 %v201
  %v848 = vunpack.c.l.b16 %v202
  %v849 = vunpack.c.l.b16 %v203
  %v850 = vunpack.c.l.b16 %v204
  %v851 = vunpack.c.l.b16 %v205
  %v852 = vunpack.c.l.b16 %v206
  %v853 = vunpack.c.l.b16 %v207
  %v854 = vunpack.c.l.b16 %v208
  %v855 = vunpack.c.l.b16 %v209
  %v856 = vunpack.c.l.b16 %v210
  %v857 = vunpack.c.l.b16 %v211
  %v858 = vunpack.c.l.b16 %v212
  %v859 = vunpack.c.l.b16 %v213
  %v860 = vunpack.c.l.b16 %v214
  %v861 = vunpack.c.l.b16 %v215
  %v862 = vunpack.c.l.b16 %v216
  %v863 = vunpack.c.l.b16 %v217
  %v864 = vunpack.c.l.b16 %v218
  %v865 = vunpack.c.l.b16 %v219
  %v866 = vunpack.c.l.b16 %v220
  %v867 = vunpack.c.l.b16 %v221
  %v868 = vunpack.c.l.b16 %v222
  %v869 = vunpack.c.l.b16 %v223
  %v870 = vunpack.c.l.b16 %v224
  %v871 = vunpack.c.l.b16 %v225
  %v872 = vunpack.c.l.b16 %v226
  %v873 = vunpack.c.l.b16 %v227
  %v874 = vunpack.c.l.b16 %v228
  %v875 = vunpack.c.l.b16 %v229
  %v876 = vunpack.c.l.b16 %v230
  %v877 = vunpack.c.l.b16 %v231
  %v878 = vunpack.c.l.b16 %v232
  %v879 = vunpack.c.l.b16 %v233
  %v880 = vunpack.c.l.b16 %v234
  %v881 = vunpack.c.l.b16 %v235
  %v882 = vunpack.c.l.b16 %v236
  %v883 = vunpack.c.l.b16 %v237
  %v884 = vunpack.c.l.b16 %v238
  %v885 = vunpack.c.l.b16 %v239
  %v886 = vunpack.c.l.b16 %v240
  %v887 = vunpack.c.l.b16 %v241
  %v888 = vunpack.c.l.b16 %v242
  %v889 = vunpack.c.l.b16 %v243
  %v890 = vunpack.c.l.b16 %v244
  %v891 = vunpack.c.l.b16 %v245
  %v892 = vunpack.c.l.b16 %v246
  %v893 = vunpack.c.l.b16 %v247
  %v894 = vunpack.c.l.b16 %v248
  %v895 = vunpack.c.l.b16 %v249
  %v896 = vunpack.c.l.b16 %v250
  %v897 = vunpack.c.l.b16 %v251
  %v898 = vunpack.c.l.b16 %v252
  %v899 = vunpack.c.l.b16 %v253
  %v900 = vunpack.c.l.b16 %v254
  %v901 = vunpack.c.l.b16 %v255
  %v902 = vunpack.c.l.b16 %v256
  %v903 = vunpack.c.l.b16 %v257
  %v904 = vunpack.c.l.b16 %v258
  %v905 = vunpack.c.l.b16 %v259
  %v906 = vunpack.c.l.b16 %v260
  %v907 = vunpack.c.l.b16 %v261
  %v908 = vunpack.c.l.b16 %v262
  %v909 = vunpack.c.l.b16 %v263
  %v910 = vunpack.c.l.b16 %v264
  %v911 = vunpack.c.l.b16 %v265
  %v912 = vunpack.c.l.b16 %v266
  %v913 = vunpack.c.l.b16 %v267
  %v914 = vunpack.c.l.b16 %v268
  %v915 = vunpack.c.l.b16 %v269
  %v916 = vunpack.c.l.b16 %v270
  %v917 = vunpack.c.l.b16 %v271
  %v918 = vunpack.c.l.b16 %v272
  %v919 = vunpack.c.l.b16 %v273
  %v920 = vunpack.c.l.b16 %v274
  %v921 = vunpack.c.l.b16 %v275
  %v922 = vunpack.c.l.b16 %v276
  %v923 = vunpack.c.l.b16 %v277
  %v924 = vunpack.c.l.b16 %v278
  %v925 = vunpack.c.l.b16 %v279
  %v926 = vunpack.c.l.b16 %v280
  %v927 = vunpack.c.l.b16 %v281
  %v928 = vunpack.c.l.b16 %v282
  %v929 = vunpack.c.l.b16 %v283
  %v930 = vunpack.c.l.b16 %v284
  %v931 = vunpack.c.l.b16 %v285
  %v932 = vunpack.c.l.b16 %v286
  %v933 = vunpack.c.l.b16 %v287
  %v934 = vunpack.c.l.b16 %v288
  %v935 = vunpack.c.l.b16 %v289
  %v936 = vunpack.c.l.b16 %v290
  %v937 = vunpack.c.l.b16 %v291
  %v938 = vunpack.c.l.b16 %v292
  %v939 = vunpack.c.l.b16 %v293
  %v940 = vunpack.c.l.b16 %v294
  %v941 = vunpack.c.l.b16 %v295
  %v942 = vunpack.c.l.b16 %v296
  %v943 = vunpack.c.l.b16 %v297
  %v944 = vunpack.c.l.b16 %v298
  %v945 = vunpack.c.l.b16 %v299
  %v946 = vunpack.c.l.b16 %v300
  %v947 = vunpack.c.l.b16 %v301
  %v948 = vunpack.c.l.b16 %v302
  %v949 = vunpack.c.l.b16 %v303
  %v950 = vunpack.c.l.b16 %v304
  %v951 = vunpack.c.l.b16 %v305
  %v952 = vunpack.c.l.b16 %v306
  %v953 = vunpack.c.l.b16 %v307
  %v954 = vunpack.c.l.b16 %v308
  %v955 = vunpack.c.l.b16 %v309
  %v956 = vunpack.c.l.b16 %v310
  %v957 = vunpack.c.l.b16 %v311
  %v958 = vpack.c.b16 %v671, %v670
  %v959 = vpack.c.b16 %v673, %v672
  %v960 = vpack.c.b16 %v675, %v674
  %v961 = vpack.c.b16 %v677, %v676
  %v962 = vpack.c.b16 %v679, %v678
  %v963 = vpack.c.b16 %v681, %v680
  %v964 = vpack.c.b16 %v683, %v682
  %v965 = vpack.c.b16 %v685, %v684
  %v966 = vpack.c.b16 %v687, %v686
  %v967 = vpack.c.b16 %v689, %v688
  %v968 = vpack.c.b16 %v691, %v690
  %v969 = vpack.c.b16 %v693, %v692
  %v970 = vpack.c.b16 %v695, %v694
  %v971 = vpack.c.b16 %v697, %v696
  %v972 = vpack.c.b16 %v699, %v698
  %v973 = vpack.c.b16 %v701, %v700
  %v974 = vpack.c.b16 %v703, %v702
  %v975 = vpack.c.b16 %v705, %v704
  %v976 = vpack.c.b16 %v707, %v706
  %v977 = vpack.c.b16 %v709, %v708
  %v978 = vpack.c.b16 %v711, %v710
  %v979 = vpack.c.b16 %v713, %v712
  %v980 = vpack.c.b16 %v715, %v714
  %v981 = vpack.c.b16 %v717, %v716
  %v982 = vpack.c.b16 %v719, %v718
  %v983 = vpack.c.b16 %v721, %v720
  %v984 = vpack.c.b16 %v723, %v722
  %v985 = vpack.c.b16 %v725, %v724
  %v986 = vpack.c.b16 %v727, %v726
  %v987 = vpack.c.b16 %v729, %v728
  %v988 = vpack.c.b16 %v731, %v730
  %v989 = vpack.c.b16 %v733, %v732
  %v990 = vpack.c.b16 %v735, %v734
  %v991 = vpack.c.b16 %v737, %v736
  %v992 = vpack.c.b16 %v739, %v738
  %v993 = vpack.c.b16 %v741, %v740
  %v994 = vpack.c.b16 %v743, %v742
  %v995 = vpack.c.b16 %v745, %v744
  %v996 = vpack.c.b16 %v747, %v746
  %v997 = vpack.c.b16 %v749, %v748
  %v998 = vpack.c.b16 %v751, %v750
  %v999 = vpack.c.b16 %v753, %v752
  %v1000 = vpack.c.b16 %v755, %v754
  %v1001 = vpack.c.b16 %v757, %v756
  %v1002 = vpack.c.b16 %v759, %v758
  %v1003 = vpack.c.b16 %v761, %v760
  %v1004 = vpack.c.b16 %v763, %v762
  %v1005 = vpack.c.b16 %v765, %v764
  %v1006 = vpack.c.b16 %v767, %v766
  %v1007 = vpack.c.b16 %v769, %v768
  %v1008 = vpack.c.b16 %v771, %v770
  %v1009 = vpack.c.b16 %v773, %v772
  %v1010 = vpack.c.b16 %v775, %v774
  %v1011 = vpack.c.b16 %v777, %v776
  %v1012 = vpack.c.b16 %v779, %v778
  %v1013 = vpack.c.b16 %v781, %v780
  %v1014 = vpack.c.b16 %v783, %v782
  %v1015 = vpack.c.b16 %v785, %v784
  %v1016 = vpack.c.b16 %v787, %v786
  %v1017 = vpack.c.b16 %v789, %v788
  %v1018 = vpack.c.b16 %v791, %v790
  %v1019 = vpack.c.b16 %v793, %v792
  %v1020 = vpack.c.b16 %v795, %v794
  %v1021 = vpack.c.b16 %v797, %v796
  %v1022 = vpack.c.b16 %v799, %v798
  %v1023 = vpack.c.b16 %v801, %v800
  %v1024 = vpack.c.b16 %v803, %v802
  %v1025 = vpack.c.b16 %v805, %v804
  %v1026 = vpack.c.b16 %v807, %v806
  %v1027 = vpack.c.b16 %v809, %v808
  %v1028 = vpack.c.b16 %v811, %v810
  %v1029 = vpack.c.b16 %v813, %v812
  %v1030 = vpack.c.b16 %v815, %v814
  %v1031 = vpack.c.b16 %v817, %v816
  %v1032 = vpack.c.b16 %v819, %v818
  %v1033 = vpack.c.b16 %v821, %v820
  %v1034 = vpack.c.b16 %v823, %v822
  %v1035 = vpack.c.b16 %v825, %v824
  %v1036 = vpack.c.b16 %v827, %v826
  %v1037 = vpack.c.b16 %v829, %v828
  %v1038 = vpack.c.b16 %v831, %v830
  %v1039 = vpack.c.b16 %v833, %v832
  %v1040 = vpack.c.b16 %v835, %v834
  %v1041 = vpack.c.b16 %v837, %v836
  %v1042 = vpack.c.b16 %v839, %v838
  %v1043 = vpack.c.b16 %v841, %v840
  %v1044 = vpack.c.b16 %v843, %v842
  %v1045 = vpack.c.b16 %v845, %v844
  %v1046 = vpack.c.b16 %v847, %v846
  %v1047 = vpack.c.b16 %v849, %v848
  %v1048 = vpack.c.b16 %v851, %v850
  %v1049 = vpack.c.b16 %v853, %v852
  %v1050 = vpack.c.b16 %v855, %v854
  %v1051 = vpack.c.b16 %v857, %v856
  %v1052 = vpack.c.b16 %v859, %v858
  %v1053 = vpack.c.b16 %v861, %v860
  %v1054 = vpack.c.b16 %v863, %v862
  %v1055 = vpack.c.b16 %v865, %v864
  %v1056 = vpack.c.b16 %v867, %v866
  %v1057 = vpack.c.b16 %v869, %v868
  %v1058 = vpack.c.b16 %v871, %v870
  %v1059 = vpack.c.b16 %v873, %v872
  %v1060 = vpack.c.b16 %v875, %v874
  %v1061 = vpack.c.b16 %v877, %v876
  %v1062 = vpack.c.b16 %v879, %v878
  %v1063 = vpack.c.b16 %v881, %v880
  %v1064 = vpack.c.b16 %v883, %v882
  %v1065 = vpack.c.b16 %v885, %v884
  %v1066 = vpack.c.b16 %v887, %v886
  %v1067 = vpack.c.b16 %v889, %v888
  %v1068 = vpack.c.b16 %v891, %v890
  %v1069 = vpack.c.b16 %v893, %v892
  %v1070 = vpack.c.b16 %v895, %v894
  %v1071 = vpack.c.b16 %v897, %v896
  %v1072 = vpack.c.b16 %v899, %v898
  %v1073 = vpack.c.b16 %v901, %v900
  %v1074 = vpack.c.b16 %v903, %v902
  %v1075 = vpack.c.b16 %v905, %v904
  %v1076 = vpack.c.b16 %v907, %v906
  %v1077 = vpack.c.b16 %v909, %v908
  %v1078 = vpack.c.b16 %v911, %v910
  %v1079 = vpack.c.b16 %v913, %v912
  %v1080 = vpack.c.b16 %v915, %v914
  %v1081 = vpack.c.b16 %v917, %v916
  %v1082 = vpack.c.b16 %v919, %v918
  %v1083 = vpack.c.b16 %v921, %v920
  %v1084 = vpack.c.b16 %v923, %v922
  %v1085 = vpack.c.b16 %v925, %v924
  %v1086 = vpack.c.b16 %v927, %v926
  %v1087 = vpack.c.b16 %v929, %v928
  %v1088 = vpack.c.b16 %v931, %v930
  %v1089 = vpack.c.b16 %v933, %v932
  %v1090 = vpack.c.b16 %v935, %v934
  %v1091 = vpack.c.b16 %v937, %v936
  %v1092 = vpack.c.b16 %v939, %v938
  %v1093 = vpack.c.b16 %v941, %v940
  %v1094 = vpack.c.b16 %v943, %v942
  %v1095 = vpack.c.b16 %v945, %v944
  %v1096 = vpack.c.b16 %v947, %v946
  %v1097 = vpack.c.b16 %v949, %v948
  %v1098 = vpack.c.b16 %v951, %v950
  %v1099 = vpack.c.b16 %v953, %v952
  %v1100 = vpack.c.b16 %v955, %v954
  %v1101 = vpack.c.b16 %v957, %v956
  %1246 = vmatprep.subr.bf16.mxu0 0
  %1247 = vmatpush1.bf16.msra.mxu0 %v958
  %1248 = vmatprep.subr.bf16.mxu0 0
  %1249 = vmatpush1.bf16.msra.mxu0 %v959
  %1250 = vmatprep.subr.bf16.mxu0 0
  %1251 = vmatpush1.bf16.msra.mxu0 %v960
  %1252 = vmatprep.subr.bf16.mxu0 0
  %1253 = vmatpush1.bf16.msra.mxu0 %v961
  %1254 = vmatprep.subr.bf16.mxu0 0
  %1255 = vmatpush1.bf16.msra.mxu0 %v962
  %1256 = vmatprep.subr.bf16.mxu0 0
  %1257 = vmatpush1.bf16.msra.mxu0 %v963
  %1258 = vmatprep.subr.bf16.mxu0 0
  %1259 = vmatpush1.bf16.msra.mxu0 %v964
  %1260 = vmatprep.subr.bf16.mxu0 0
  %1261 = vmatpush1.bf16.msra.mxu0 %v965
  %1262 = vmatprep.subr.bf16.mxu0 0
  %1263 = vmatpush1.bf16.msra.mxu0 %v966
  %1264 = vmatprep.subr.bf16.mxu0 0
  %1265 = vmatpush1.bf16.msra.mxu0 %v967
  %1266 = vmatprep.subr.bf16.mxu0 0
  %1267 = vmatpush1.bf16.msra.mxu0 %v968
  %1268 = vmatprep.subr.bf16.mxu0 0
  %1269 = vmatpush1.bf16.msra.mxu0 %v969
  %1270 = vmatprep.subr.bf16.mxu0 0
  %1271 = vmatpush1.bf16.msra.mxu0 %v970
  %1272 = vmatprep.subr.bf16.mxu0 0
  %1273 = vmatpush1.bf16.msra.mxu0 %v971
  %1274 = vmatprep.subr.bf16.mxu0 0
  %1275 = vmatpush1.bf16.msra.mxu0 %v972
  %1276 = vmatprep.subr.bf16.mxu0 0
  %1277 = vmatpush1.bf16.msra.mxu0 %v973
  %1278 = vmatprep.mubr.bf16.mxu0 %v347
  %1279 = vmatmul.mubr.bf16.gmra.mrb[0].mxu0 %v346
  %v1280 = vpop.f32.mrb[0].mxu0
  %v1281 = vadd.f32 %v317, %v1280
  %v1282 = vpop.f32.mrb[0].mxu0
  %v1283 = vpop.f32.mrb[0].mxu0
  %v1284 = vpop.f32.mrb[0].mxu0
  %1285 = vdwg.mxu0
  %1286 = vmatprep.subr.bf16.mxu0 0
  %1287 = vmatpush1.bf16.msra.mxu0 %v974
  %1288 = vmatprep.subr.bf16.mxu0 0
  %1289 = vmatpush1.bf16.msra.mxu0 %v975
  %1290 = vmatprep.subr.bf16.mxu0 0
  %1291 = vmatpush1.bf16.msra.mxu0 %v976
  %1292 = vmatprep.subr.bf16.mxu0 0
  %1293 = vmatpush1.bf16.msra.mxu0 %v977
  %1294 = vmatprep.subr.bf16.mxu0 0
  %1295 = vmatpush1.bf16.msra.mxu0 %v978
  %1296 = vmatprep.subr.bf16.mxu0 0
  %1297 = vmatpush1.bf16.msra.mxu0 %v979
  %1298 = vmatprep.subr.bf16.mxu0 0
  %1299 = vmatpush1.bf16.msra.mxu0 %v980
  %1300 = vmatprep.subr.bf16.mxu0 0
  %1301 = vmatpush1.bf16.msra.mxu0 %v981
  %1302 = vmatprep.subr.bf16.mxu0 0
  %1303 = vmatpush1.bf16.msra.mxu0 %v982
  %1304 = vmatprep.subr.bf16.mxu0 0
  %1305 = vmatpush1.bf16.msra.mxu0 %v983
  %1306 = vmatprep.subr.bf16.mxu0 0
  %1307 = vmatpush1.bf16.msra.mxu0 %v984
  %1308 = vmatprep.subr.bf16.mxu0 0
  %1309 = vmatpush1.bf16.msra.mxu0 %v985
  %1310 = vmatprep.subr.bf16.mxu0 0
  %1311 = vmatpush1.bf16.msra.mxu0 %v986
  %1312 = vmatprep.subr.bf16.mxu0 0
  %1313 = vmatpush1.bf16.msra.mxu0 %v987
  %1314 = vmatprep.subr.bf16.mxu0 0
  %1315 = vmatpush1.bf16.msra.mxu0 %v988
  %1316 = vmatprep.subr.bf16.mxu0 0
  %1317 = vmatpush1.bf16.msra.mxu0 %v989
  %1318 = vmatprep.mubr.bf16.mxu0 %v349
  %1319 = vmatmul.mubr.bf16.gmra.mrb[0].mxu0 %v348
  %v1320 = vpop.f32.mrb[0].mxu0
  %v1321 = vadd.f32 %v1281, %v1320
  %v1322 = vpop.f32.mrb[0].mxu0
  %v1323 = vpop.f32.mrb[0].mxu0
  %v1324 = vpop.f32.mrb[0].mxu0
  %1325 = vdwg.mxu0
  %1326 = vmatprep.subr.bf16.mxu0 0
  %1327 = vmatpush1.bf16.msra.mxu0 %v990
  %1328 = vmatprep.subr.bf16.mxu0 0
  %1329 = vmatpush1.bf16.msra.mxu0 %v991
  %1330 = vmatprep.subr.bf16.mxu0 0
  %1331 = vmatpush1.bf16.msra.mxu0 %v992
  %1332 = vmatprep.subr.bf16.mxu0 0
  %1333 = vmatpush1.bf16.msra.mxu0 %v993
  %1334 = vmatprep.subr.bf16.mxu0 0
  %1335 = vmatpush1.bf16.msra.mxu0 %v994
  %1336 = vmatprep.subr.bf16.mxu0 0
  %1337 = vmatpush1.bf16.msra.mxu0 %v995
  %1338 = vmatprep.subr.bf16.mxu0 0
  %1339 = vmatpush1.bf16.msra.mxu0 %v996
  %1340 = vmatprep.subr.bf16.mxu0 0
  %1341 = vmatpush1.bf16.msra.mxu0 %v997
  %1342 = vmatprep.subr.bf16.mxu0 0
  %1343 = vmatpush1.bf16.msra.mxu0 %v998
  %1344 = vmatprep.subr.bf16.mxu0 0
  %1345 = vmatpush1.bf16.msra.mxu0 %v999
  %1346 = vmatprep.subr.bf16.mxu0 0
  %1347 = vmatpush1.bf16.msra.mxu0 %v1000
  %1348 = vmatprep.subr.bf16.mxu0 0
  %1349 = vmatpush1.bf16.msra.mxu0 %v1001
  %1350 = vmatprep.subr.bf16.mxu0 0
  %1351 = vmatpush1.bf16.msra.mxu0 %v1002
  %1352 = vmatprep.subr.bf16.mxu0 0
  %1353 = vmatpush1.bf16.msra.mxu0 %v1003
  %1354 = vmatprep.subr.bf16.mxu0 0
  %1355 = vmatpush1.bf16.msra.mxu0 %v1004
  %1356 = vmatprep.subr.bf16.mxu0 0
  %1357 = vmatpush1.bf16.msra.mxu0 %v1005
  %1358 = vmatprep.mubr.bf16.mxu0 %v351
  %1359 = vmatmul.mubr.bf16.gmra.mrb[0].mxu0 %v350
  %v1360 = vpop.f32.mrb[0].mxu0
  %v1361 = vadd.f32 %v1321, %v1360
  %v1362 = vpop.f32.mrb[0].mxu0
  %v1363 = vpop.f32.mrb[0].mxu0
  %v1364 = vpop.f32.mrb[0].mxu0
  %1365 = vdwg.mxu0
  %1366 = vmatprep.subr.bf16.mxu0 0
  %1367 = vmatpush1.bf16.msra.mxu0 %v1006
  %1368 = vmatprep.subr.bf16.mxu0 0
  %1369 = vmatpush1.bf16.msra.mxu0 %v1007
  %1370 = vmatprep.subr.bf16.mxu0 0
  %1371 = vmatpush1.bf16.msra.mxu0 %v1008
  %1372 = vmatprep.subr.bf16.mxu0 0
  %1373 = vmatpush1.bf16.msra.mxu0 %v1009
  %1374 = vmatprep.subr.bf16.mxu0 0
  %1375 = vmatpush1.bf16.msra.mxu0 %v1010
  %1376 = vmatprep.subr.bf16.mxu0 0
  %1377 = vmatpush1.bf16.msra.mxu0 %v1011
  %1378 = vmatprep.subr.bf16.mxu0 0
  %1379 = vmatpush1.bf16.msra.mxu0 %v1012
  %1380 = vmatprep.subr.bf16.mxu0 0
  %1381 = vmatpush1.bf16.msra.mxu0 %v1013
  %1382 = vmatprep.subr.bf16.mxu0 0
  %1383 = vmatpush1.bf16.msra.mxu0 %v1014
  %1384 = vmatprep.subr.bf16.mxu0 0
  %1385 = vmatpush1.bf16.msra.mxu0 %v1015
  %1386 = vmatprep.subr.bf16.mxu0 0
  %1387 = vmatpush1.bf16.msra.mxu0 %v1016
  %1388 = vmatprep.subr.bf16.mxu0 0
  %1389 = vmatpush1.bf16.msra.mxu0 %v1017
  %1390 = vmatprep.subr.bf16.mxu0 0
  %1391 = vmatpush1.bf16.msra.mxu0 %v1018
  %1392 = vmatprep.subr.bf16.mxu0 0
  %1393 = vmatpush1.bf16.msra.mxu0 %v1019
  %1394 = vmatprep.subr.bf16.mxu0 0
  %1395 = vmatpush1.bf16.msra.mxu0 %v1020
  %1396 = vmatprep.subr.bf16.mxu0 0
  %1397 = vmatpush1.bf16.msra.mxu0 %v1021
  %1398 = vmatprep.mubr.bf16.mxu0 %v353
  %1399 = vmatmul.mubr.bf16.gmra.mrb[0].mxu0 %v352
  %v1400 = vpop.f32.mrb[0].mxu0
  %v1401 = vadd.f32 %v1361, %v1400
  %v1402 = vpop.f32.mrb[0].mxu0
  %v1403 = vpop.f32.mrb[0].mxu0
  %v1404 = vpop.f32.mrb[0].mxu0
  %1405 = vdwg.mxu0
  %1406 = vmatprep.subr.bf16.mxu0 0
  %1407 = vmatpush1.bf16.msra.mxu0 %v1022
  %1408 = vmatprep.subr.bf16.mxu0 0
  %1409 = vmatpush1.bf16.msra.mxu0 %v1023
  %1410 = vmatprep.subr.bf16.mxu0 0
  %1411 = vmatpush1.bf16.msra.mxu0 %v1024
  %1412 = vmatprep.subr.bf16.mxu0 0
  %1413 = vmatpush1.bf16.msra.mxu0 %v1025
  %1414 = vmatprep.subr.bf16.mxu0 0
  %1415 = vmatpush1.bf16.msra.mxu0 %v1026
  %1416 = vmatprep.subr.bf16.mxu0 0
  %1417 = vmatpush1.bf16.msra.mxu0 %v1027
  %1418 = vmatprep.subr.bf16.mxu0 0
  %1419 = vmatpush1.bf16.msra.mxu0 %v1028
  %1420 = vmatprep.subr.bf16.mxu0 0
  %1421 = vmatpush1.bf16.msra.mxu0 %v1029
  %1422 = vmatprep.subr.bf16.mxu0 0
  %1423 = vmatpush1.bf16.msra.mxu0 %v1030
  %1424 = vmatprep.subr.bf16.mxu0 0
  %1425 = vmatpush1.bf16.msra.mxu0 %v1031
  %1426 = vmatprep.subr.bf16.mxu0 0
  %1427 = vmatpush1.bf16.msra.mxu0 %v1032
  %1428 = vmatprep.subr.bf16.mxu0 0
  %1429 = vmatpush1.bf16.msra.mxu0 %v1033
  %1430 = vmatprep.subr.bf16.mxu0 0
  %1431 = vmatpush1.bf16.msra.mxu0 %v1034
  %1432 = vmatprep.subr.bf16.mxu0 0
  %1433 = vmatpush1.bf16.msra.mxu0 %v1035
  %1434 = vmatprep.subr.bf16.mxu0 0
  %1435 = vmatpush1.bf16.msra.mxu0 %v1036
  %1436 = vmatprep.subr.bf16.mxu0 0
  %1437 = vmatpush1.bf16.msra.mxu0 %v1037
  %1438 = vmatprep.mubr.bf16.mxu0 %v355
  %1439 = vmatmul.mubr.bf16.gmra.mrb[0].mxu0 %v354
  %v1440 = vpop.f32.mrb[0].mxu0
  %v1441 = vadd.f32 %v1401, %v1440
  %v1442 = vpop.f32.mrb[0].mxu0
  %v1443 = vpop.f32.mrb[0].mxu0
  %v1444 = vpop.f32.mrb[0].mxu0
  %1445 = vdwg.mxu0
  %1446 = vmatprep.subr.bf16.mxu0 0
  %1447 = vmatpush1.bf16.msra.mxu0 %v1038
  %1448 = vmatprep.subr.bf16.mxu0 0
  %1449 = vmatpush1.bf16.msra.mxu0 %v1039
  %1450 = vmatprep.subr.bf16.mxu0 0
  %1451 = vmatpush1.bf16.msra.mxu0 %v1040
  %1452 = vmatprep.subr.bf16.mxu0 0
  %1453 = vmatpush1.bf16.msra.mxu0 %v1041
  %1454 = vmatprep.subr.bf16.mxu0 0
  %1455 = vmatpush1.bf16.msra.mxu0 %v1042
  %1456 = vmatprep.subr.bf16.mxu0 0
  %1457 = vmatpush1.bf16.msra.mxu0 %v1043
  %1458 = vmatprep.subr.bf16.mxu0 0
  %1459 = vmatpush1.bf16.msra.mxu0 %v1044
  %1460 = vmatprep.subr.bf16.mxu0 0
  %1461 = vmatpush1.bf16.msra.mxu0 %v1045
  %1462 = vmatprep.subr.bf16.mxu0 0
  %1463 = vmatpush1.bf16.msra.mxu0 %v1046
  %1464 = vmatprep.subr.bf16.mxu0 0
  %1465 = vmatpush1.bf16.msra.mxu0 %v1047
  %1466 = vmatprep.subr.bf16.mxu0 0
  %1467 = vmatpush1.bf16.msra.mxu0 %v1048
  %1468 = vmatprep.subr.bf16.mxu0 0
  %1469 = vmatpush1.bf16.msra.mxu0 %v1049
  %1470 = vmatprep.subr.bf16.mxu0 0
  %1471 = vmatpush1.bf16.msra.mxu0 %v1050
  %1472 = vmatprep.subr.bf16.mxu0 0
  %1473 = vmatpush1.bf16.msra.mxu0 %v1051
  %1474 = vmatprep.subr.bf16.mxu0 0
  %1475 = vmatpush1.bf16.msra.mxu0 %v1052
  %1476 = vmatprep.subr.bf16.mxu0 0
  %1477 = vmatpush1.bf16.msra.mxu0 %v1053
  %1478 = vmatprep.mubr.bf16.mxu0 %v357
  %1479 = vmatmul.mubr.bf16.gmra.mrb[0].mxu0 %v356
  %v1480 = vpop.f32.mrb[0].mxu0
  %v1481 = vadd.f32 %v1441, %v1480
  %v1482 = vpop.f32.mrb[0].mxu0
  %v1483 = vpop.f32.mrb[0].mxu0
  %v1484 = vpop.f32.mrb[0].mxu0
  %1485 = vdwg.mxu0
  %1486 = vmatprep.subr.bf16.mxu0 0
  %1487 = vmatpush1.bf16.msra.mxu0 %v1054
  %1488 = vmatprep.subr.bf16.mxu0 0
  %1489 = vmatpush1.bf16.msra.mxu0 %v1055
  %1490 = vmatprep.subr.bf16.mxu0 0
  %1491 = vmatpush1.bf16.msra.mxu0 %v1056
  %1492 = vmatprep.subr.bf16.mxu0 0
  %1493 = vmatpush1.bf16.msra.mxu0 %v1057
  %1494 = vmatprep.subr.bf16.mxu0 0
  %1495 = vmatpush1.bf16.msra.mxu0 %v1058
  %1496 = vmatprep.subr.bf16.mxu0 0
  %1497 = vmatpush1.bf16.msra.mxu0 %v1059
  %1498 = vmatprep.subr.bf16.mxu0 0
  %1499 = vmatpush1.bf16.msra.mxu0 %v1060
  %1500 = vmatprep.subr.bf16.mxu0 0
  %1501 = vmatpush1.bf16.msra.mxu0 %v1061
  %1502 = vmatprep.subr.bf16.mxu0 0
  %1503 = vmatpush1.bf16.msra.mxu0 %v1062
  %1504 = vmatprep.subr.bf16.mxu0 0
  %1505 = vmatpush1.bf16.msra.mxu0 %v1063
  %1506 = vmatprep.subr.bf16.mxu0 0
  %1507 = vmatpush1.bf16.msra.mxu0 %v1064
  %1508 = vmatprep.subr.bf16.mxu0 0
  %1509 = vmatpush1.bf16.msra.mxu0 %v1065
  %1510 = vmatprep.subr.bf16.mxu0 0
  %1511 = vmatpush1.bf16.msra.mxu0 %v1066
  %1512 = vmatprep.subr.bf16.mxu0 0
  %1513 = vmatpush1.bf16.msra.mxu0 %v1067
  %1514 = vmatprep.subr.bf16.mxu0 0
  %1515 = vmatpush1.bf16.msra.mxu0 %v1068
  %1516 = vmatprep.subr.bf16.mxu0 0
  %1517 = vmatpush1.bf16.msra.mxu0 %v1069
  %1518 = vmatprep.mubr.bf16.mxu0 %v359
  %1519 = vmatmul.mubr.bf16.gmra.mrb[0].mxu0 %v358
  %v1520 = vpop.f32.mrb[0].mxu0
  %v1521 = vadd.f32 %v1481, %v1520
  %v1522 = vpop.f32.mrb[0].mxu0
  %v1523 = vpop.f32.mrb[0].mxu0
  %v1524 = vpop.f32.mrb[0].mxu0
  %1525 = vdwg.mxu0
  %1526 = vmatprep.subr.bf16.mxu0 0
  %1527 = vmatpush1.bf16.msra.mxu0 %v1070
  %1528 = vmatprep.subr.bf16.mxu0 0
  %1529 = vmatpush1.bf16.msra.mxu0 %v1071
  %1530 = vmatprep.subr.bf16.mxu0 0
  %1531 = vmatpush1.bf16.msra.mxu0 %v1072
  %1532 = vmatprep.subr.bf16.mxu0 0
  %1533 = vmatpush1.bf16.msra.mxu0 %v1073
  %1534 = vmatprep.subr.bf16.mxu0 0
  %1535 = vmatpush1.bf16.msra.mxu0 %v1074
  %1536 = vmatprep.subr.bf16.mxu0 0
  %1537 = vmatpush1.bf16.msra.mxu0 %v1075
  %1538 = vmatprep.subr.bf16.mxu0 0
  %1539 = vmatpush1.bf16.msra.mxu0 %v1076
  %1540 = vmatprep.subr.bf16.mxu0 0
  %1541 = vmatpush1.bf16.msra.mxu0 %v1077
  %1542 = vmatprep.subr.bf16.mxu0 0
  %1543 = vmatpush1.bf16.msra.mxu0 %v1078
  %1544 = vmatprep.subr.bf16.mxu0 0
  %1545 = vmatpush1.bf16.msra.mxu0 %v1079
  %1546 = vmatprep.subr.bf16.mxu0 0
  %1547 = vmatpush1.bf16.msra.mxu0 %v1080
  %1548 = vmatprep.subr.bf16.mxu0 0
  %1549 = vmatpush1.bf16.msra.mxu0 %v1081
  %1550 = vmatprep.subr.bf16.mxu0 0
  %1551 = vmatpush1.bf16.msra.mxu0 %v1082
  %1552 = vmatprep.subr.bf16.mxu0 0
  %1553 = vmatpush1.bf16.msra.mxu0 %v1083
  %1554 = vmatprep.subr.bf16.mxu0 0
  %1555 = vmatpush1.bf16.msra.mxu0 %v1084
  %1556 = vmatprep.subr.bf16.mxu0 0
  %1557 = vmatpush1.bf16.msra.mxu0 %v1085
  %1558 = vmatprep.mubr.bf16.mxu0 %v361
  %1559 = vmatmul.mubr.bf16.gmra.mrb[0].mxu0 %v360
  %v1560 = vpop.f32.mrb[0].mxu0
  %v1561 = vadd.f32 %v1521, %v1560
  %v1562 = vpop.f32.mrb[0].mxu0
  %v1563 = vpop.f32.mrb[0].mxu0
  %v1564 = vpop.f32.mrb[0].mxu0
  %1565 = vdwg.mxu0
  %1566 = vmatprep.subr.bf16.mxu0 0
  %1567 = vmatpush1.bf16.msra.mxu0 %v1086
  %1568 = vmatprep.subr.bf16.mxu0 0
  %1569 = vmatpush1.bf16.msra.mxu0 %v1087
  %1570 = vmatprep.subr.bf16.mxu0 0
  %1571 = vmatpush1.bf16.msra.mxu0 %v1088
  %1572 = vmatprep.subr.bf16.mxu0 0
  %1573 = vmatpush1.bf16.msra.mxu0 %v1089
  %1574 = vmatprep.subr.bf16.mxu0 0
  %1575 = vmatpush1.bf16.msra.mxu0 %v1090
  %1576 = vmatprep.subr.bf16.mxu0 0
  %1577 = vmatpush1.bf16.msra.mxu0 %v1091
  %1578 = vmatprep.subr.bf16.mxu0 0
  %1579 = vmatpush1.bf16.msra.mxu0 %v1092
  %1580 = vmatprep.subr.bf16.mxu0 0
  %1581 = vmatpush1.bf16.msra.mxu0 %v1093
  %1582 = vmatprep.subr.bf16.mxu0 0
  %1583 = vmatpush1.bf16.msra.mxu0 %v1094
  %1584 = vmatprep.subr.bf16.mxu0 0
  %1585 = vmatpush1.bf16.msra.mxu0 %v1095
  %1586 = vmatprep.subr.bf16.mxu0 0
  %1587 = vmatpush1.bf16.msra.mxu0 %v1096
  %1588 = vmatprep.subr.bf16.mxu0 0
  %1589 = vmatpush1.bf16.msra.mxu0 %v1097
  %1590 = vmatprep.subr.bf16.mxu0 0
  %1591 = vmatpush1.bf16.msra.mxu0 %v1098
  %1592 = vmatprep.subr.bf16.mxu0 0
  %1593 = vmatpush1.bf16.msra.mxu0 %v1099
  %1594 = vmatprep.subr.bf16.mxu0 0
  %1595 = vmatpush1.bf16.msra.mxu0 %v1100
  %1596 = vmatprep.subr.bf16.mxu0 0
  %1597 = vmatpush1.bf16.msra.mxu0 %v1101
  %1598 = vmatprep.mubr.bf16.mxu0 %v363
  %1599 = vmatmul.mubr.bf16.gmra.mrb[0].mxu0 %v362
  %v1600 = vpop.f32.mrb[0].mxu0
  %v1601 = vadd.f32 %v1561, %v1600
  %v1602 = vpop.f32.mrb[0].mxu0
  %v1603 = vpop.f32.mrb[0].mxu0
  %v1604 = vpop.f32.mrb[0].mxu0
  %1605 = vdwg.mxu0
  %1606 = vst [vmem:[%s3] sm:$0xff] %v1601
  // Predicated region
  $region14: #{funie_discriminator.9} parent=0 // pred_check
    _
  $region15: #{funie_discriminator.9} parent=0 // pred_check_branch
    %1608 = sbr.rel (0) target = $region17
  $region16: #{funie_discriminator.9} parent=0 // pred_region
    _
  $region17: #{funie_discriminator.9} parent=0 // pred_fallthru
    _
  // Predicated region
  $region18: #{funie_discriminator.9} parent=0 // pred_check
    _
  $region19: #{funie_discriminator.9} parent=0 // pred_check_branch
    %1610 = sbr.rel (0) target = $region21
  $region20: #{funie_discriminator.9} parent=0 // pred_region
    _
  $region21: #{funie_discriminator.9} parent=0 // pred_fallthru
    _

</llo_original>
